<compile_context>
chip_gen: v5e
topology: v5e:2x2
jax: 0.10.0
libtpu: 0.0.40
codegen_flags: <defaults>
</compile_context>

<pallas_src>
import functools
import math

import jax
import jax.numpy as jnp
from jax.experimental import pallas as pl
from jax.experimental.pallas import tpu as pltpu


# ----------------------------------------------------------------------------
# helpers
# ----------------------------------------------------------------------------
def _pick_tile(dim, target, align):
    """Largest `align`-aligned divisor of `dim` that is <= target (or the full dim)."""
    if dim <= target:
        return dim
    t = (target // align) * align
    while t >= align:
        if dim % t == 0:
            return t
        t -= align
    # No aligned divisor <= target: falling back to the full dimension is always
    # legal for BlockSpec, but guard against silently blowing the VMEM budget.
    if dim > 4 * target:
        raise ValueError(
            f"_pick_tile: no {align}-aligned divisor of {dim} <= {target}; "
            f"full-dim fallback ({dim}) would exceed the VMEM budget.")
    return dim


@functools.lru_cache(maxsize=None)
def _vmem_limit_bytes():
    """Generation-aware VMEM limit: ~3/4 of capacity, capped at 96 MiB."""
    try:
        cap = pltpu.get_tpu_info().vmem_capacity_bytes
    except Exception:
        cap = 64 * 1024 * 1024  # conservative fallback (safe on v7x's 64 MiB)
    return min(int(cap) * 3 // 4, 96 * 1024 * 1024)


# ----------------------------------------------------------------------------
# Tiled linear:  o = x @ w + b          (x, w in bf16; f32 accumulation)
# ----------------------------------------------------------------------------
def _linear_kernel(x_ref, w_ref, b_ref, o_ref, acc_ref):
    k = pl.program_id(2)

    @pl.when(k == 0)
    def _init():
        acc_ref[...] = jnp.zeros_like(acc_ref)

    acc_ref[...] += jnp.dot(x_ref[...], w_ref[...],
                            preferred_element_type=jnp.float32)

    @pl.when(k == pl.num_programs(2) - 1)
    def _finalize():
        o_ref[...] = (acc_ref[...] + b_ref[...].astype(jnp.float32)).astype(o_ref.dtype)


def _linear(x2d, w, b, *, out_dtype, block_m=512, block_n=512, block_k=512):
    M, K = x2d.shape
    N = w.shape[1]
    tm = _pick_tile(M, block_m, 16)    # 16: bf16 sublane packing
    tn = _pick_tile(N, block_n, 128)
    tk = _pick_tile(K, block_k, 128)
    grid = (M // tm, N // tn, K // tk)

    in_bytes = jnp.dtype(x2d.dtype).itemsize
    out_bytes = jnp.dtype(out_dtype).itemsize
    cost = pl.CostEstimate(
        flops=2 * M * N * K,
        transcendentals=0,
        bytes_accessed=in_bytes * (M * K + K * N) + 4 * N + out_bytes * M * N,
    )

    return pl.pallas_call(
        _linear_kernel,
        out_shape=jax.ShapeDtypeStruct((M, N), out_dtype),
        grid_spec=pltpu.PrefetchScalarGridSpec(
            num_scalar_prefetch=0,
            grid=grid,
            in_specs=[
                pl.BlockSpec((tm, tk), lambda i, j, k: (i, k)),
                pl.BlockSpec((tk, tn), lambda i, j, k: (k, j)),
                pl.BlockSpec((1, tn), lambda i, j, k: (0, j)),
            ],
            out_specs=pl.BlockSpec((tm, tn), lambda i, j, k: (i, j)),
            scratch_shapes=[pltpu.VMEM((tm, tn), jnp.float32)],
        ),
        compiler_params=pltpu.CompilerParams(
            dimension_semantics=("parallel", "parallel", "arbitrary"),
            vmem_limit_bytes=_vmem_limit_bytes(),
        ),
        cost_estimate=cost,
    )(x2d, w, b.reshape(1, N))


# ----------------------------------------------------------------------------
# Causal flash attention (online softmax), head-major inputs, triangular grid
# ----------------------------------------------------------------------------
def _flash_attn_kernel(qi_ref, ki_ref, q_ref, k_ref, v_ref, o_ref,
                       m_sc, l_sc, acc_sc):
    # q_ref/k_ref/v_ref: (1, H, tq, hs) bf16;  o_ref: (1, tq, C)
    # scratch: m_sc / l_sc (H, tq, 1) f32, acc_sc (H, tq, hs) f32
    step = pl.program_id(1)
    qi = qi_ref[step]
    ki = ki_ref[step]

    @pl.when(ki == 0)
    def _init():
        m_sc[...] = jnp.full_like(m_sc, -jnp.inf)
        l_sc[...] = jnp.zeros_like(l_sc)
        acc_sc[...] = jnp.zeros_like(acc_sc)

    def _update(masked):
        q = q_ref[0]                                   # (H, tq, hs), scale pre-folded
        k = k_ref[0]                                   # (H, tk, hs)
        v = v_ref[0]                                   # (H, tk, hs)

        s = jnp.einsum("hqd,hkd->hqk", q, k,
                       preferred_element_type=jnp.float32)        # (H, tq, tk) f32

        if masked:  # only diagonal blocks pay the iota/compare/select cost
            tq, tk = s.shape[1], s.shape[2]            # tq == tk on the diagonal
            rows = jax.lax.broadcasted_iota(jnp.int32, (tq, tk), 0)
            cols = jax.lax.broadcasted_iota(jnp.int32, (tq, tk), 1)
            s = jnp.where((cols <= rows)[None, :, :], s, -jnp.inf)

        m_prev = m_sc[...]
        m_new = jnp.maximum(m_prev, jnp.max(s, axis=-1, keepdims=True))
        alpha = jnp.exp(m_prev - m_new)
        p = jnp.exp(s - m_new)                                     # unnormalized, f32
        l_sc[...] = alpha * l_sc[...] + jnp.sum(p, axis=-1, keepdims=True)
        acc_sc[...] = alpha * acc_sc[...] + jnp.einsum(
            "hqk,hkd->hqd", p.astype(v.dtype), v,
            preferred_element_type=jnp.float32)                    # (H, tq, hs)
        m_sc[...] = m_new

    @pl.when(ki < qi)                    # strictly below diagonal: no mask needed
    def _unmasked():
        _update(masked=False)

    @pl.when(ki == qi)                   # diagonal block: mask, then finalize
    def _diag_and_finalize():
        _update(masked=True)
        inv_l = pl.reciprocal(l_sc[...], approx=True)              # EUP, ~free
        out = acc_sc[...] * inv_l                                  # (H, tq, hs)
        h, tq, hs = out.shape
        out = jnp.transpose(out, (1, 0, 2)).reshape(tq, h * hs)    # lane-dense (tq, C)
        o_ref[0] = out.astype(o_ref.dtype)


def _flash_attention(q, k, v, *, block_t=256):
    # q/k/v: (B, H, T, hs) bf16 ; returns (B, T, C) bf16 (heads merged, lane-dense)
    B, H, T, hs = q.shape
    C = H * hs
    tq = _pick_tile(T, block_t, 16)      # 16: bf16 sublane packing; tq == tk
    nq = T // tq

    # Flattened lower-triangular block schedule: only causally-needed (qi, ki)
    # pairs -> no dead grid steps above the diagonal.
    pairs = [(qi, ki) for qi in range(nq) for ki in range(qi + 1)]
    qi_tbl = jnp.asarray([p[0] for p in pairs], dtype=jnp.int32)
    ki_tbl = jnp.asarray([p[1] for p in pairs], dtype=jnp.int32)
    n_steps = len(pairs)

    itemsize = jnp.dtype(q.dtype).itemsize
    cost = pl.CostEstimate(
        flops=2 * 2 * B * H * T * T * hs // 2,       # QK + PV, halved by causality
        transcendentals=B * H * T * T // 2,
        bytes_accessed=itemsize * 4 * B * T * C,
    )

    return pl.pallas_call(
        _flash_attn_kernel,
        out_shape=jax.ShapeDtypeStruct((B, T, C), jnp.bfloat16),
        grid_spec=pltpu.PrefetchScalarGridSpec(
            num_scalar_prefetch=2,
            grid=(B, n_steps),
            in_specs=[
                pl.BlockSpec((1, H, tq, hs), lambda b, p, qt, kt: (b, 0, qt[p], 0)),
                pl.BlockSpec((1, H, tq, hs), lambda b, p, qt, kt: (b, 0, kt[p], 0)),
                pl.BlockSpec((1, H, tq, hs), lambda b, p, qt, kt: (b, 0, kt[p], 0)),
            ],
            out_specs=pl.BlockSpec((1, tq, C), lambda b, p, qt, kt: (b, qt[p], 0)),
            scratch_shapes=[
                pltpu.VMEM((H, tq, 1), jnp.float32),    # running max
                pltpu.VMEM((H, tq, 1), jnp.float32),    # running denominator
                pltpu.VMEM((H, tq, hs), jnp.float32),   # output accumulator
            ],
        ),
        compiler_params=pltpu.CompilerParams(
            dimension_semantics=("parallel", "arbitrary"),
            vmem_limit_bytes=_vmem_limit_bytes(),
        ),
        cost_estimate=cost,
    )(qi_tbl, ki_tbl, q, k, v)


# ----------------------------------------------------------------------------
# Module wrapper (forward pass of CausalSelfAttention, dropout = 0)
# ----------------------------------------------------------------------------
def causal_self_attention(x, params, n_head, *, block_t=256,
                          mm_block_m=512, mm_block_n=512, mm_block_k=512):
    B, T, C = x.shape
    assert C % n_head == 0
    hs = C // n_head
    scale = 1.0 / math.sqrt(hs)

    # Fold the attention scale 1/sqrt(hs) into the q-columns of the qkv
    # projection (free: removes the per-KV-step scale multiply in the kernel).
    col_scale = jnp.concatenate([jnp.full((C,), scale, jnp.float32),
                                 jnp.ones((2 * C,), jnp.float32)])
    w_attn = (params["w_attn"] * col_scale[None, :]).astype(jnp.bfloat16)
    b_attn = params["b_attn"] * col_scale                 # bias stays f32
    w_proj = params["w_proj"].astype(jnp.bfloat16)
    b_proj = params["b_proj"]

    # qkv projection: (B*T, C) @ (C, 3C) + (3C,) -> bf16 (feeds attention)
    x2d = x.reshape(B * T, C).astype(jnp.bfloat16)
    qkv = _linear(x2d, w_attn, b_attn, out_dtype=jnp.bfloat16,
                  block_m=mm_block_m, block_n=mm_block_n, block_k=mm_block_k)

    # Head-major layout (B, H, T, hs): one wrapper-side transpose so the
    # attention kernel gets head-split tiles with zero per-step relayouts.
    qkv = qkv.reshape(B, T, 3, n_head, hs)
    qkv = jnp.transpose(qkv, (2, 0, 3, 1, 4))             # (3, B, H, T, hs)
    q, k, v = qkv[0], qkv[1], qkv[2]

    y = _flash_attention(q, k, v, block_t=block_t)        # (B, T, C) bf16, lane-dense

    # output projection (y already head-merged); final output in f32
    out = _linear(y.reshape(B * T, C), w_proj, b_proj, out_dtype=jnp.float32,
                  block_m=mm_block_m, block_n=mm_block_n, block_k=mm_block_k)
    return out.reshape(B, T, C)


# ----------------------------------------------------------------------------
# Pure-JAX f32 reference (for correctness check)
# ----------------------------------------------------------------------------
def reference(x, params, n_head):
    B, T, C = x.shape
    hs = C // n_head
    qkv = x @ params["w_attn"] + params["b_attn"]
    q, k, v = jnp.split(qkv, 3, axis=-1)
    q = q.reshape(B, T, n_head, hs).transpose(0, 2, 1, 3)
    k = k.reshape(B, T, n_head, hs).transpose(0, 2, 1, 3)
    v = v.reshape(B, T, n_head, hs).transpose(0, 2, 1, 3)
    s = jnp.einsum("bhqd,bhkd->bhqk", q, k) * (1.0 / (hs ** 0.5))
    mask = jnp.tril(jnp.ones((T, T), dtype=bool))
    s = jnp.where(mask[None, None], s, -jnp.inf)
    p = jax.nn.softmax(s, axis=-1)
    y = jnp.einsum("bhqk,bhkd->bhqd", p, v)
    y = y.transpose(0, 2, 1, 3).reshape(B, T, C)
    return y @ params["w_proj"] + params["b_proj"]


# ----------------------------------------------------------------------------
if __name__ == "__main__":
    # Small config: B=2, T=32, n_head=4, n_embd=32, dropout=0 (eval mode).
    # Small tile overrides so the triangular schedule / accumulator / multi-block
    # linear paths are actually exercised (2 Q blocks -> 3 schedule steps/batch).
    B, T, n_head, n_embd = 2, 32, 4, 32

    key = jax.random.PRNGKey(0)
    kx, kw1, kb1, kw2, kb2 = jax.random.split(key, 5)

    x = jax.random.normal(kx, (B, T, n_embd), dtype=jnp.float32)

    # nn.Linear(n_embd, 3*n_embd) weight is (3C, C); we store its transpose.
    params = {
        "w_attn": 0.02 * jax.random.normal(kw1, (n_embd, 3 * n_embd), jnp.float32),
        "b_attn": 0.01 * jax.random.normal(kb1, (3 * n_embd,), jnp.float32),
        "w_proj": 0.02 * jax.random.normal(kw2, (n_embd, n_embd), jnp.float32),
        "b_proj": 0.01 * jax.random.normal(kb2, (n_embd,), jnp.float32),
    }

    fwd = jax.jit(functools.partial(
        causal_self_attention, n_head=n_head,
        block_t=16, mm_block_m=32))

    out = jax.block_until_ready(fwd(x, params))

    ref = reference(x, params, n_head)
    assert out.shape == (B, T, n_embd)
    max_err = float(jnp.max(jnp.abs(out - ref)))
    # bf16 MXU operands (f32 accumulation) -> slightly looser tolerance than pure f32.
    assert jnp.allclose(out, ref, rtol=3e-2, atol=3e-3), \
        f"mismatch vs reference (max abs err {max_err})"

    print("KERNEL_OK")
</pallas_src>

<mosaic_0001>
module attributes {stable_mosaic.version = 11 : i64} {
  func.func @_linear_kernel(%arg0: i32, %arg1: i32, %arg2: i32, %arg3: memref<32x32xbf16, #tpu.memory_space<vmem>>, %arg4: memref<32x96xbf16, #tpu.memory_space<vmem>>, %arg5: memref<1x96xf32, #tpu.memory_space<vmem>>, %arg6: memref<32x96xbf16, #tpu.memory_space<vmem>>, %arg7: memref<32x96xf32, #tpu.memory_space<vmem>>) attributes {dimension_semantics = [#tpu.dimension_semantics<parallel>, #tpu.dimension_semantics<parallel>, #tpu.dimension_semantics<arbitrary>], iteration_bounds = array<i64: 2, 1, 1>, scalar_prefetch = 0 : i64, scratch_operands = 1 : i64, tpu.core_type = #tpu.core_type<tc>, window_params = [{transform_indices = @transform_0, window_bounds = array<i64: 32, 32>}, {transform_indices = @transform_1, window_bounds = array<i64: 32, 96>}, {transform_indices = @transform_2, window_bounds = array<i64: 1, 96>}, {transform_indices = @transform_3, window_bounds = array<i64: 32, 96>}]} {
    %c0_i32 = arith.constant 0 : i32
    %0 = arith.cmpi eq, %arg2, %c0_i32 : i32
    %1 = arith.extui %0 : i1 to i32
    %c0_i32_0 = arith.constant 0 : i32
    %2 = arith.cmpi ne, %1, %c0_i32_0 : i32
    scf.if %2 {
      %cst_10 = arith.constant 0.000000e+00 : f32
      %12 = vector.broadcast %cst_10 : f32 to vector<32x96xf32>
      %c0_11 = arith.constant 0 : index
      %c0_12 = arith.constant 0 : index
      %13 = vector.load %arg7[%c0_11, %c0_12] : memref<32x96xf32, #tpu.memory_space<vmem>>, vector<32x96xf32>
      tpu.vector_store %arg7[%c0_11, %c0_12], %12 {strides = array<i32>} : memref<32x96xf32, #tpu.memory_space<vmem>>, vector<32x96xf32>,
    } else {
    }
    %c0 = arith.constant 0 : index
    %c0_1 = arith.constant 0 : index
    %3 = vector.load %arg7[%c0, %c0_1] : memref<32x96xf32, #tpu.memory_space<vmem>>, vector<32x96xf32>
    %c0_2 = arith.constant 0 : index
    %c0_3 = arith.constant 0 : index
    %4 = vector.load %arg3[%c0_2, %c0_3] : memref<32x32xbf16, #tpu.memory_space<vmem>>, vector<32x32xbf16>
    %c0_4 = arith.constant 0 : index
    %c0_5 = arith.constant 0 : index
    %5 = vector.load %arg4[%c0_4, %c0_5] : memref<32x96xbf16, #tpu.memory_space<vmem>>, vector<32x96xbf16>
    %cst = arith.constant dense<0.000000e+00> : vector<32x96xf32>
    %6 = tpu.matmul %4, %5, %cst {dimension_numbers = #tpu.dot_dimension_numbers<[1], [0], [0], [1], [0, 0, 1, 1], [], []>} : vector<32x32xbf16>, vector<32x96xbf16>, vector<32x96xf32> -> vector<32x96xf32>
    %7 = arith.addf %3, %6 : vector<32x96xf32>
    %c0_6 = arith.constant 0 : index
    %c0_7 = arith.constant 0 : index
    %8 = vector.load %arg7[%c0_6, %c0_7] : memref<32x96xf32, #tpu.memory_space<vmem>>, vector<32x96xf32>
    tpu.vector_store %arg7[%c0_6, %c0_7], %7 {strides = array<i32>} : memref<32x96xf32, #tpu.memory_space<vmem>>, vector<32x96xf32>,
    %c0_i32_8 = arith.constant 0 : i32
    %9 = arith.cmpi eq, %arg2, %c0_i32_8 : i32
    %10 = arith.extui %9 : i1 to i32
    %c0_i32_9 = arith.constant 0 : i32
    %11 = arith.cmpi ne, %10, %c0_i32_9 : i32
    scf.if %11 {
      %c0_10 = arith.constant 0 : index
      %c0_11 = arith.constant 0 : index
      %12 = vector.load %arg7[%c0_10, %c0_11] : memref<32x96xf32, #tpu.memory_space<vmem>>, vector<32x96xf32>
      %c0_12 = arith.constant 0 : index
      %c0_13 = arith.constant 0 : index
      %13 = vector.load %arg5[%c0_12, %c0_13] : memref<1x96xf32, #tpu.memory_space<vmem>>, vector<1x96xf32>
      %14 = vector.broadcast %13 : vector<1x96xf32> to vector<32x96xf32>
      %15 = arith.addf %12, %14 : vector<32x96xf32>
      %16 = arith.truncf %15 : vector<32x96xf32> to vector<32x96xbf16>
      %c0_14 = arith.constant 0 : index
      %c0_15 = arith.constant 0 : index
      %17 = vector.load %arg6[%c0_14, %c0_15] : memref<32x96xbf16, #tpu.memory_space<vmem>>, vector<32x96xbf16>
      tpu.vector_store %arg6[%c0_14, %c0_15], %16 {strides = array<i32>} : memref<32x96xbf16, #tpu.memory_space<vmem>>, vector<32x96xbf16>,
    } else {
    }
    return
  }
  func.func @transform_0(%arg0: i32, %arg1: i32, %arg2: i32) -> (i32, i32) {
    %c0_i32 = arith.constant 0 : i32
    return %arg0, %arg2 : i32, i32
  }
  func.func @transform_1(%arg0: i32, %arg1: i32, %arg2: i32) -> (i32, i32) {
    %c0_i32 = arith.constant 0 : i32
    return %arg2, %arg1 : i32, i32
  }
  func.func @transform_2(%arg0: i32, %arg1: i32, %arg2: i32) -> (i32, i32) {
    %c0_i32 = arith.constant 0 : i32
    %c0_i32_0 = arith.constant 0 : i32
    return %c0_i32, %arg1 : i32, i32
  }
  func.func @transform_3(%arg0: i32, %arg1: i32, %arg2: i32) -> (i32, i32) {
    %c0_i32 = arith.constant 0 : i32
    return %arg0, %arg1 : i32, i32
  }
}

module attributes {stable_mosaic.version = 11 : i64} {
  func.func @_flash_attn_kernel(%arg0: i32, %arg1: i32, %arg2: memref<3xi32, #tpu.memory_space<smem>>, %arg3: memref<3xi32, #tpu.memory_space<smem>>, %arg4: memref<1x4x16x8xbf16, #tpu.memory_space<vmem>>, %arg5: memref<1x4x16x8xbf16, #tpu.memory_space<vmem>>, %arg6: memref<1x4x16x8xbf16, #tpu.memory_space<vmem>>, %arg7: memref<1x16x32xbf16, #tpu.memory_space<vmem>>, %arg8: memref<4x16x1xf32, #tpu.memory_space<vmem>>, %arg9: memref<4x16x1xf32, #tpu.memory_space<vmem>>, %arg10: memref<4x16x8xf32, #tpu.memory_space<vmem>>) attributes {dimension_semantics = [#tpu.dimension_semantics<parallel>, #tpu.dimension_semantics<arbitrary>], iteration_bounds = array<i64: 2, 3>, scalar_prefetch = 2 : i64, scratch_operands = 3 : i64, tpu.core_type = #tpu.core_type<tc>, window_params = [{transform_indices = @transform_0, window_bounds = array<i64: 1, 4, 16, 8>}, {transform_indices = @transform_1, window_bounds = array<i64: 1, 4, 16, 8>}, {transform_indices = @transform_2, window_bounds = array<i64: 1, 4, 16, 8>}, {transform_indices = @transform_3, window_bounds = array<i64: 1, 16, 32>}]} {
    %0 = arith.index_cast %arg1 : i32 to index
    %1 = memref.load %arg2[%0] : memref<3xi32, #tpu.memory_space<smem>>
    %2 = arith.index_cast %arg1 : i32 to index
    %3 = memref.load %arg3[%2] : memref<3xi32, #tpu.memory_space<smem>>
    %c0_i32 = arith.constant 0 : i32
    %4 = arith.cmpi eq, %3, %c0_i32 : i32
    %5 = arith.extui %4 : i1 to i32
    %c0_i32_0 = arith.constant 0 : i32
    %6 = arith.cmpi ne, %5, %c0_i32_0 : i32
    scf.if %6 {
      %cst = arith.constant 0xFF800000 : f32
      %13 = vector.broadcast %cst : f32 to vector<4x16x1xf32>
      %c0 = arith.constant 0 : index
      %c0_3 = arith.constant 0 : index
      %c0_4 = arith.constant 0 : index
      %14 = vector.load %arg8[%c0, %c0_3, %c0_4] : memref<4x16x1xf32, #tpu.memory_space<vmem>>, vector<4x16x1xf32>
      tpu.vector_store %arg8[%c0, %c0_3, %c0_4], %13 {strides = array<i32>} : memref<4x16x1xf32, #tpu.memory_space<vmem>>, vector<4x16x1xf32>,
      %cst_5 = arith.constant 0.000000e+00 : f32
      %15 = vector.broadcast %cst_5 : f32 to vector<4x16x1xf32>
      %c0_6 = arith.constant 0 : index
      %c0_7 = arith.constant 0 : index
      %c0_8 = arith.constant 0 : index
      %16 = vector.load %arg9[%c0_6, %c0_7, %c0_8] : memref<4x16x1xf32, #tpu.memory_space<vmem>>, vector<4x16x1xf32>
      tpu.vector_store %arg9[%c0_6, %c0_7, %c0_8], %15 {strides = array<i32>} : memref<4x16x1xf32, #tpu.memory_space<vmem>>, vector<4x16x1xf32>,
      %cst_9 = arith.constant 0.000000e+00 : f32
      %17 = vector.broadcast %cst_9 : f32 to vector<4x16x8xf32>
      %c0_10 = arith.constant 0 : index
      %c0_11 = arith.constant 0 : index
      %c0_12 = arith.constant 0 : index
      %18 = vector.load %arg10[%c0_10, %c0_11, %c0_12] : memref<4x16x8xf32, #tpu.memory_space<vmem>>, vector<4x16x8xf32>
      tpu.vector_store %arg10[%c0_10, %c0_11, %c0_12], %17 {strides = array<i32>} : memref<4x16x8xf32, #tpu.memory_space<vmem>>, vector<4x16x8xf32>,
    } else {
    }
    %7 = arith.cmpi slt, %3, %1 : i32
    %8 = arith.extui %7 : i1 to i32
    %c0_i32_1 = arith.constant 0 : i32
    %9 = arith.cmpi ne, %8, %c0_i32_1 : i32
    scf.if %9 {
      %c0 = arith.constant 0 : index
      %c0_3 = arith.constant 0 : index
      %c0_4 = arith.constant 0 : index
      %c0_5 = arith.constant 0 : index
      %13 = vector.load %arg4[%c0, %c0_3, %c0_4, %c0_5] : memref<1x4x16x8xbf16, #tpu.memory_space<vmem>>, vector<1x4x16x8xbf16>
      %14 = vector.shape_cast %13 : vector<1x4x16x8xbf16> to vector<4x16x8xbf16>
      %c0_6 = arith.constant 0 : index
      %c0_7 = arith.constant 0 : index
      %c0_8 = arith.constant 0 : index
      %c0_9 = arith.constant 0 : index
      %15 = vector.load %arg5[%c0_6, %c0_7, %c0_8, %c0_9] : memref<1x4x16x8xbf16, #tpu.memory_space<vmem>>, vector<1x4x16x8xbf16>
      %16 = vector.shape_cast %15 : vector<1x4x16x8xbf16> to vector<4x16x8xbf16>
      %c0_10 = arith.constant 0 : index
      %c0_11 = arith.constant 0 : index
      %c0_12 = arith.constant 0 : index
      %c0_13 = arith.constant 0 : index
      %17 = vector.load %arg6[%c0_10, %c0_11, %c0_12, %c0_13] : memref<1x4x16x8xbf16, #tpu.memory_space<vmem>>, vector<1x4x16x8xbf16>
      %18 = vector.shape_cast %17 : vector<1x4x16x8xbf16> to vector<4x16x8xbf16>
      "tpu.trace_start"() <{level = 10 : i32, message = "hqd,hkd->hqk"}> : () -> ()
      %cst = arith.constant dense<0.000000e+00> : vector<4x16x16xf32>
      %19 = tpu.matmul %14, %16, %cst {dimension_numbers = #tpu.dot_dimension_numbers<[2], [2], [1], [1], [0, 0, 0, 1, 1, 1], [0], [0]>} : vector<4x16x8xbf16>, vector<4x16x8xbf16>, vector<4x16x16xf32> -> vector<4x16x16xf32>
      "tpu.trace_stop"() : () -> ()
      %c0_14 = arith.constant 0 : index
      %c0_15 = arith.constant 0 : index
      %c0_16 = arith.constant 0 : index
      %20 = vector.load %arg8[%c0_14, %c0_15, %c0_16] : memref<4x16x1xf32, #tpu.memory_space<vmem>>, vector<4x16x1xf32>
      %cst_17 = arith.constant dense<0xFF800000> : vector<4x16xf32>
      %21 = vector.multi_reduction <maximumf>, %19, %cst_17 [2] : vector<4x16x16xf32> to vector<4x16xf32>
      %22 = vector.shape_cast %21 : vector<4x16xf32> to vector<4x16x1xf32>
      %23 = arith.maximumf %20, %22 : vector<4x16x1xf32>
      %24 = arith.subf %20, %23 : vector<4x16x1xf32>
      %25 = math.exp %24 : vector<4x16x1xf32>
      %26 = vector.broadcast %23 : vector<4x16x1xf32> to vector<4x16x16xf32>
      %27 = arith.subf %19, %26 : vector<4x16x16xf32>
      %28 = math.exp %27 : vector<4x16x16xf32>
      %c0_18 = arith.constant 0 : index
      %c0_19 = arith.constant 0 : index
      %c0_20 = arith.constant 0 : index
      %29 = vector.load %arg9[%c0_18, %c0_19, %c0_20] : memref<4x16x1xf32, #tpu.memory_space<vmem>>, vector<4x16x1xf32>
      %30 = arith.mulf %25, %29 : vector<4x16x1xf32>
      %cst_21 = arith.constant dense<0.000000e+00> : vector<4x16xf32>
      %31 = vector.multi_reduction <add>, %28, %cst_21 [2] : vector<4x16x16xf32> to vector<4x16xf32>
      %32 = vector.shape_cast %31 : vector<4x16xf32> to vector<4x16x1xf32>
      %33 = arith.addf %30, %32 : vector<4x16x1xf32>
      %c0_22 = arith.constant 0 : index
      %c0_23 = arith.constant 0 : index
      %c0_24 = arith.constant 0 : index
      %34 = vector.load %arg9[%c0_22, %c0_23, %c0_24] : memref<4x16x1xf32, #tpu.memory_space<vmem>>, vector<4x16x1xf32>
      tpu.vector_store %arg9[%c0_22, %c0_23, %c0_24], %33 {strides = array<i32>} : memref<4x16x1xf32, #tpu.memory_space<vmem>>, vector<4x16x1xf32>,
      %c0_25 = arith.constant 0 : index
      %c0_26 = arith.constant 0 : index
      %c0_27 = arith.constant 0 : index
      %35 = vector.load %arg10[%c0_25, %c0_26, %c0_27] : memref<4x16x8xf32, #tpu.memory_space<vmem>>, vector<4x16x8xf32>
      %36 = vector.broadcast %25 : vector<4x16x1xf32> to vector<4x16x8xf32>
      %37 = arith.mulf %36, %35 : vector<4x16x8xf32>
      %38 = arith.truncf %28 : vector<4x16x16xf32> to vector<4x16x16xbf16>
      "tpu.trace_start"() <{level = 10 : i32, message = "hqk,hkd->hqd"}> : () -> ()
      %cst_28 = arith.constant dense<0.000000e+00> : vector<4x16x8xf32>
      %39 = tpu.matmul %38, %18, %cst_28 {dimension_numbers = #tpu.dot_dimension_numbers<[2], [1], [1], [2], [0, 0, 0, 1, 1, 2], [0], [0]>} : vector<4x16x16xbf16>, vector<4x16x8xbf16>, vector<4x16x8xf32> -> vector<4x16x8xf32>
      "tpu.trace_stop"() : () -> ()
      %40 = arith.addf %37, %39 : vector<4x16x8xf32>
      %c0_29 = arith.constant 0 : index
      %c0_30 = arith.constant 0 : index
      %c0_31 = arith.constant 0 : index
      %41 = vector.load %arg10[%c0_29, %c0_30, %c0_31] : memref<4x16x8xf32, #tpu.memory_space<vmem>>, vector<4x16x8xf32>
      tpu.vector_store %arg10[%c0_29, %c0_30, %c0_31], %40 {strides = array<i32>} : memref<4x16x8xf32, #tpu.memory_space<vmem>>, vector<4x16x8xf32>,
      %c0_32 = arith.constant 0 : index
      %c0_33 = arith.constant 0 : index
      %c0_34 = arith.constant 0 : index
      %42 = vector.load %arg8[%c0_32, %c0_33, %c0_34] : memref<4x16x1xf32, #tpu.memory_space<vmem>>, vector<4x16x1xf32>
      tpu.vector_store %arg8[%c0_32, %c0_33, %c0_34], %23 {strides = array<i32>} : memref<4x16x1xf32, #tpu.memory_space<vmem>>, vector<4x16x1xf32>,
    } else {
    }
    %10 = arith.cmpi eq, %3, %1 : i32
    %11 = arith.extui %10 : i1 to i32
    %c0_i32_2 = arith.constant 0 : i32
    %12 = arith.cmpi ne, %11, %c0_i32_2 : i32
    scf.if %12 {
      %c0 = arith.constant 0 : index
      %c0_3 = arith.constant 0 : index
      %c0_4 = arith.constant 0 : index
      %c0_5 = arith.constant 0 : index
      %13 = vector.load %arg4[%c0, %c0_3, %c0_4, %c0_5] : memref<1x4x16x8xbf16, #tpu.memory_space<vmem>>, vector<1x4x16x8xbf16>
      %14 = vector.shape_cast %13 : vector<1x4x16x8xbf16> to vector<4x16x8xbf16>
      %c0_6 = arith.constant 0 : index
      %c0_7 = arith.constant 0 : index
      %c0_8 = arith.constant 0 : index
      %c0_9 = arith.constant 0 : index
      %15 = vector.load %arg5[%c0_6, %c0_7, %c0_8, %c0_9] : memref<1x4x16x8xbf16, #tpu.memory_space<vmem>>, vector<1x4x16x8xbf16>
      %16 = vector.shape_cast %15 : vector<1x4x16x8xbf16> to vector<4x16x8xbf16>
      %c0_10 = arith.constant 0 : index
      %c0_11 = arith.constant 0 : index
      %c0_12 = arith.constant 0 : index
      %c0_13 = arith.constant 0 : index
      %17 = vector.load %arg6[%c0_10, %c0_11, %c0_12, %c0_13] : memref<1x4x16x8xbf16, #tpu.memory_space<vmem>>, vector<1x4x16x8xbf16>
      %18 = vector.shape_cast %17 : vector<1x4x16x8xbf16> to vector<4x16x8xbf16>
      "tpu.trace_start"() <{level = 10 : i32, message = "hqd,hkd->hqk"}> : () -> ()
      %cst = arith.constant dense<0.000000e+00> : vector<4x16x16xf32>
      %19 = tpu.matmul %14, %16, %cst {dimension_numbers = #tpu.dot_dimension_numbers<[2], [2], [1], [1], [0, 0, 0, 1, 1, 1], [0], [0]>} : vector<4x16x8xbf16>, vector<4x16x8xbf16>, vector<4x16x16xf32> -> vector<4x16x16xf32>
      "tpu.trace_stop"() : () -> ()
      %20 = tpu.iota {dimensions = array<i32: 0>} : vector<16x16xi32>
      %21 = tpu.iota {dimensions = array<i32: 1>} : vector<16x16xi32>
      %22 = arith.cmpi sle, %21, %20 : vector<16x16xi32>
      %23 = vector.shape_cast %22 : vector<16x16xi1> to vector<1x16x16xi1>
      %cst_14 = arith.constant 0xFF800000 : f32
      %24 = vector.shape_cast %23 : vector<1x16x16xi1> to vector<1x16x16xi1>
      %25 = vector.broadcast %24 : vector<1x16x16xi1> to vector<4x16x16xi1>
      %26 = vector.broadcast %cst_14 : f32 to vector<4x16x16xf32>
      %27 = arith.select %25, %19, %26 : vector<4x16x16xi1>, vector<4x16x16xf32>
      %c0_15 = arith.constant 0 : index
      %c0_16 = arith.constant 0 : index
      %c0_17 = arith.constant 0 : index
      %28 = vector.load %arg8[%c0_15, %c0_16, %c0_17] : memref<4x16x1xf32, #tpu.memory_space<vmem>>, vector<4x16x1xf32>
      %cst_18 = arith.constant dense<0xFF800000> : vector<4x16xf32>
      %29 = vector.multi_reduction <maximumf>, %27, %cst_18 [2] : vector<4x16x16xf32> to vector<4x16xf32>
      %30 = vector.shape_cast %29 : vector<4x16xf32> to vector<4x16x1xf32>
      %31 = arith.maximumf %28, %30 : vector<4x16x1xf32>
      %32 = arith.subf %28, %31 : vector<4x16x1xf32>
      %33 = math.exp %32 : vector<4x16x1xf32>
      %34 = vector.broadcast %31 : vector<4x16x1xf32> to vector<4x16x16xf32>
      %35 = arith.subf %27, %34 : vector<4x16x16xf32>
      %36 = math.exp %35 : vector<4x16x16xf32>
      %c0_19 = arith.constant 0 : index
      %c0_20 = arith.constant 0 : index
      %c0_21 = arith.constant 0 : index
      %37 = vector.load %arg9[%c0_19, %c0_20, %c0_21] : memref<4x16x1xf32, #tpu.memory_space<vmem>>, vector<4x16x1xf32>
      %38 = arith.mulf %33, %37 : vector<4x16x1xf32>
      %cst_22 = arith.constant dense<0.000000e+00> : vector<4x16xf32>
      %39 = vector.multi_reduction <add>, %36, %cst_22 [2] : vector<4x16x16xf32> to vector<4x16xf32>
      %40 = vector.shape_cast %39 : vector<4x16xf32> to vector<4x16x1xf32>
      %41 = arith.addf %38, %40 : vector<4x16x1xf32>
      %c0_23 = arith.constant 0 : index
      %c0_24 = arith.constant 0 : index
      %c0_25 = arith.constant 0 : index
      %42 = vector.load %arg9[%c0_23, %c0_24, %c0_25] : memref<4x16x1xf32, #tpu.memory_space<vmem>>, vector<4x16x1xf32>
      tpu.vector_store %arg9[%c0_23, %c0_24, %c0_25], %41 {strides = array<i32>} : memref<4x16x1xf32, #tpu.memory_space<vmem>>, vector<4x16x1xf32>,
      %c0_26 = arith.constant 0 : index
      %c0_27 = arith.constant 0 : index
      %c0_28 = arith.constant 0 : index
      %43 = vector.load %arg10[%c0_26, %c0_27, %c0_28] : memref<4x16x8xf32, #tpu.memory_space<vmem>>, vector<4x16x8xf32>
      %44 = vector.broadcast %33 : vector<4x16x1xf32> to vector<4x16x8xf32>
      %45 = arith.mulf %44, %43 : vector<4x16x8xf32>
      %46 = arith.truncf %36 : vector<4x16x16xf32> to vector<4x16x16xbf16>
      "tpu.trace_start"() <{level = 10 : i32, message = "hqk,hkd->hqd"}> : () -> ()
      %cst_29 = arith.constant dense<0.000000e+00> : vector<4x16x8xf32>
      %47 = tpu.matmul %46, %18, %cst_29 {dimension_numbers = #tpu.dot_dimension_numbers<[2], [1], [1], [2], [0, 0, 0, 1, 1, 2], [0], [0]>} : vector<4x16x16xbf16>, vector<4x16x8xbf16>, vector<4x16x8xf32> -> vector<4x16x8xf32>
      "tpu.trace_stop"() : () -> ()
      %48 = arith.addf %45, %47 : vector<4x16x8xf32>
      %c0_30 = arith.constant 0 : index
      %c0_31 = arith.constant 0 : index
      %c0_32 = arith.constant 0 : index
      %49 = vector.load %arg10[%c0_30, %c0_31, %c0_32] : memref<4x16x8xf32, #tpu.memory_space<vmem>>, vector<4x16x8xf32>
      tpu.vector_store %arg10[%c0_30, %c0_31, %c0_32], %48 {strides = array<i32>} : memref<4x16x8xf32, #tpu.memory_space<vmem>>, vector<4x16x8xf32>,
      %c0_33 = arith.constant 0 : index
      %c0_34 = arith.constant 0 : index
      %c0_35 = arith.constant 0 : index
      %50 = vector.load %arg8[%c0_33, %c0_34, %c0_35] : memref<4x16x1xf32, #tpu.memory_space<vmem>>, vector<4x16x1xf32>
      tpu.vector_store %arg8[%c0_33, %c0_34, %c0_35], %31 {strides = array<i32>} : memref<4x16x1xf32, #tpu.memory_space<vmem>>, vector<4x16x1xf32>,
      %c0_36 = arith.constant 0 : index
      %c0_37 = arith.constant 0 : index
      %c0_38 = arith.constant 0 : index
      %51 = vector.load %arg9[%c0_36, %c0_37, %c0_38] : memref<4x16x1xf32, #tpu.memory_space<vmem>>, vector<4x16x1xf32>
      %52 = tpu.reciprocal %51 {approx = true} : vector<4x16x1xf32> -> vector<4x16x1xf32>
      %c0_39 = arith.constant 0 : index
      %c0_40 = arith.constant 0 : index
      %c0_41 = arith.constant 0 : index
      %53 = vector.load %arg10[%c0_39, %c0_40, %c0_41] : memref<4x16x8xf32, #tpu.memory_space<vmem>>, vector<4x16x8xf32>
      %54 = vector.broadcast %52 : vector<4x16x1xf32> to vector<4x16x8xf32>
      %55 = arith.mulf %53, %54 : vector<4x16x8xf32>
      %56 = tpu.transpose %55, [1, 0, 2] : vector<4x16x8xf32> -> vector<16x4x8xf32>
      %57 = vector.shape_cast %56 : vector<16x4x8xf32> to vector<16x32xf32>
      %58 = arith.truncf %57 : vector<16x32xf32> to vector<16x32xbf16>
      %c0_42 = arith.constant 0 : index
      %c0_43 = arith.constant 0 : index
      %c0_44 = arith.constant 0 : index
      %59 = vector.load %arg7[%c0_42, %c0_43, %c0_44] : memref<1x16x32xbf16, #tpu.memory_space<vmem>>, vector<1x16x32xbf16>
      %60 = vector.shape_cast %59 : vector<1x16x32xbf16> to vector<16x32xbf16>
      %61 = vector.shape_cast %58 : vector<16x32xbf16> to vector<1x16x32xbf16>
      tpu.vector_store %arg7[%c0_42, %c0_43, %c0_44], %61 {strides = array<i32>} : memref<1x16x32xbf16, #tpu.memory_space<vmem>>, vector<1x16x32xbf16>,
    } else {
    }
    return
  }
  func.func @transform_0(%arg0: i32, %arg1: i32, %arg2: memref<3xi32, #tpu.memory_space<smem>>, %arg3: memref<3xi32, #tpu.memory_space<smem>>) -> (i32, i32, i32, i32) {
    %0 = arith.index_cast %arg1 : i32 to index
    %1 = memref.load %arg2[%0] : memref<3xi32, #tpu.memory_space<smem>>
    %c0_i32 = arith.constant 0 : i32
    %c0_i32_0 = arith.constant 0 : i32
    %c0_i32_1 = arith.constant 0 : i32
    return %arg0, %c0_i32, %1, %c0_i32_0 : i32, i32, i32, i32
  }
  func.func @transform_1(%arg0: i32, %arg1: i32, %arg2: memref<3xi32, #tpu.memory_space<smem>>, %arg3: memref<3xi32, #tpu.memory_space<smem>>) -> (i32, i32, i32, i32) {
    %0 = arith.index_cast %arg1 : i32 to index
    %1 = memref.load %arg3[%0] : memref<3xi32, #tpu.memory_space<smem>>
    %c0_i32 = arith.constant 0 : i32
    %c0_i32_0 = arith.constant 0 : i32
    %c0_i32_1 = arith.constant 0 : i32
    return %arg0, %c0_i32, %1, %c0_i32_0 : i32, i32, i32, i32
  }
  func.func @transform_2(%arg0: i32, %arg1: i32, %arg2: memref<3xi32, #tpu.memory_space<smem>>, %arg3: memref<3xi32, #tpu.memory_space<smem>>) -> (i32, i32, i32, i32) {
    %0 = arith.index_cast %arg1 : i32 to index
    %1 = memref.load %arg3[%0] : memref<3xi32, #tpu.memory_space<smem>>
    %c0_i32 = arith.constant 0 : i32
    %c0_i32_0 = arith.constant 0 : i32
    %c0_i32_1 = arith.constant 0 : i32
    return %arg0, %c0_i32, %1, %c0_i32_0 : i32, i32, i32, i32
  }
  func.func @transform_3(%arg0: i32, %arg1: i32, %arg2: memref<3xi32, #tpu.memory_space<smem>>, %arg3: memref<3xi32, #tpu.memory_space<smem>>) -> (i32, i32, i32) {
    %0 = arith.index_cast %arg1 : i32 to index
    %1 = memref.load %arg2[%0] : memref<3xi32, #tpu.memory_space<smem>>
    %c0_i32 = arith.constant 0 : i32
    %c0_i32_0 = arith.constant 0 : i32
    return %arg0, %1, %c0_i32 : i32, i32, i32
  }
}

module attributes {stable_mosaic.version = 11 : i64} {
  func.func @_linear_kernel(%arg0: i32, %arg1: i32, %arg2: i32, %arg3: memref<32x32xbf16, #tpu.memory_space<vmem>>, %arg4: memref<32x32xbf16, #tpu.memory_space<vmem>>, %arg5: memref<1x32xf32, #tpu.memory_space<vmem>>, %arg6: memref<32x32xf32, #tpu.memory_space<vmem>>, %arg7: memref<32x32xf32, #tpu.memory_space<vmem>>) attributes {dimension_semantics = [#tpu.dimension_semantics<parallel>, #tpu.dimension_semantics<parallel>, #tpu.dimension_semantics<arbitrary>], iteration_bounds = array<i64: 2, 1, 1>, scalar_prefetch = 0 : i64, scratch_operands = 1 : i64, tpu.core_type = #tpu.core_type<tc>, window_params = [{transform_indices = @transform_0, window_bounds = array<i64: 32, 32>}, {transform_indices = @transform_1, window_bounds = array<i64: 32, 32>}, {transform_indices = @transform_2, window_bounds = array<i64: 1, 32>}, {transform_indices = @transform_3, window_bounds = array<i64: 32, 32>}]} {
    %c0_i32 = arith.constant 0 : i32
    %0 = arith.cmpi eq, %arg2, %c0_i32 : i32
    %1 = arith.extui %0 : i1 to i32
    %c0_i32_0 = arith.constant 0 : i32
    %2 = arith.cmpi ne, %1, %c0_i32_0 : i32
    scf.if %2 {
      %cst_10 = arith.constant 0.000000e+00 : f32
      %12 = vector.broadcast %cst_10 : f32 to vector<32x32xf32>
      %c0_11 = arith.constant 0 : index
      %c0_12 = arith.constant 0 : index
      %13 = vector.load %arg7[%c0_11, %c0_12] : memref<32x32xf32, #tpu.memory_space<vmem>>, vector<32x32xf32>
      tpu.vector_store %arg7[%c0_11, %c0_12], %12 {strides = array<i32>} : memref<32x32xf32, #tpu.memory_space<vmem>>, vector<32x32xf32>,
    } else {
    }
    %c0 = arith.constant 0 : index
    %c0_1 = arith.constant 0 : index
    %3 = vector.load %arg7[%c0, %c0_1] : memref<32x32xf32, #tpu.memory_space<vmem>>, vector<32x32xf32>
    %c0_2 = arith.constant 0 : index
    %c0_3 = arith.constant 0 : index
    %4 = vector.load %arg3[%c0_2, %c0_3] : memref<32x32xbf16, #tpu.memory_space<vmem>>, vector<32x32xbf16>
    %c0_4 = arith.constant 0 : index
    %c0_5 = arith.constant 0 : index
    %5 = vector.load %arg4[%c0_4, %c0_5] : memref<32x32xbf16, #tpu.memory_space<vmem>>, vector<32x32xbf16>
    %cst = arith.constant dense<0.000000e+00> : vector<32x32xf32>
    %6 = tpu.matmul %4, %5, %cst {dimension_numbers = #tpu.dot_dimension_numbers<[1], [0], [0], [1], [0, 0, 1, 1], [], []>} : vector<32x32xbf16>, vector<32x32xbf16>, vector<32x32xf32> -> vector<32x32xf32>
    %7 = arith.addf %3, %6 : vector<32x32xf32>
    %c0_6 = arith.constant 0 : index
    %c0_7 = arith.constant 0 : index
    %8 = vector.load %arg7[%c0_6, %c0_7] : memref<32x32xf32, #tpu.memory_space<vmem>>, vector<32x32xf32>
    tpu.vector_store %arg7[%c0_6, %c0_7], %7 {strides = array<i32>} : memref<32x32xf32, #tpu.memory_space<vmem>>, vector<32x32xf32>,
    %c0_i32_8 = arith.constant 0 : i32
    %9 = arith.cmpi eq, %arg2, %c0_i32_8 : i32
    %10 = arith.extui %9 : i1 to i32
    %c0_i32_9 = arith.constant 0 : i32
    %11 = arith.cmpi ne, %10, %c0_i32_9 : i32
    scf.if %11 {
      %c0_10 = arith.constant 0 : index
      %c0_11 = arith.constant 0 : index
      %12 = vector.load %arg7[%c0_10, %c0_11] : memref<32x32xf32, #tpu.memory_space<vmem>>, vector<32x32xf32>
      %c0_12 = arith.constant 0 : index
      %c0_13 = arith.constant 0 : index
      %13 = vector.load %arg5[%c0_12, %c0_13] : memref<1x32xf32, #tpu.memory_space<vmem>>, vector<1x32xf32>
      %14 = vector.broadcast %13 : vector<1x32xf32> to vector<32x32xf32>
      %15 = arith.addf %12, %14 : vector<32x32xf32>
      %c0_14 = arith.constant 0 : index
      %c0_15 = arith.constant 0 : index
      %16 = vector.load %arg6[%c0_14, %c0_15] : memref<32x32xf32, #tpu.memory_space<vmem>>, vector<32x32xf32>
      tpu.vector_store %arg6[%c0_14, %c0_15], %15 {strides = array<i32>} : memref<32x32xf32, #tpu.memory_space<vmem>>, vector<32x32xf32>,
    } else {
    }
    return
  }
  func.func @transform_0(%arg0: i32, %arg1: i32, %arg2: i32) -> (i32, i32) {
    %c0_i32 = arith.constant 0 : i32
    return %arg0, %arg2 : i32, i32
  }
  func.func @transform_1(%arg0: i32, %arg1: i32, %arg2: i32) -> (i32, i32) {
    %c0_i32 = arith.constant 0 : i32
    return %arg2, %arg1 : i32, i32
  }
  func.func @transform_2(%arg0: i32, %arg1: i32, %arg2: i32) -> (i32, i32) {
    %c0_i32 = arith.constant 0 : i32
    %c0_i32_0 = arith.constant 0 : i32
    return %c0_i32, %arg1 : i32, i32
  }
  func.func @transform_3(%arg0: i32, %arg1: i32, %arg2: i32) -> (i32, i32) {
    %c0_i32 = arith.constant 0 : i32
    return %arg0, %arg1 : i32, i32
  }
}

</mosaic_0001>

<llo_original>
// kernel: causal_self_attention.3
$region0: #{causal_self_attention.3}
  #allocation0 [shape = 'u32[]', space=smem, size = 0x4, offset = 0x4, fixed_abs, tag = 'smem constant byte address 0x4 - core index']
  #allocation1 [shape = 'u32[72,128]{1,0:T(1,128)}', space=vmem, size = 0x9000, scoped, tag = 'internal scratch']
  #allocation2 [shape = 'f32[32,96]{1,0:T(8,128)}', space=vmem, size = 0x4000, scoped, tag = 'scratch operand']
  %s0 = inlined_call_operand.vmem [shape: bf16[64,32], index: 0, kind: input, shape index: {}]
  %s1 = inlined_call_operand.vmem [shape: bf16[32,96], index: 1, kind: input, shape index: {}]
  %s2 = inlined_call_operand.vmem [shape: f32[1,96], index: 2, kind: input, shape index: {}]
  %s3 = inlined_call_operand.vmem [shape: bf16[64,96], index: 3, kind: output, shape index: {}]
  %s4 = sld [smem:[#allocation0]]
  $region53: #{causal_self_attention.3} parent=0
    _
  %s6 = ssub.s32 1, %s4
  %s7 = scalar_select 0, %s6, %s4
  loop: start=0, step=1, limit=4
  $region2: #{causal_self_attention.3} parent=0 // loop_pre_header
    _
  $region3: #{causal_self_attention.3} parent=0 // loop_header
    %s9 = sphi 0, %s13
    %p10 = scmp.ge.s32.totalorder %s9, 4
    %s16 = sphi 0, %s35
    %s17 = sphi 0, %s31
    %s18 = sphi 0, %s27
    %s19 = sphi 0, %s16
    %s20 = sphi 0, %s17
    %s21 = sphi 0, %s18
    %s22 = sphi 0, %s19
    %s23 = sphi 0, %s20
    %s24 = sphi 0, %s21
    %s40 = sphi 0, %s42
    %s43 = sphi 0, %s40
    %s44 = sphi 0, %s43
    %s60 = sphi 0, %s44
    %s68 = sphi 0, %s70
    %s71 = sphi 0, %s68
    %s72 = sphi 0, %s71
    %s88 = sphi 0, %s72
    %s94 = sphi 0, %s96
    %s97 = sphi 0, %s94
    %s98 = sphi 0, %s97
    %s114 = sphi 0, %s98
    %s122 = sphi 0, %s124
    %s125 = sphi 0, %s122
    %s126 = sphi 0, %s125
    %s142 = sphi 0, %s126
  $region4: #{causal_self_attention.3} parent=0 // loop_header_branch
    %12 = sbr.rel (%p10) target = $region8
  $region5: #{causal_self_attention.3} parent=0 // loop_body
    %s14 = ssub.s32 %s9, 1
    %s15 = ssub.s32 %s9, 2
    %s25 = sadd.s32 1, %s18
    %p26 = scmp.ge.s32.totalorder %s25, 1
    %s27 = scalar_select %p26, 0, %s25
    %s28 = sadd.s32 1, %s17
    %s29 = scalar_select %p26, %s28, %s17
    %p30 = scmp.ge.s32.totalorder %s29, 1
    %s31 = scalar_select %p30, 0, %s29
    %s32 = sadd.s32 1, %s16
    %s33 = scalar_select %p30, %s32, %s16
    %p34 = scmp.ge.s32.totalorder %s33, 2
    %s35 = scalar_select %p34, 0, %s33
    %s36 = ssub.s32 %s16, %s35
    %s37 = ssub.s32 %s18, %s27
    %s38 = sor.u32 %s36, %s37
    %p39 = scmp.eq.s32.totalorder %s38, 0
    %s41 = sadd.s32 %s40, 1
    %s42 = scalar_select %p39, %s40, %s41
    %p45 = pneg %p39
    %p46 = scmp.eq.s32.totalorder %s9, 1
    %p47 = por %p45, %p46
    %p48 = scmp.ne.s32.totalorder %s40, %s43
    %p49 = scmp.eq.s32.totalorder %s9, 0
    %p50 = por %p48, %p49
    %p51 = scmp.ne.s32.totalorder %s40, %s43
    %p52 = scmp.eq.s32.totalorder %s14, 1
    %p53 = por %p51, %p52
    %p54 = scmp.ne.s32.totalorder %s43, %s44
    %p55 = scmp.eq.s32.totalorder %s14, 0
    %p56 = por %p54, %p55
    %p57 = scmp.ne.s32.totalorder %s43, %s44
    %p58 = scmp.eq.s32.totalorder %s15, 1
    %p59 = por %p57, %p58
    %p61 = scmp.ne.s32.totalorder %s44, %s60
    %p62 = scmp.eq.s32.totalorder %s15, 0
    %p63 = por %p61, %p62
    %s64 = ssub.s32 %s18, %s27
    %s65 = ssub.s32 %s17, %s31
    %s66 = sor.u32 %s64, %s65
    %p67 = scmp.eq.s32.totalorder %s66, 0
    %s69 = sadd.s32 %s68, 1
    %s70 = scalar_select %p67, %s68, %s69
    %p73 = pneg %p67
    %p74 = scmp.eq.s32.totalorder %s9, 1
    %p75 = por %p73, %p74
    %p76 = scmp.ne.s32.totalorder %s68, %s71
    %p77 = scmp.eq.s32.totalorder %s9, 0
    %p78 = por %p76, %p77
    %p79 = scmp.ne.s32.totalorder %s68, %s71
    %p80 = scmp.eq.s32.totalorder %s14, 1
    %p81 = por %p79, %p80
    %p82 = scmp.ne.s32.totalorder %s71, %s72
    %p83 = scmp.eq.s32.totalorder %s14, 0
    %p84 = por %p82, %p83
    %p85 = scmp.ne.s32.totalorder %s71, %s72
    %p86 = scmp.eq.s32.totalorder %s15, 1
    %p87 = por %p85, %p86
    %p89 = scmp.ne.s32.totalorder %s72, %s88
    %p90 = scmp.eq.s32.totalorder %s15, 0
    %p91 = por %p89, %p90
    %s92 = ssub.s32 %s17, %s31
    %p93 = scmp.eq.s32.totalorder %s92, 0
    %s95 = sadd.s32 %s94, 1
    %s96 = scalar_select %p93, %s94, %s95
    %p99 = pneg %p93
    %p100 = scmp.eq.s32.totalorder %s9, 1
    %p101 = por %p99, %p100
    %p102 = scmp.ne.s32.totalorder %s94, %s97
    %p103 = scmp.eq.s32.totalorder %s9, 0
    %p104 = por %p102, %p103
    %p105 = scmp.ne.s32.totalorder %s94, %s97
    %p106 = scmp.eq.s32.totalorder %s14, 1
    %p107 = por %p105, %p106
    %p108 = scmp.ne.s32.totalorder %s97, %s98
    %p109 = scmp.eq.s32.totalorder %s14, 0
    %p110 = por %p108, %p109
    %p111 = scmp.ne.s32.totalorder %s97, %s98
    %p112 = scmp.eq.s32.totalorder %s15, 1
    %p113 = por %p111, %p112
    %p115 = scmp.ne.s32.totalorder %s98, %s114
    %p116 = scmp.eq.s32.totalorder %s15, 0
    %p117 = por %p115, %p116
    %s118 = ssub.s32 %s16, %s35
    %s119 = ssub.s32 %s17, %s31
    %s120 = sor.u32 %s118, %s119
    %p121 = scmp.eq.s32.totalorder %s120, 0
    %s123 = sadd.s32 %s122, 1
    %s124 = scalar_select %p121, %s122, %s123
    %p127 = pneg %p121
    %p128 = scmp.eq.s32.totalorder %s9, 1
    %p129 = por %p127, %p128
    %p130 = scmp.ne.s32.totalorder %s122, %s125
    %p131 = scmp.eq.s32.totalorder %s9, 0
    %p132 = por %p130, %p131
    %p133 = scmp.ne.s32.totalorder %s122, %s125
    %p134 = scmp.eq.s32.totalorder %s14, 1
    %p135 = por %p133, %p134
    %p136 = scmp.ne.s32.totalorder %s125, %s126
    %p137 = scmp.eq.s32.totalorder %s14, 0
    %p138 = por %p136, %p137
    %p139 = scmp.ne.s32.totalorder %s125, %s126
    %p140 = scmp.eq.s32.totalorder %s15, 1
    %p141 = por %p139, %p140
    %p143 = scmp.ne.s32.totalorder %s126, %s142
    %p144 = scmp.eq.s32.totalorder %s15, 0
    %p145 = por %p143, %p144
    %p146 = scmp.le.s32.totalorder 1, %s9
    %p147 = scmp.lt.s32.totalorder %s9, 3
    %p148 = pnand %p146, %p147
    %p149 = pneg %p148
    // Predicated region
    $region9: #{causal_self_attention.3} parent=5 // pred_check
      _
    $region10: #{causal_self_attention.3} parent=5 // pred_check_branch
      %151 = sbr.rel (%p148) target = $region12
    $region11: #{causal_self_attention.3} parent=5 // pred_region
      %s152 = ssub.s32 %s9, 1
      // Predicated region
      $region13: #{causal_self_attention.3} parent=11 // pred_check
        %p153 = pneg %p84
      $region14: #{causal_self_attention.3} parent=11 // pred_check_branch
        %155 = sbr.rel (%p153) target = $region16
      $region15: #{causal_self_attention.3} parent=11 // pred_region
        %s156 = smul.u32 4, %s21
        %p157 = scmp.lt.s32.totalorder %s156, 3
        %s158 = scalar_select %p157, %s156, 3
        %p159 = scmp.lt.s32.totalorder %s20, 0
        %s160 = scalar_select %p159, %s20, 0
        %s161 = sadd.s32 %s160, %s158
        %s162 = smul.addr %s161, 4
        %s163 = scalar_lea.vmem %s1, %s162
        %s164 = smul.u32 4, %s21
      $region16: #{causal_self_attention.3} parent=11 // pred_fallthru
        _
      // Predicated region
      $region17: #{causal_self_attention.3} parent=11 // pred_check
        %p165 = pneg %p110
      $region18: #{causal_self_attention.3} parent=11 // pred_check_branch
        %167 = sbr.rel (%p165) target = $region20
      $region19: #{causal_self_attention.3} parent=11 // pred_region
        %p168 = scmp.lt.s32.totalorder %s20, 0
        %s169 = scalar_select %p168, %s20, 0
        %s170 = scalar_lea.vmem %s2, %s169
      $region20: #{causal_self_attention.3} parent=11 // pred_fallthru
        _
    $region12: #{causal_self_attention.3} parent=5 // pred_fallthru
      _
    %p171 = scmp.lt.s32.totalorder %s9, 2
    // Predicated region
    $region21: #{causal_self_attention.3} parent=5 // pred_check
      %p172 = pneg %p171
    $region22: #{causal_self_attention.3} parent=5 // pred_check_branch
      %174 = sbr.rel (%p172) target = $region24
    $region23: #{causal_self_attention.3} parent=5 // pred_region
      // Predicated region
      $region25: #{causal_self_attention.3} parent=23 // pred_check
        %p175 = pneg %p50
      $region26: #{causal_self_attention.3} parent=23 // pred_check_branch
        %177 = sbr.rel (%p175) target = $region28
      $region27: #{causal_self_attention.3} parent=23 // pred_region
        %s178 = smul.u32 4, %s16
        %p179 = scmp.lt.s32.totalorder %s178, 7
        %s180 = scalar_select %p179, %s178, 7
        %p181 = scmp.lt.s32.totalorder %s18, 0
        %s182 = scalar_select %p181, %s18, 0
        %s183 = sadd.s32 %s182, %s180
        %s184 = smul.addr %s183, 4
        %s185 = scalar_lea.vmem %s0, %s184
        %s186 = smul.u32 4, %s16
      $region28: #{causal_self_attention.3} parent=23 // pred_fallthru
        _
    $region24: #{causal_self_attention.3} parent=5 // pred_fallthru
      _
    %p187 = scmp.le.s32.totalorder 1, %s9
    %p188 = scmp.lt.s32.totalorder %s9, 3
    %p189 = pnand %p187, %p188
    %p190 = pneg %p189
    // Predicated region
    $region29: #{causal_self_attention.3} parent=5 // pred_check
      _
    $region30: #{causal_self_attention.3} parent=5 // pred_check_branch
      %192 = sbr.rel (%p189) target = $region32
    $region31: #{causal_self_attention.3} parent=5 // pred_region
      %s193 = ssub.s32 %s9, 1
      %s194 = smul.u32 4, %s19
      %p195 = scmp.lt.s32.totalorder %s194, 7
      %s196 = scalar_select %p195, %s194, 7
      %p197 = scmp.lt.s32.totalorder %s21, 0
      %s198 = scalar_select %p197, %s21, 0
      %s199 = sadd.s32 %s198, %s196
      %s200 = smul.addr %s199, 4
      %s201 = scalar_lea.vmem %s0, %s200
      %p202 = pneg %p56
      %p203 = pneg %p53
      %s204 = smul.u32 4, %s21
      %p205 = scmp.lt.s32.totalorder %s204, 3
      %s206 = scalar_select %p205, %s204, 3
      %p207 = scmp.lt.s32.totalorder %s20, 0
      %s208 = scalar_select %p207, %s20, 0
      %s209 = sadd.s32 %s208, %s206
      %s210 = smul.addr %s209, 4
      %s211 = scalar_lea.vmem %s1, %s210
      %p212 = pneg %p84
      %p213 = pneg %p81
      %p214 = scmp.lt.s32.totalorder %s20, 0
      %s215 = scalar_select %p214, %s20, 0
      %s216 = scalar_lea.vmem %s2, %s215
      %p217 = pneg %p110
      %p218 = pneg %p107
      %p219 = pneg %p138
      %p220 = pneg %p135
      %s221 = smul.u32 4, %s19
      %p222 = scmp.lt.s32.totalorder %s221, 7
      %s223 = scalar_select %p222, %s221, 7
      %p224 = scmp.lt.s32.totalorder %s20, 0
      %s225 = scalar_select %p224, %s20, 0
      %s226 = sadd.s32 %s225, %s223
      %s227 = smul.addr %s226, 4
      %s228 = scalar_lea.vmem %s3, %s227
      %s229 = smul.u32 4, %s19
      %p230 = scmp.lt.s32.totalorder %s229, 7
      %s231 = scalar_select %p230, %s229, 7
      %p232 = scmp.lt.s32.totalorder %s21, 0
      %s233 = scalar_select %p232, %s21, 0
      %s234 = sadd.s32 %s233, %s231
      %s235 = smul.addr %s234, 4
      %s236 = scalar_lea.vmem %s0, %s235
      %s237 = smul.u32 4, %s19
      %s238 = smul.u32 4, %s21
      %p239 = scmp.lt.s32.totalorder %s238, 3
      %s240 = scalar_select %p239, %s238, 3
      %p241 = scmp.lt.s32.totalorder %s20, 0
      %s242 = scalar_select %p241, %s20, 0
      %s243 = sadd.s32 %s242, %s240
      %s244 = smul.addr %s243, 4
      %s245 = scalar_lea.vmem %s1, %s244
      %s246 = smul.u32 4, %s21
      %p247 = scmp.lt.s32.totalorder %s20, 0
      %s248 = scalar_select %p247, %s20, 0
      %s249 = scalar_lea.vmem %s2, %s248
      %s250 = smul.u32 4, %s19
      %p251 = scmp.lt.s32.totalorder %s250, 7
      %s252 = scalar_select %p251, %s250, 7
      %p253 = scmp.lt.s32.totalorder %s20, 0
      %s254 = scalar_select %p253, %s20, 0
      %s255 = sadd.s32 %s254, %s252
      %s256 = smul.addr %s255, 4
      %s257 = scalar_lea.vmem %s3, %s256
      %s258 = smul.u32 4, %s19
      %p260 = scmp.eq.s32.totalorder %s21, 0
      // Predicated region
      $region33: #{causal_self_attention.3} parent=31 // pred_check
        %p261 = pneg %p260
      $region34: #{causal_self_attention.3} parent=31 // pred_check_branch
        %263 = sbr.rel (%p261) target = $region36
      $region35: #{causal_self_attention.3} parent=31 // pred_region
        %vm264 = vcmask 785408
        %265 = vst.msk [vmem:[#allocation2] sm:$0xff] %vm264, 0.0
        %266 = vst.msk [vmem:[#allocation2 + $0x8] sm:$0xff] %vm264, 0.0
        %267 = vst.msk [vmem:[#allocation2 + $0x10] sm:$0xff] %vm264, 0.0
        %268 = vst.msk [vmem:[#allocation2 + $0x18] sm:$0xff] %vm264, 0.0
      $region36: #{causal_self_attention.3} parent=31 // pred_fallthru
        _
      %v269 = vld [vmem:[#allocation2] sm:$0xff]
      %v270 = vld [vmem:[#allocation2 + $0x8] sm:$0xff]
      %v271 = vld [vmem:[#allocation2 + $0x10] sm:$0xff]
      %v272 = vld [vmem:[#allocation2 + $0x18] sm:$0xff]
      %v273 = vld [vmem:[%s236] sm:$0xf]
      %v274 = vld [vmem:[%s236 + $0x4] sm:$0xf]
      %v275 = vld [vmem:[%s236 + $0x8] sm:$0xf]
      %v276 = vld [vmem:[%s236 + $0xc] sm:$0xf]
      %v277 = vld [vmem:[%s245] sm:$0xf]
      %v278 = vld [vmem:[%s245 + $0x4] sm:$0xf]
      %v279 = vld [vmem:[%s245 + $0x8] sm:$0xf]
      %v280 = vld [vmem:[%s245 + $0xc] sm:$0xf]
      %v285 = vunpack.c.l.b16 %v273
      %v286 = vunpack.c.l.b16 %v274
      %v287 = vunpack.c.l.b16 %v275
      %v288 = vunpack.c.l.b16 %v276
      %v289 = vpack.c.b16 %v286, %v285
      %v290 = vpack.c.b16 %v288, %v287
      %v295 = vunpack.c.l.b16 %v277
      %v296 = vunpack.c.l.b16 %v278
      %v297 = vunpack.c.l.b16 %v279
      %v298 = vunpack.c.l.b16 %v280
      %v299 = vpack.c.b16 %v296, %v295
      %v300 = vpack.c.b16 %v298, %v297
      %vm303 = vcmask 261120
      %v305 = vsel %vm303, %v289, 0
      %v308 = vsel %vm303, %v290, 0
      %310 = vmatpush.bf16.msra.mxu0 0
      %311 = vmatpush.bf16.msra.mxu0 0
      %312 = vmatpush.bf16.msra.mxu0 0
      %313 = vmatpush.bf16.msra.mxu0 0
      %314 = vmatpush.bf16.msra.mxu0 0
      %315 = vmatpush.bf16.msra.mxu0 0
      %316 = vmatpush.bf16.msra.mxu0 %v300
      %317 = vmatpush.bf16.msra.mxu0 %v299
      %318 = vmatmul.bf16.gmra.mxu0 %v305
      %v319 = vpop.f32.mrf.mxu0
      %v320 = vadd.f32 0.0, %v319
      %v321 = vpop.f32.mrf.mxu0
      %v322 = vadd.f32 0.0, %v321
      %323 = vmatmul.bf16.gmra.mxu0 %v308
      %v324 = vpop.f32.mrf.mxu0
      %v325 = vadd.f32 0.0, %v324
      %v326 = vpop.f32.mrf.mxu0
      %v327 = vadd.f32 0.0, %v326
      %328 = vdwg.mxu0
      %v329 = vadd.f32 %v269, %v320
      %v330 = vadd.f32 %v270, %v322
      %v331 = vadd.f32 %v271, %v325
      %v332 = vadd.f32 %v272, %v327
      %vm333 = vcmask 785408
      %334 = vst.msk [vmem:[#allocation2] sm:$0xff] %vm333, %v329
      %335 = vst.msk [vmem:[#allocation2 + $0x8] sm:$0xff] %vm333, %v330
      %336 = vst.msk [vmem:[#allocation2 + $0x10] sm:$0xff] %vm333, %v331
      %337 = vst.msk [vmem:[#allocation2 + $0x18] sm:$0xff] %vm333, %v332
      // Predicated region
      $region37: #{causal_self_attention.3} parent=31 // pred_check
        %p338 = pneg %p260
      $region38: #{causal_self_attention.3} parent=31 // pred_check_branch
        %340 = sbr.rel (%p338) target = $region40
      $region39: #{causal_self_attention.3} parent=31 // pred_region
        %v341 = vld [vmem:[#allocation2] sm:$0xff]
        %v342 = vld [vmem:[#allocation2 + $0x8] sm:$0xff]
        %v343 = vld [vmem:[#allocation2 + $0x10] sm:$0xff]
        %v344 = vld [vmem:[#allocation2 + $0x18] sm:$0xff]
        %v345 = vld [vmem:[%s249] sm:$0x1]
        %v347 = vperm.slane %v345, 0
        %v349 = vadd.f32 %v341, %v347
        %v350 = vadd.f32 %v342, %v347
        %v351 = vadd.f32 %v343, %v347
        %v352 = vadd.f32 %v344, %v347
        %v353 = vpack.c.bf16 %v349, %v349
        %v354 = vpack.c.bf16 %v350, %v350
        %v355 = vpack.c.bf16 %v351, %v351
        %v356 = vpack.c.bf16 %v352, %v352
        %vm357 = vcmask 781312
        %358 = vst.msk [vmem:[%s257] sm:$0xf] %vm357, %v353
        %359 = vst.msk [vmem:[%s257 + $0x4] sm:$0xf] %vm357, %v354
        %360 = vst.msk [vmem:[%s257 + $0x8] sm:$0xf] %vm357, %v355
        %361 = vst.msk [vmem:[%s257 + $0xc] sm:$0xf] %vm357, %v356
      $region40: #{causal_self_attention.3} parent=31 // pred_fallthru
        _
      %s362 = smul.u32 4, %s19
      %p363 = scmp.lt.s32.totalorder %s362, 7
      %s364 = scalar_select %p363, %s362, 7
      %p365 = scmp.lt.s32.totalorder %s20, 0
      %s366 = scalar_select %p365, %s20, 0
      %s367 = sadd.s32 %s366, %s364
      %s368 = smul.addr %s367, 4
      %s369 = scalar_lea.vmem %s3, %s368
      // Predicated region
      $region41: #{causal_self_attention.3} parent=31 // pred_check
        %p370 = pneg %p135
      $region42: #{causal_self_attention.3} parent=31 // pred_check_branch
        %372 = sbr.rel (%p370) target = $region44
      $region43: #{causal_self_attention.3} parent=31 // pred_region
        %s373 = smul.u32 4, %s19
      $region44: #{causal_self_attention.3} parent=31 // pred_fallthru
        _
    $region32: #{causal_self_attention.3} parent=5 // pred_fallthru
      _
    %p374 = scmp.le.s32.totalorder 2, %s9
    // Predicated region
    $region45: #{causal_self_attention.3} parent=5 // pred_check
      %p375 = pneg %p374
    $region46: #{causal_self_attention.3} parent=5 // pred_check_branch
      %377 = sbr.rel (%p375) target = $region48
    $region47: #{causal_self_attention.3} parent=5 // pred_region
      %s378 = ssub.s32 %s9, 2
      // Predicated region
      $region49: #{causal_self_attention.3} parent=47 // pred_check
        %p379 = pneg %p141
      $region50: #{causal_self_attention.3} parent=47 // pred_check_branch
        %381 = sbr.rel (%p379) target = $region52
      $region51: #{causal_self_attention.3} parent=47 // pred_region
        %s382 = smul.u32 4, %s22
        %p383 = scmp.lt.s32.totalorder %s382, 7
        %s384 = scalar_select %p383, %s382, 7
        %p385 = scmp.lt.s32.totalorder %s23, 0
        %s386 = scalar_select %p385, %s23, 0
        %s387 = sadd.s32 %s386, %s384
        %s388 = smul.addr %s387, 4
        %s389 = scalar_lea.vmem %s3, %s388
      $region52: #{causal_self_attention.3} parent=47 // pred_fallthru
        _
    $region48: #{causal_self_attention.3} parent=5 // pred_fallthru
      _
  $region6: #{causal_self_attention.3} parent=0 // loop_footer
    %s13 = sadd.s32 1, %s9
  $region7: #{causal_self_attention.3} parent=0 // loop_footer_branch
    %8 = sbr.rel target = $region3
  $region8: #{causal_self_attention.3} parent=0 // loop_exit
    _

// kernel: causal_self_attention.5
$region0: #{causal_self_attention.5}
  #allocation0 [shape = 'u32[]', space=smem, size = 0x4, offset = 0x4, fixed_abs, tag = 'smem constant byte address 0x4 - core index']
  #allocation1 [shape = 'u32[72,128]{1,0:T(1,128)}', space=vmem, size = 0x9000, scoped, tag = 'internal scratch']
  #allocation2 [shape = 'f32[32,32]{1,0:T(8,128)}', space=vmem, size = 0x4000, scoped, tag = 'scratch operand']
  %s0 = inlined_call_operand.vmem [shape: bf16[64,32], index: 0, kind: input, shape index: {}]
  %s1 = inlined_call_operand.vmem [shape: bf16[32,32], index: 1, kind: input, shape index: {}]
  %s2 = inlined_call_operand.vmem [shape: f32[1,32], index: 2, kind: input, shape index: {}]
  %s3 = inlined_call_operand.hbm [shape: f32[64,32], index: 3, kind: output, shape index: {}]
  %s4 = sld [smem:[#allocation0]]
  $region53: #{causal_self_attention.5} parent=0
    _
  %s6 = ssub.s32 1, %s4
  %s7 = scalar_select 0, %s6, %s4
  $region1: #{causal_self_attention.5} parent=0
    #allocation3 [shape = 'u8[32768]{0}', space=vmem, size = 0x8000, scoped, tag = 'output window, operand 0']
    #allocation4 [shape = 's32[2]{0}', space=sflag, size = 0x8, scoped, tag = 'scoped memory for causal_self_attention.5']
    %8 = vsyncpa [#allocation4], 0
    %s9 = scalar_lea.sflag [#allocation4], 1
    %10 = vsyncpa %s9, 0
    loop: start=0, step=1, limit=4
    $region2: #{causal_self_attention.5} parent=1 // loop_pre_header
      _
    $region3: #{causal_self_attention.5} parent=1 // loop_header
      %s12 = sphi 0, %s16
      %p13 = scmp.ge.s32.totalorder %s12, 4
      %s19 = sphi 0, %s38
      %s20 = sphi 0, %s34
      %s21 = sphi 0, %s30
      %s22 = sphi 0, %s19
      %s23 = sphi 0, %s20
      %s24 = sphi 0, %s21
      %s25 = sphi 0, %s22
      %s26 = sphi 0, %s23
      %s27 = sphi 0, %s24
      %s43 = sphi 0, %s45
      %s46 = sphi 0, %s43
      %s47 = sphi 0, %s46
      %s63 = sphi 0, %s47
      %s71 = sphi 0, %s73
      %s74 = sphi 0, %s71
      %s75 = sphi 0, %s74
      %s91 = sphi 0, %s75
      %s97 = sphi 0, %s99
      %s100 = sphi 0, %s97
      %s101 = sphi 0, %s100
      %s117 = sphi 0, %s101
      %s125 = sphi 0, %s127
      %s128 = sphi 0, %s125
      %s129 = sphi 0, %s128
      %s145 = sphi 0, %s129
    $region4: #{causal_self_attention.5} parent=1 // loop_header_branch
      %15 = sbr.rel (%p13) target = $region8
    $region5: #{causal_self_attention.5} parent=1 // loop_body
      %s17 = ssub.s32 %s12, 1
      %s18 = ssub.s32 %s12, 2
      %s28 = sadd.s32 1, %s21
      %p29 = scmp.ge.s32.totalorder %s28, 1
      %s30 = scalar_select %p29, 0, %s28
      %s31 = sadd.s32 1, %s20
      %s32 = scalar_select %p29, %s31, %s20
      %p33 = scmp.ge.s32.totalorder %s32, 1
      %s34 = scalar_select %p33, 0, %s32
      %s35 = sadd.s32 1, %s19
      %s36 = scalar_select %p33, %s35, %s19
      %p37 = scmp.ge.s32.totalorder %s36, 2
      %s38 = scalar_select %p37, 0, %s36
      %s39 = ssub.s32 %s19, %s38
      %s40 = ssub.s32 %s21, %s30
      %s41 = sor.u32 %s39, %s40
      %p42 = scmp.eq.s32.totalorder %s41, 0
      %s44 = sadd.s32 %s43, 1
      %s45 = scalar_select %p42, %s43, %s44
      %p48 = pneg %p42
      %p49 = scmp.eq.s32.totalorder %s12, 1
      %p50 = por %p48, %p49
      %p51 = scmp.ne.s32.totalorder %s43, %s46
      %p52 = scmp.eq.s32.totalorder %s12, 0
      %p53 = por %p51, %p52
      %p54 = scmp.ne.s32.totalorder %s43, %s46
      %p55 = scmp.eq.s32.totalorder %s17, 1
      %p56 = por %p54, %p55
      %p57 = scmp.ne.s32.totalorder %s46, %s47
      %p58 = scmp.eq.s32.totalorder %s17, 0
      %p59 = por %p57, %p58
      %p60 = scmp.ne.s32.totalorder %s46, %s47
      %p61 = scmp.eq.s32.totalorder %s18, 1
      %p62 = por %p60, %p61
      %p64 = scmp.ne.s32.totalorder %s47, %s63
      %p65 = scmp.eq.s32.totalorder %s18, 0
      %p66 = por %p64, %p65
      %s67 = ssub.s32 %s21, %s30
      %s68 = ssub.s32 %s20, %s34
      %s69 = sor.u32 %s67, %s68
      %p70 = scmp.eq.s32.totalorder %s69, 0
      %s72 = sadd.s32 %s71, 1
      %s73 = scalar_select %p70, %s71, %s72
      %p76 = pneg %p70
      %p77 = scmp.eq.s32.totalorder %s12, 1
      %p78 = por %p76, %p77
      %p79 = scmp.ne.s32.totalorder %s71, %s74
      %p80 = scmp.eq.s32.totalorder %s12, 0
      %p81 = por %p79, %p80
      %p82 = scmp.ne.s32.totalorder %s71, %s74
      %p83 = scmp.eq.s32.totalorder %s17, 1
      %p84 = por %p82, %p83
      %p85 = scmp.ne.s32.totalorder %s74, %s75
      %p86 = scmp.eq.s32.totalorder %s17, 0
      %p87 = por %p85, %p86
      %p88 = scmp.ne.s32.totalorder %s74, %s75
      %p89 = scmp.eq.s32.totalorder %s18, 1
      %p90 = por %p88, %p89
      %p92 = scmp.ne.s32.totalorder %s75, %s91
      %p93 = scmp.eq.s32.totalorder %s18, 0
      %p94 = por %p92, %p93
      %s95 = ssub.s32 %s20, %s34
      %p96 = scmp.eq.s32.totalorder %s95, 0
      %s98 = sadd.s32 %s97, 1
      %s99 = scalar_select %p96, %s97, %s98
      %p102 = pneg %p96
      %p103 = scmp.eq.s32.totalorder %s12, 1
      %p104 = por %p102, %p103
      %p105 = scmp.ne.s32.totalorder %s97, %s100
      %p106 = scmp.eq.s32.totalorder %s12, 0
      %p107 = por %p105, %p106
      %p108 = scmp.ne.s32.totalorder %s97, %s100
      %p109 = scmp.eq.s32.totalorder %s17, 1
      %p110 = por %p108, %p109
      %p111 = scmp.ne.s32.totalorder %s100, %s101
      %p112 = scmp.eq.s32.totalorder %s17, 0
      %p113 = por %p111, %p112
      %p114 = scmp.ne.s32.totalorder %s100, %s101
      %p115 = scmp.eq.s32.totalorder %s18, 1
      %p116 = por %p114, %p115
      %p118 = scmp.ne.s32.totalorder %s101, %s117
      %p119 = scmp.eq.s32.totalorder %s18, 0
      %p120 = por %p118, %p119
      %s121 = ssub.s32 %s19, %s38
      %s122 = ssub.s32 %s20, %s34
      %s123 = sor.u32 %s121, %s122
      %p124 = scmp.eq.s32.totalorder %s123, 0
      %s126 = sadd.s32 %s125, 1
      %s127 = scalar_select %p124, %s125, %s126
      %p130 = pneg %p124
      %p131 = scmp.eq.s32.totalorder %s12, 1
      %p132 = por %p130, %p131
      %p133 = scmp.ne.s32.totalorder %s125, %s128
      %p134 = scmp.eq.s32.totalorder %s12, 0
      %p135 = por %p133, %p134
      %p136 = scmp.ne.s32.totalorder %s125, %s128
      %p137 = scmp.eq.s32.totalorder %s17, 1
      %p138 = por %p136, %p137
      %p139 = scmp.ne.s32.totalorder %s128, %s129
      %p140 = scmp.eq.s32.totalorder %s17, 0
      %p141 = por %p139, %p140
      %p142 = scmp.ne.s32.totalorder %s128, %s129
      %p143 = scmp.eq.s32.totalorder %s18, 1
      %p144 = por %p142, %p143
      %p146 = scmp.ne.s32.totalorder %s129, %s145
      %p147 = scmp.eq.s32.totalorder %s18, 0
      %p148 = por %p146, %p147
      %p149 = scmp.le.s32.totalorder 1, %s12
      %p150 = scmp.lt.s32.totalorder %s12, 3
      %p151 = pnand %p149, %p150
      %p152 = pneg %p151
      // Predicated region
      $region9: #{causal_self_attention.5} parent=5 // pred_check
        _
      $region10: #{causal_self_attention.5} parent=5 // pred_check_branch
        %154 = sbr.rel (%p151) target = $region12
      $region11: #{causal_self_attention.5} parent=5 // pred_region
        %s155 = ssub.s32 %s12, 1
        // Predicated region
        $region13: #{causal_self_attention.5} parent=11 // pred_check
          %p156 = pneg %p87
        $region14: #{causal_self_attention.5} parent=11 // pred_check_branch
          %158 = sbr.rel (%p156) target = $region16
        $region15: #{causal_self_attention.5} parent=11 // pred_region
          %s159 = smul.u32 4, %s24
          %p160 = scmp.lt.s32.totalorder %s159, 3
          %s161 = scalar_select %p160, %s159, 3
          %p162 = scmp.lt.s32.totalorder %s23, 0
          %s163 = scalar_select %p162, %s23, 0
          %s164 = sadd.s32 %s163, %s161
          %s165 = smul.addr %s164, 4
          %s166 = scalar_lea.vmem %s1, %s165
          %s167 = smul.u32 4, %s24
        $region16: #{causal_self_attention.5} parent=11 // pred_fallthru
          _
        // Predicated region
        $region17: #{causal_self_attention.5} parent=11 // pred_check
          %p168 = pneg %p113
        $region18: #{causal_self_attention.5} parent=11 // pred_check_branch
          %170 = sbr.rel (%p168) target = $region20
        $region19: #{causal_self_attention.5} parent=11 // pred_region
          %p171 = scmp.lt.s32.totalorder %s23, 0
          %s172 = scalar_select %p171, %s23, 0
          %s173 = scalar_lea.vmem %s2, %s172
        $region20: #{causal_self_attention.5} parent=11 // pred_fallthru
          _
      $region12: #{causal_self_attention.5} parent=5 // pred_fallthru
        _
      %p174 = scmp.lt.s32.totalorder %s12, 2
      // Predicated region
      $region21: #{causal_self_attention.5} parent=5 // pred_check
        %p175 = pneg %p174
      $region22: #{causal_self_attention.5} parent=5 // pred_check_branch
        %177 = sbr.rel (%p175) target = $region24
      $region23: #{causal_self_attention.5} parent=5 // pred_region
        // Predicated region
        $region25: #{causal_self_attention.5} parent=23 // pred_check
          %p178 = pneg %p53
        $region26: #{causal_self_attention.5} parent=23 // pred_check_branch
          %180 = sbr.rel (%p178) target = $region28
        $region27: #{causal_self_attention.5} parent=23 // pred_region
          %s181 = smul.u32 4, %s19
          %p182 = scmp.lt.s32.totalorder %s181, 7
          %s183 = scalar_select %p182, %s181, 7
          %p184 = scmp.lt.s32.totalorder %s21, 0
          %s185 = scalar_select %p184, %s21, 0
          %s186 = sadd.s32 %s185, %s183
          %s187 = smul.addr %s186, 4
          %s188 = scalar_lea.vmem %s0, %s187
          %s189 = smul.u32 4, %s19
        $region28: #{causal_self_attention.5} parent=23 // pred_fallthru
          _
      $region24: #{causal_self_attention.5} parent=5 // pred_fallthru
        _
      %p190 = scmp.le.s32.totalorder 1, %s12
      %p191 = scmp.lt.s32.totalorder %s12, 3
      %p192 = pnand %p190, %p191
      %p193 = pneg %p192
      // Predicated region
      $region29: #{causal_self_attention.5} parent=5 // pred_check
        _
      $region30: #{causal_self_attention.5} parent=5 // pred_check_branch
        %195 = sbr.rel (%p192) target = $region32
      $region31: #{causal_self_attention.5} parent=5 // pred_region
        %s196 = ssub.s32 %s12, 1
        %s197 = smul.u32 4, %s22
        %p198 = scmp.lt.s32.totalorder %s197, 7
        %s199 = scalar_select %p198, %s197, 7
        %p200 = scmp.lt.s32.totalorder %s24, 0
        %s201 = scalar_select %p200, %s24, 0
        %s202 = sadd.s32 %s201, %s199
        %s203 = smul.addr %s202, 4
        %s204 = scalar_lea.vmem %s0, %s203
        %p205 = pneg %p59
        %p206 = pneg %p56
        %s207 = smul.u32 4, %s24
        %p208 = scmp.lt.s32.totalorder %s207, 3
        %s209 = scalar_select %p208, %s207, 3
        %p210 = scmp.lt.s32.totalorder %s23, 0
        %s211 = scalar_select %p210, %s23, 0
        %s212 = sadd.s32 %s211, %s209
        %s213 = smul.addr %s212, 4
        %s214 = scalar_lea.vmem %s1, %s213
        %p215 = pneg %p87
        %p216 = pneg %p84
        %p217 = scmp.lt.s32.totalorder %s23, 0
        %s218 = scalar_select %p217, %s23, 0
        %s219 = scalar_lea.vmem %s2, %s218
        %p220 = pneg %p113
        %p221 = pneg %p110
        %p222 = pneg %p141
        %p223 = pneg %p138
        %s224 = sand.u32 %s128, 1
        %s225 = scalar_lea.sflag [#allocation4], %s224
        %s226 = sand.u32 %s128, 1
        %s227 = smul.addr %s226, 32
        %s228 = scalar_lea.vmem [#allocation3], %s227
        %s229 = smul.u32 4, %s22
        %p230 = scmp.lt.s32.totalorder %s229, 7
        %s231 = scalar_select %p230, %s229, 7
        %p232 = scmp.lt.s32.totalorder %s24, 0
        %s233 = scalar_select %p232, %s24, 0
        %s234 = sadd.s32 %s233, %s231
        %s235 = smul.addr %s234, 4
        %s236 = scalar_lea.vmem %s0, %s235
        %s237 = smul.u32 4, %s22
        %s238 = smul.u32 4, %s24
        %p239 = scmp.lt.s32.totalorder %s238, 3
        %s240 = scalar_select %p239, %s238, 3
        %p241 = scmp.lt.s32.totalorder %s23, 0
        %s242 = scalar_select %p241, %s23, 0
        %s243 = sadd.s32 %s242, %s240
        %s244 = smul.addr %s243, 4
        %s245 = scalar_lea.vmem %s1, %s244
        %s246 = smul.u32 4, %s24
        %p247 = scmp.lt.s32.totalorder %s23, 0
        %s248 = scalar_select %p247, %s23, 0
        %s249 = scalar_lea.vmem %s2, %s248
        %s250 = smul.u32 4, %s22
        %p252 = scmp.eq.s32.totalorder %s24, 0
        // Predicated region
        $region33: #{causal_self_attention.5} parent=31 // pred_check
          %p253 = pneg %p252
        $region34: #{causal_self_attention.5} parent=31 // pred_check_branch
          %255 = sbr.rel (%p253) target = $region36
        $region35: #{causal_self_attention.5} parent=31 // pred_region
          %vm256 = vcmask 261120
          %257 = vst.msk [vmem:[#allocation2] sm:$0xff] %vm256, 0.0
          %258 = vst.msk [vmem:[#allocation2 + $0x8] sm:$0xff] %vm256, 0.0
          %259 = vst.msk [vmem:[#allocation2 + $0x10] sm:$0xff] %vm256, 0.0
          %260 = vst.msk [vmem:[#allocation2 + $0x18] sm:$0xff] %vm256, 0.0
        $region36: #{causal_self_attention.5} parent=31 // pred_fallthru
          _
        %v261 = vld [vmem:[#allocation2] sm:$0xff]
        %v262 = vld [vmem:[#allocation2 + $0x8] sm:$0xff]
        %v263 = vld [vmem:[#allocation2 + $0x10] sm:$0xff]
        %v264 = vld [vmem:[#allocation2 + $0x18] sm:$0xff]
        %v265 = vld [vmem:[%s236] sm:$0xf]
        %v266 = vld [vmem:[%s236 + $0x4] sm:$0xf]
        %v267 = vld [vmem:[%s236 + $0x8] sm:$0xf]
        %v268 = vld [vmem:[%s236 + $0xc] sm:$0xf]
        %v269 = vld [vmem:[%s245] sm:$0xf]
        %v270 = vld [vmem:[%s245 + $0x4] sm:$0xf]
        %v271 = vld [vmem:[%s245 + $0x8] sm:$0xf]
        %v272 = vld [vmem:[%s245 + $0xc] sm:$0xf]
        %v277 = vunpack.c.l.b16 %v265
        %v278 = vunpack.c.l.b16 %v266
        %v279 = vunpack.c.l.b16 %v267
        %v280 = vunpack.c.l.b16 %v268
        %v281 = vpack.c.b16 %v278, %v277
        %v282 = vpack.c.b16 %v280, %v279
        %v287 = vunpack.c.l.b16 %v269
        %v288 = vunpack.c.l.b16 %v270
        %v289 = vunpack.c.l.b16 %v271
        %v290 = vunpack.c.l.b16 %v272
        %v291 = vpack.c.b16 %v288, %v287
        %v292 = vpack.c.b16 %v290, %v289
        %vm295 = vcmask 261120
        %v297 = vsel %vm295, %v281, 0
        %v300 = vsel %vm295, %v282, 0
        %302 = vmatpush.bf16.msra.mxu0 0
        %303 = vmatpush.bf16.msra.mxu0 0
        %304 = vmatpush.bf16.msra.mxu0 0
        %305 = vmatpush.bf16.msra.mxu0 0
        %306 = vmatpush.bf16.msra.mxu0 0
        %307 = vmatpush.bf16.msra.mxu0 0
        %308 = vmatpush.bf16.msra.mxu0 %v292
        %309 = vmatpush.bf16.msra.mxu0 %v291
        %310 = vmatmul.bf16.gmra.mxu0 %v297
        %v311 = vpop.f32.mrf.mxu0
        %v312 = vadd.f32 0.0, %v311
        %v313 = vpop.f32.mrf.mxu0
        %v314 = vadd.f32 0.0, %v313
        %315 = vmatmul.bf16.gmra.mxu0 %v300
        %v316 = vpop.f32.mrf.mxu0
        %v317 = vadd.f32 0.0, %v316
        %v318 = vpop.f32.mrf.mxu0
        %v319 = vadd.f32 0.0, %v318
        %320 = vdwg.mxu0
        %v321 = vadd.f32 %v261, %v312
        %v322 = vadd.f32 %v262, %v314
        %v323 = vadd.f32 %v263, %v317
        %v324 = vadd.f32 %v264, %v319
        %325 = vst.msk [vmem:[#allocation2] sm:$0xff] %vm295, %v321
        %326 = vst.msk [vmem:[#allocation2 + $0x8] sm:$0xff] %vm295, %v322
        %327 = vst.msk [vmem:[#allocation2 + $0x10] sm:$0xff] %vm295, %v323
        %328 = vst.msk [vmem:[#allocation2 + $0x18] sm:$0xff] %vm295, %v324
        // Predicated region
        $region37: #{causal_self_attention.5} parent=31 // pred_check
          %p329 = pneg %p252
        $region38: #{causal_self_attention.5} parent=31 // pred_check_branch
          %331 = sbr.rel (%p329) target = $region40
        $region39: #{causal_self_attention.5} parent=31 // pred_region
          %v332 = vld [vmem:[#allocation2] sm:$0xff]
          %v333 = vld [vmem:[#allocation2 + $0x8] sm:$0xff]
          %v334 = vld [vmem:[#allocation2 + $0x10] sm:$0xff]
          %v335 = vld [vmem:[#allocation2 + $0x18] sm:$0xff]
          %v336 = vld [vmem:[%s249] sm:$0x1]
          %v338 = vperm.slane %v336, 0
          %v340 = vadd.f32 %v332, %v338
          %v341 = vadd.f32 %v333, %v338
          %v342 = vadd.f32 %v334, %v338
          %v343 = vadd.f32 %v335, %v338
          %344 = vst.msk [vmem:[%s228] sm:$0xff] %vm295, %v340
          %345 = vst.msk [vmem:[%s228 + $0x8] sm:$0xff] %vm295, %v341
          %346 = vst.msk [vmem:[%s228 + $0x10] sm:$0xff] %vm295, %v342
          %347 = vst.msk [vmem:[%s228 + $0x18] sm:$0xff] %vm295, %v343
        $region40: #{causal_self_attention.5} parent=31 // pred_fallthru
          _
        %s348 = sand.u32 %s128, 1
        %s349 = scalar_lea.sflag [#allocation4], %s348
        %s350 = sand.u32 %s128, 1
        %s351 = smul.addr %s350, 32
        %s352 = scalar_lea.vmem [#allocation3], %s351
        // Predicated region
        $region41: #{causal_self_attention.5} parent=31 // pred_check
          %p353 = pneg %p138
        $region42: #{causal_self_attention.5} parent=31 // pred_check_branch
          %355 = sbr.rel (%p353) target = $region44
        $region43: #{causal_self_attention.5} parent=31 // pred_region
          %s356 = smul.u32 4, %s22
          %358 = vsyncadd %s349, 0
          %s359 = sadd.s32 %s23, %s356
          %s360 = smul.addr %s359, 8
          %s361 = scalar_lea.hbm %s3, %s360
          %s362 = sshll.u32 %s352, 4
          %s363 = int_to_ptr.vmem [resolvable:$true] %s362
          %s364 = sshll.u32 %s361, 4
          %s365 = int_to_ptr.hbm [resolvable:$true] %s364
          %370 = dma.vmem_to_hbm [thread:$0]  %s363, 512, %s365, %s349, 128, 128, 8
        $region44: #{causal_self_attention.5} parent=31 // pred_fallthru
          _
      $region32: #{causal_self_attention.5} parent=5 // pred_fallthru
        _
      %p371 = scmp.le.s32.totalorder 2, %s12
      // Predicated region
      $region45: #{causal_self_attention.5} parent=5 // pred_check
        %p372 = pneg %p371
      $region46: #{causal_self_attention.5} parent=5 // pred_check_branch
        %374 = sbr.rel (%p372) target = $region48
      $region47: #{causal_self_attention.5} parent=5 // pred_region
        %s375 = ssub.s32 %s12, 2
        // Predicated region
        $region49: #{causal_self_attention.5} parent=47 // pred_check
          %p376 = pneg %p144
        $region50: #{causal_self_attention.5} parent=47 // pred_check_branch
          %378 = sbr.rel (%p376) target = $region52
        $region51: #{causal_self_attention.5} parent=47 // pred_region
          %s379 = sand.u32 %s129, 1
          %s380 = scalar_lea.sflag [#allocation4], %s379
          %s381 = sand.u32 %s129, 1
          %s382 = smul.addr %s381, 32
          %s383 = scalar_lea.vmem [#allocation3], %s382
          %385 = dma.done %s380, 512
        $region52: #{causal_self_attention.5} parent=47 // pred_fallthru
          _
      $region48: #{causal_self_attention.5} parent=5 // pred_fallthru
        _
    $region6: #{causal_self_attention.5} parent=1 // loop_footer
      %s16 = sadd.s32 1, %s12
    $region7: #{causal_self_attention.5} parent=1 // loop_footer_branch
      %11 = sbr.rel target = $region3
    $region8: #{causal_self_attention.5} parent=1 // loop_exit
      _
    %386 = vsyncpa [#allocation4], 1
    %s387 = scalar_lea.sflag [#allocation4], 1
    %388 = vsyncpa %s387, 1

// kernel: causal_self_attention.4
$region0: #{causal_self_attention.4}
  #allocation0 [shape = 'u32[]', space=smem, size = 0x4, offset = 0x4, fixed_abs, tag = 'smem constant byte address 0x4 - core index']
  #allocation1 [shape = 'u32[72,128]{1,0:T(1,128)}', space=vmem, size = 0x9000, scoped, tag = 'internal scratch']
  #allocation2 [shape = 'f32[4,16,1]{2,1,0:T(8,128)}', space=vmem, size = 0x8000, scoped, tag = 'scratch operand']
  #allocation3 [shape = 'f32[4,16,1]{2,1,0:T(8,128)}', space=vmem, size = 0x8000, scoped, tag = 'scratch operand']
  #allocation4 [shape = 'f32[4,16,8]{2,1,0:T(8,128)}', space=vmem, size = 0x8000, scoped, tag = 'scratch operand']
  #allocation5 [shape = 's32[1]{0}', space=sflag, size = 0x4, scoped, tag = 'scoped memory for causal_self_attention.4']
  #allocation6 [shape = 'u8[512]{0}', space=smem, size = 0x200, scoped, tag = 'prefetched SMEM operand 0']
  #allocation7 [shape = 'u8[512]{0}', space=smem, size = 0x200, scoped, tag = 'prefetched SMEM operand 1']
  %s0 = inlined_call_operand.vmem [shape: s32[3], index: 0, kind: input, shape index: {}]
  %s1 = inlined_call_operand.vmem [shape: s32[3], index: 1, kind: input, shape index: {}]
  %s2 = inlined_call_operand.vmem [shape: bf16[2,4,32,8], index: 2, kind: input, shape index: {}]
  %s3 = inlined_call_operand.vmem [shape: bf16[2,4,32,8], index: 3, kind: input, shape index: {}]
  %s4 = inlined_call_operand.vmem [shape: bf16[2,4,32,8], index: 4, kind: input, shape index: {}]
  %s5 = inlined_call_operand.vmem [shape: bf16[2,32,32], index: 5, kind: output, shape index: {}]
  %s6 = sld [smem:[#allocation0]]
  $region180: #{causal_self_attention.4} parent=0
    _
  %s8 = ssub.s32 1, %s6
  %s9 = scalar_select 0, %s8, %s6
  %s11 = sshll.u32 %s0, 4
  %s12 = int_to_ptr.vmem [resolvable:$true] %s11
  %14 = dma.vmem_to_smem %s12, 16, [#allocation6], [#allocation5]
  %s16 = sshll.u32 %s1, 4
  %s17 = int_to_ptr.vmem [resolvable:$true] %s16
  %19 = dma.vmem_to_smem %s17, 16, [#allocation7], [#allocation5]
  %21 = dma.done [#allocation5], 32
  %22 = sfence
  $region1: #{causal_self_attention.4} parent=0
    #allocation8 [shape = 'u8[32768]{0}', space=vmem, size = 0x8000, scoped, tag = 'input window, operand 2']
    #allocation9 [shape = 'u8[32768]{0}', space=vmem, size = 0x8000, scoped, tag = 'input window, operand 3']
    #allocation10 [shape = 'u8[32768]{0}', space=vmem, size = 0x8000, scoped, tag = 'input window, operand 4']
    loop: start=0, step=1, limit=8
    $region2: #{causal_self_attention.4} parent=1 // loop_pre_header
      _
    $region3: #{causal_self_attention.4} parent=1 // loop_header
      %s24 = sphi 0, %s28
      %p25 = scmp.ge.s32.totalorder %s24, 8
      %s31 = sphi 0, %s43
      %s32 = sphi 0, %s39
      %s33 = sphi 0, %s31
      %s34 = sphi 0, %s32
      %s35 = sphi 0, %s33
      %s36 = sphi 0, %s34
      %s50 = sphi 0, %s52
      %s53 = sphi 0, %s50
      %s54 = sphi 0, %s53
      %s70 = sphi 0, %s54
      %s80 = sphi 0, %s82
      %s83 = sphi 0, %s80
      %s84 = sphi 0, %s83
      %s100 = sphi 0, %s84
      %s110 = sphi 0, %s112
      %s113 = sphi 0, %s110
      %s114 = sphi 0, %s113
      %s130 = sphi 0, %s114
      %s140 = sphi 0, %s142
      %s143 = sphi 0, %s140
      %s144 = sphi 0, %s143
      %s160 = sphi 0, %s144
    $region4: #{causal_self_attention.4} parent=1 // loop_header_branch
      %27 = sbr.rel (%p25) target = $region8
    $region5: #{causal_self_attention.4} parent=1 // loop_body
      %s29 = ssub.s32 %s24, 1
      %s30 = ssub.s32 %s24, 2
      %s37 = sadd.s32 1, %s32
      %p38 = scmp.ge.s32.totalorder %s37, 3
      %s39 = scalar_select %p38, 0, %s37
      %s40 = sadd.s32 1, %s31
      %s41 = scalar_select %p38, %s40, %s31
      %p42 = scmp.ge.s32.totalorder %s41, 2
      %s43 = scalar_select %p42, 0, %s41
      %s44 = sld [smem:[#allocation6 + %s32]]
      %s45 = sld [smem:[#allocation6 + %s39]]
      %s46 = ssub.s32 %s31, %s43
      %s47 = ssub.s32 %s44, %s45
      %s48 = sor.u32 %s46, %s47
      %p49 = scmp.eq.s32.totalorder %s48, 0
      %s51 = sadd.s32 %s50, 1
      %s52 = scalar_select %p49, %s50, %s51
      %p55 = pneg %p49
      %p56 = scmp.eq.s32.totalorder %s24, 5
      %p57 = por %p55, %p56
      %p58 = scmp.ne.s32.totalorder %s50, %s53
      %p59 = scmp.eq.s32.totalorder %s24, 0
      %p60 = por %p58, %p59
      %p61 = scmp.ne.s32.totalorder %s50, %s53
      %p62 = scmp.eq.s32.totalorder %s29, 5
      %p63 = por %p61, %p62
      %p64 = scmp.ne.s32.totalorder %s53, %s54
      %p65 = scmp.eq.s32.totalorder %s29, 0
      %p66 = por %p64, %p65
      %p67 = scmp.ne.s32.totalorder %s53, %s54
      %p68 = scmp.eq.s32.totalorder %s30, 5
      %p69 = por %p67, %p68
      %p71 = scmp.ne.s32.totalorder %s54, %s70
      %p72 = scmp.eq.s32.totalorder %s30, 0
      %p73 = por %p71, %p72
      %s74 = sld [smem:[#allocation7 + %s32]]
      %s75 = sld [smem:[#allocation7 + %s39]]
      %s76 = ssub.s32 %s31, %s43
      %s77 = ssub.s32 %s74, %s75
      %s78 = sor.u32 %s76, %s77
      %p79 = scmp.eq.s32.totalorder %s78, 0
      %s81 = sadd.s32 %s80, 1
      %s82 = scalar_select %p79, %s80, %s81
      %p85 = pneg %p79
      %p86 = scmp.eq.s32.totalorder %s24, 5
      %p87 = por %p85, %p86
      %p88 = scmp.ne.s32.totalorder %s80, %s83
      %p89 = scmp.eq.s32.totalorder %s24, 0
      %p90 = por %p88, %p89
      %p91 = scmp.ne.s32.totalorder %s80, %s83
      %p92 = scmp.eq.s32.totalorder %s29, 5
      %p93 = por %p91, %p92
      %p94 = scmp.ne.s32.totalorder %s83, %s84
      %p95 = scmp.eq.s32.totalorder %s29, 0
      %p96 = por %p94, %p95
      %p97 = scmp.ne.s32.totalorder %s83, %s84
      %p98 = scmp.eq.s32.totalorder %s30, 5
      %p99 = por %p97, %p98
      %p101 = scmp.ne.s32.totalorder %s84, %s100
      %p102 = scmp.eq.s32.totalorder %s30, 0
      %p103 = por %p101, %p102
      %s104 = sld [smem:[#allocation7 + %s32]]
      %s105 = sld [smem:[#allocation7 + %s39]]
      %s106 = ssub.s32 %s31, %s43
      %s107 = ssub.s32 %s104, %s105
      %s108 = sor.u32 %s106, %s107
      %p109 = scmp.eq.s32.totalorder %s108, 0
      %s111 = sadd.s32 %s110, 1
      %s112 = scalar_select %p109, %s110, %s111
      %p115 = pneg %p109
      %p116 = scmp.eq.s32.totalorder %s24, 5
      %p117 = por %p115, %p116
      %p118 = scmp.ne.s32.totalorder %s110, %s113
      %p119 = scmp.eq.s32.totalorder %s24, 0
      %p120 = por %p118, %p119
      %p121 = scmp.ne.s32.totalorder %s110, %s113
      %p122 = scmp.eq.s32.totalorder %s29, 5
      %p123 = por %p121, %p122
      %p124 = scmp.ne.s32.totalorder %s113, %s114
      %p125 = scmp.eq.s32.totalorder %s29, 0
      %p126 = por %p124, %p125
      %p127 = scmp.ne.s32.totalorder %s113, %s114
      %p128 = scmp.eq.s32.totalorder %s30, 5
      %p129 = por %p127, %p128
      %p131 = scmp.ne.s32.totalorder %s114, %s130
      %p132 = scmp.eq.s32.totalorder %s30, 0
      %p133 = por %p131, %p132
      %s134 = sld [smem:[#allocation6 + %s32]]
      %s135 = sld [smem:[#allocation6 + %s39]]
      %s136 = ssub.s32 %s31, %s43
      %s137 = ssub.s32 %s134, %s135
      %s138 = sor.u32 %s136, %s137
      %p139 = scmp.eq.s32.totalorder %s138, 0
      %s141 = sadd.s32 %s140, 1
      %s142 = scalar_select %p139, %s140, %s141
      %p145 = pneg %p139
      %p146 = scmp.eq.s32.totalorder %s24, 5
      %p147 = por %p145, %p146
      %p148 = scmp.ne.s32.totalorder %s140, %s143
      %p149 = scmp.eq.s32.totalorder %s24, 0
      %p150 = por %p148, %p149
      %p151 = scmp.ne.s32.totalorder %s140, %s143
      %p152 = scmp.eq.s32.totalorder %s29, 5
      %p153 = por %p151, %p152
      %p154 = scmp.ne.s32.totalorder %s143, %s144
      %p155 = scmp.eq.s32.totalorder %s29, 0
      %p156 = por %p154, %p155
      %p157 = scmp.ne.s32.totalorder %s143, %s144
      %p158 = scmp.eq.s32.totalorder %s30, 5
      %p159 = por %p157, %p158
      %p161 = scmp.ne.s32.totalorder %s144, %s160
      %p162 = scmp.eq.s32.totalorder %s30, 0
      %p163 = por %p161, %p162
      %p164 = scmp.le.s32.totalorder 1, %s24
      %p165 = scmp.lt.s32.totalorder %s24, 7
      %p166 = pnand %p164, %p165
      %p167 = pneg %p166
      // Predicated region
      $region9: #{causal_self_attention.4} parent=5 // pred_check
        _
      $region10: #{causal_self_attention.4} parent=5 // pred_check_branch
        %169 = sbr.rel (%p166) target = $region12
      $region11: #{causal_self_attention.4} parent=5 // pred_region
        %s170 = ssub.s32 %s24, 1
      $region12: #{causal_self_attention.4} parent=5 // pred_fallthru
        _
      %p171 = scmp.lt.s32.totalorder %s24, 6
      // Predicated region
      $region13: #{causal_self_attention.4} parent=5 // pred_check
        %p172 = pneg %p171
      $region14: #{causal_self_attention.4} parent=5 // pred_check_branch
        %174 = sbr.rel (%p172) target = $region16
      $region15: #{causal_self_attention.4} parent=5 // pred_region
        // Predicated region
        $region17: #{causal_self_attention.4} parent=15 // pred_check
          %p175 = pneg %p60
        $region18: #{causal_self_attention.4} parent=15 // pred_check_branch
          %177 = sbr.rel (%p175) target = $region20
        $region19: #{causal_self_attention.4} parent=15 // pred_region
          %s178 = sand.u32 %s50, 1
          %s179 = sand.u32 %s50, 1
          %s180 = smul.addr %s179, 32
          %s181 = scalar_lea.vmem [#allocation8], %s180
          %s182 = sld [smem:[#allocation6 + %s32]]
          %s183 = smul.u32 2, %s182
          %s184 = smul.addr %s31, 16
          %s185 = sadd.s32 %s183, %s184
          %s186 = smul.addr %s185, 4
          %s187 = scalar_lea.vmem %s2, %s186
          // Predicated region
          $region21: #{causal_self_attention.4} parent=19 // pred_check
            _
          $region22: #{causal_self_attention.4} parent=19 // pred_check_branch
            %189 = sbr.rel (0) target = $region24
          $region23: #{causal_self_attention.4} parent=19 // pred_region
            // Predicated region
            $region25: #{causal_self_attention.4} parent=23 // pred_check
              _
            $region26: #{causal_self_attention.4} parent=23 // pred_check_branch
              %191 = sbr.rel target = $region28
            $region27: #{causal_self_attention.4} parent=23 // pred_region
              // Predicated region
              $region40: #{causal_self_attention.4} parent=27 // pred_check
                _
              $region41: #{causal_self_attention.4} parent=27 // pred_check_branch
                %221 = sbr.rel (0) target = $region43
              $region42: #{causal_self_attention.4} parent=27 // pred_region
                loop: start=0, step=1, limit=1
                $region44: #{causal_self_attention.4} parent=42 // loop_pre_header
                  _
                $region45: #{causal_self_attention.4} parent=42 // loop_header
                  %s223 = sphi 0, %s227
                  %p224 = scmp.ge.s32.totalorder %s223, 1
                  %s228 = sphi %s187, %s187
                  %s229 = sphi %s181, %s181
                $region46: #{causal_self_attention.4} parent=42 // loop_header_branch
                  %226 = sbr.rel (%p224) target = $region50
                $region47: #{causal_self_attention.4} parent=42 // loop_body
                  _
                $region48: #{causal_self_attention.4} parent=42 // loop_footer
                  %s227 = sadd.s32 1, %s223
                $region49: #{causal_self_attention.4} parent=42 // loop_footer_branch
                  %222 = sbr.rel target = $region45
                $region50: #{causal_self_attention.4} parent=42 // loop_exit
                  _
                %s231 = ssub.s32 16, 1
                loop: start=0, step=1, limit=1
                $region51: #{causal_self_attention.4} parent=42 // loop_pre_header
                  _
                $region52: #{causal_self_attention.4} parent=42 // loop_header
                  %s233 = sphi 0, %s237
                  %p234 = scmp.ge.s32.totalorder %s233, 1
                  %s238 = sphi %s187, %s187
                  %s239 = sphi %s181, %s181
                $region53: #{causal_self_attention.4} parent=42 // loop_header_branch
                  %236 = sbr.rel (%p234) target = $region57
                $region54: #{causal_self_attention.4} parent=42 // loop_body
                  %v240 = vld [vmem:[%s238] sm:%s231]
                  %241 = vst [vmem:[%s239] sm:%s231] %v240
                  %v242 = vld [vmem:[%s238 + $0x4] sm:%s231]
                  %243 = vst [vmem:[%s239 + $0x4] sm:%s231] %v242
                  %v244 = vld [vmem:[%s238 + $0x10] sm:%s231]
                  %245 = vst [vmem:[%s239 + $0x8] sm:%s231] %v244
                  %v246 = vld [vmem:[%s238 + $0x14] sm:%s231]
                  %247 = vst [vmem:[%s239 + $0xc] sm:%s231] %v246
                  %v248 = vld [vmem:[%s238 + $0x20] sm:%s231]
                  %249 = vst [vmem:[%s239 + $0x10] sm:%s231] %v248
                  %v250 = vld [vmem:[%s238 + $0x24] sm:%s231]
                  %251 = vst [vmem:[%s239 + $0x14] sm:%s231] %v250
                  %v252 = vld [vmem:[%s238 + $0x30] sm:%s231]
                  %253 = vst [vmem:[%s239 + $0x18] sm:%s231] %v252
                  %v254 = vld [vmem:[%s238 + $0x34] sm:%s231]
                  %255 = vst [vmem:[%s239 + $0x1c] sm:%s231] %v254
                $region55: #{causal_self_attention.4} parent=42 // loop_footer
                  %s237 = sadd.s32 1, %s233
                $region56: #{causal_self_attention.4} parent=42 // loop_footer_branch
                  %232 = sbr.rel target = $region52
                $region57: #{causal_self_attention.4} parent=42 // loop_exit
                  _
              $region43: #{causal_self_attention.4} parent=27 // pred_fallthru
                _
            $region28: #{causal_self_attention.4} parent=23 // pred_fallthru
              _
            // Predicated region
            $region29: #{causal_self_attention.4} parent=23 // pred_check
              _
            $region30: #{causal_self_attention.4} parent=23 // pred_check_branch
              %193 = sbr.rel (0) target = $region32
            $region31: #{causal_self_attention.4} parent=23 // pred_region
              %s195 = ssub.s32 16, 1
              loop: start=0, step=1, limit=1
              $region33: #{causal_self_attention.4} parent=31 // loop_pre_header
                _
              $region34: #{causal_self_attention.4} parent=31 // loop_header
                %s197 = sphi 0, %s201
                %p198 = scmp.ge.s32.totalorder %s197, 1
                %s202 = sphi %s187, %s187
                %s203 = sphi %s181, %s181
              $region35: #{causal_self_attention.4} parent=31 // loop_header_branch
                %200 = sbr.rel (%p198) target = $region39
              $region36: #{causal_self_attention.4} parent=31 // loop_body
                %v204 = vld [vmem:[%s202] sm:%s195]
                %205 = vst [vmem:[%s203] sm:%s195] %v204
                %v206 = vld [vmem:[%s202 + $0x4] sm:%s195]
                %207 = vst [vmem:[%s203 + $0x4] sm:%s195] %v206
                %v208 = vld [vmem:[%s202 + $0x10] sm:%s195]
                %209 = vst [vmem:[%s203 + $0x8] sm:%s195] %v208
                %v210 = vld [vmem:[%s202 + $0x14] sm:%s195]
                %211 = vst [vmem:[%s203 + $0xc] sm:%s195] %v210
                %v212 = vld [vmem:[%s202 + $0x20] sm:%s195]
                %213 = vst [vmem:[%s203 + $0x10] sm:%s195] %v212
                %v214 = vld [vmem:[%s202 + $0x24] sm:%s195]
                %215 = vst [vmem:[%s203 + $0x14] sm:%s195] %v214
                %v216 = vld [vmem:[%s202 + $0x30] sm:%s195]
                %217 = vst [vmem:[%s203 + $0x18] sm:%s195] %v216
                %v218 = vld [vmem:[%s202 + $0x34] sm:%s195]
                %219 = vst [vmem:[%s203 + $0x1c] sm:%s195] %v218
              $region37: #{causal_self_attention.4} parent=31 // loop_footer
                %s201 = sadd.s32 1, %s197
              $region38: #{causal_self_attention.4} parent=31 // loop_footer_branch
                %196 = sbr.rel target = $region34
              $region39: #{causal_self_attention.4} parent=31 // loop_exit
                _
            $region32: #{causal_self_attention.4} parent=23 // pred_fallthru
              _
          $region24: #{causal_self_attention.4} parent=19 // pred_fallthru
            _
          %256 = vnop
        $region20: #{causal_self_attention.4} parent=15 // pred_fallthru
          _
        // Predicated region
        $region58: #{causal_self_attention.4} parent=15 // pred_check
          %p257 = pneg %p90
        $region59: #{causal_self_attention.4} parent=15 // pred_check_branch
          %259 = sbr.rel (%p257) target = $region61
        $region60: #{causal_self_attention.4} parent=15 // pred_region
          %s260 = sand.u32 %s80, 1
          %s261 = sand.u32 %s80, 1
          %s262 = smul.addr %s261, 32
          %s263 = scalar_lea.vmem [#allocation9], %s262
          %s264 = sld [smem:[#allocation7 + %s32]]
          %s265 = smul.u32 2, %s264
          %s266 = smul.addr %s31, 16
          %s267 = sadd.s32 %s265, %s266
          %s268 = smul.addr %s267, 4
          %s269 = scalar_lea.vmem %s3, %s268
          // Predicated region
          $region62: #{causal_self_attention.4} parent=60 // pred_check
            _
          $region63: #{causal_self_attention.4} parent=60 // pred_check_branch
            %271 = sbr.rel (0) target = $region65
          $region64: #{causal_self_attention.4} parent=60 // pred_region
            // Predicated region
            $region66: #{causal_self_attention.4} parent=64 // pred_check
              _
            $region67: #{causal_self_attention.4} parent=64 // pred_check_branch
              %273 = sbr.rel target = $region69
            $region68: #{causal_self_attention.4} parent=64 // pred_region
              // Predicated region
              $region81: #{causal_self_attention.4} parent=68 // pred_check
                _
              $region82: #{causal_self_attention.4} parent=68 // pred_check_branch
                %303 = sbr.rel (0) target = $region84
              $region83: #{causal_self_attention.4} parent=68 // pred_region
                loop: start=0, step=1, limit=1
                $region85: #{causal_self_attention.4} parent=83 // loop_pre_header
                  _
                $region86: #{causal_self_attention.4} parent=83 // loop_header
                  %s305 = sphi 0, %s309
                  %p306 = scmp.ge.s32.totalorder %s305, 1
                  %s310 = sphi %s269, %s269
                  %s311 = sphi %s263, %s263
                $region87: #{causal_self_attention.4} parent=83 // loop_header_branch
                  %308 = sbr.rel (%p306) target = $region91
                $region88: #{causal_self_attention.4} parent=83 // loop_body
                  _
                $region89: #{causal_self_attention.4} parent=83 // loop_footer
                  %s309 = sadd.s32 1, %s305
                $region90: #{causal_self_attention.4} parent=83 // loop_footer_branch
                  %304 = sbr.rel target = $region86
                $region91: #{causal_self_attention.4} parent=83 // loop_exit
                  _
                %s313 = ssub.s32 16, 1
                loop: start=0, step=1, limit=1
                $region92: #{causal_self_attention.4} parent=83 // loop_pre_header
                  _
                $region93: #{causal_self_attention.4} parent=83 // loop_header
                  %s315 = sphi 0, %s319
                  %p316 = scmp.ge.s32.totalorder %s315, 1
                  %s320 = sphi %s269, %s269
                  %s321 = sphi %s263, %s263
                $region94: #{causal_self_attention.4} parent=83 // loop_header_branch
                  %318 = sbr.rel (%p316) target = $region98
                $region95: #{causal_self_attention.4} parent=83 // loop_body
                  %v322 = vld [vmem:[%s320] sm:%s313]
                  %323 = vst [vmem:[%s321] sm:%s313] %v322
                  %v324 = vld [vmem:[%s320 + $0x4] sm:%s313]
                  %325 = vst [vmem:[%s321 + $0x4] sm:%s313] %v324
                  %v326 = vld [vmem:[%s320 + $0x10] sm:%s313]
                  %327 = vst [vmem:[%s321 + $0x8] sm:%s313] %v326
                  %v328 = vld [vmem:[%s320 + $0x14] sm:%s313]
                  %329 = vst [vmem:[%s321 + $0xc] sm:%s313] %v328
                  %v330 = vld [vmem:[%s320 + $0x20] sm:%s313]
                  %331 = vst [vmem:[%s321 + $0x10] sm:%s313] %v330
                  %v332 = vld [vmem:[%s320 + $0x24] sm:%s313]
                  %333 = vst [vmem:[%s321 + $0x14] sm:%s313] %v332
                  %v334 = vld [vmem:[%s320 + $0x30] sm:%s313]
                  %335 = vst [vmem:[%s321 + $0x18] sm:%s313] %v334
                  %v336 = vld [vmem:[%s320 + $0x34] sm:%s313]
                  %337 = vst [vmem:[%s321 + $0x1c] sm:%s313] %v336
                $region96: #{causal_self_attention.4} parent=83 // loop_footer
                  %s319 = sadd.s32 1, %s315
                $region97: #{causal_self_attention.4} parent=83 // loop_footer_branch
                  %314 = sbr.rel target = $region93
                $region98: #{causal_self_attention.4} parent=83 // loop_exit
                  _
              $region84: #{causal_self_attention.4} parent=68 // pred_fallthru
                _
            $region69: #{causal_self_attention.4} parent=64 // pred_fallthru
              _
            // Predicated region
            $region70: #{causal_self_attention.4} parent=64 // pred_check
              _
            $region71: #{causal_self_attention.4} parent=64 // pred_check_branch
              %275 = sbr.rel (0) target = $region73
            $region72: #{causal_self_attention.4} parent=64 // pred_region
              %s277 = ssub.s32 16, 1
              loop: start=0, step=1, limit=1
              $region74: #{causal_self_attention.4} parent=72 // loop_pre_header
                _
              $region75: #{causal_self_attention.4} parent=72 // loop_header
                %s279 = sphi 0, %s283
                %p280 = scmp.ge.s32.totalorder %s279, 1
                %s284 = sphi %s269, %s269
                %s285 = sphi %s263, %s263
              $region76: #{causal_self_attention.4} parent=72 // loop_header_branch
                %282 = sbr.rel (%p280) target = $region80
              $region77: #{causal_self_attention.4} parent=72 // loop_body
                %v286 = vld [vmem:[%s284] sm:%s277]
                %287 = vst [vmem:[%s285] sm:%s277] %v286
                %v288 = vld [vmem:[%s284 + $0x4] sm:%s277]
                %289 = vst [vmem:[%s285 + $0x4] sm:%s277] %v288
                %v290 = vld [vmem:[%s284 + $0x10] sm:%s277]
                %291 = vst [vmem:[%s285 + $0x8] sm:%s277] %v290
                %v292 = vld [vmem:[%s284 + $0x14] sm:%s277]
                %293 = vst [vmem:[%s285 + $0xc] sm:%s277] %v292
                %v294 = vld [vmem:[%s284 + $0x20] sm:%s277]
                %295 = vst [vmem:[%s285 + $0x10] sm:%s277] %v294
                %v296 = vld [vmem:[%s284 + $0x24] sm:%s277]
                %297 = vst [vmem:[%s285 + $0x14] sm:%s277] %v296
                %v298 = vld [vmem:[%s284 + $0x30] sm:%s277]
                %299 = vst [vmem:[%s285 + $0x18] sm:%s277] %v298
                %v300 = vld [vmem:[%s284 + $0x34] sm:%s277]
                %301 = vst [vmem:[%s285 + $0x1c] sm:%s277] %v300
              $region78: #{causal_self_attention.4} parent=72 // loop_footer
                %s283 = sadd.s32 1, %s279
              $region79: #{causal_self_attention.4} parent=72 // loop_footer_branch
                %278 = sbr.rel target = $region75
              $region80: #{causal_self_attention.4} parent=72 // loop_exit
                _
            $region73: #{causal_self_attention.4} parent=64 // pred_fallthru
              _
          $region65: #{causal_self_attention.4} parent=60 // pred_fallthru
            _
          %338 = vnop
        $region61: #{causal_self_attention.4} parent=15 // pred_fallthru
          _
        // Predicated region
        $region99: #{causal_self_attention.4} parent=15 // pred_check
          %p339 = pneg %p120
        $region100: #{causal_self_attention.4} parent=15 // pred_check_branch
          %341 = sbr.rel (%p339) target = $region102
        $region101: #{causal_self_attention.4} parent=15 // pred_region
          %s342 = sand.u32 %s110, 1
          %s343 = sand.u32 %s110, 1
          %s344 = smul.addr %s343, 32
          %s345 = scalar_lea.vmem [#allocation10], %s344
          %s346 = sld [smem:[#allocation7 + %s32]]
          %s347 = smul.u32 2, %s346
          %s348 = smul.addr %s31, 16
          %s349 = sadd.s32 %s347, %s348
          %s350 = smul.addr %s349, 4
          %s351 = scalar_lea.vmem %s4, %s350
          // Predicated region
          $region103: #{causal_self_attention.4} parent=101 // pred_check
            _
          $region104: #{causal_self_attention.4} parent=101 // pred_check_branch
            %353 = sbr.rel (0) target = $region106
          $region105: #{causal_self_attention.4} parent=101 // pred_region
            // Predicated region
            $region107: #{causal_self_attention.4} parent=105 // pred_check
              _
            $region108: #{causal_self_attention.4} parent=105 // pred_check_branch
              %355 = sbr.rel target = $region110
            $region109: #{causal_self_attention.4} parent=105 // pred_region
              // Predicated region
              $region122: #{causal_self_attention.4} parent=109 // pred_check
                _
              $region123: #{causal_self_attention.4} parent=109 // pred_check_branch
                %385 = sbr.rel (0) target = $region125
              $region124: #{causal_self_attention.4} parent=109 // pred_region
                loop: start=0, step=1, limit=1
                $region126: #{causal_self_attention.4} parent=124 // loop_pre_header
                  _
                $region127: #{causal_self_attention.4} parent=124 // loop_header
                  %s387 = sphi 0, %s391
                  %p388 = scmp.ge.s32.totalorder %s387, 1
                  %s392 = sphi %s351, %s351
                  %s393 = sphi %s345, %s345
                $region128: #{causal_self_attention.4} parent=124 // loop_header_branch
                  %390 = sbr.rel (%p388) target = $region132
                $region129: #{causal_self_attention.4} parent=124 // loop_body
                  _
                $region130: #{causal_self_attention.4} parent=124 // loop_footer
                  %s391 = sadd.s32 1, %s387
                $region131: #{causal_self_attention.4} parent=124 // loop_footer_branch
                  %386 = sbr.rel target = $region127
                $region132: #{causal_self_attention.4} parent=124 // loop_exit
                  _
                %s395 = ssub.s32 16, 1
                loop: start=0, step=1, limit=1
                $region133: #{causal_self_attention.4} parent=124 // loop_pre_header
                  _
                $region134: #{causal_self_attention.4} parent=124 // loop_header
                  %s397 = sphi 0, %s401
                  %p398 = scmp.ge.s32.totalorder %s397, 1
                  %s402 = sphi %s351, %s351
                  %s403 = sphi %s345, %s345
                $region135: #{causal_self_attention.4} parent=124 // loop_header_branch
                  %400 = sbr.rel (%p398) target = $region139
                $region136: #{causal_self_attention.4} parent=124 // loop_body
                  %v404 = vld [vmem:[%s402] sm:%s395]
                  %405 = vst [vmem:[%s403] sm:%s395] %v404
                  %v406 = vld [vmem:[%s402 + $0x4] sm:%s395]
                  %407 = vst [vmem:[%s403 + $0x4] sm:%s395] %v406
                  %v408 = vld [vmem:[%s402 + $0x10] sm:%s395]
                  %409 = vst [vmem:[%s403 + $0x8] sm:%s395] %v408
                  %v410 = vld [vmem:[%s402 + $0x14] sm:%s395]
                  %411 = vst [vmem:[%s403 + $0xc] sm:%s395] %v410
                  %v412 = vld [vmem:[%s402 + $0x20] sm:%s395]
                  %413 = vst [vmem:[%s403 + $0x10] sm:%s395] %v412
                  %v414 = vld [vmem:[%s402 + $0x24] sm:%s395]
                  %415 = vst [vmem:[%s403 + $0x14] sm:%s395] %v414
                  %v416 = vld [vmem:[%s402 + $0x30] sm:%s395]
                  %417 = vst [vmem:[%s403 + $0x18] sm:%s395] %v416
                  %v418 = vld [vmem:[%s402 + $0x34] sm:%s395]
                  %419 = vst [vmem:[%s403 + $0x1c] sm:%s395] %v418
                $region137: #{causal_self_attention.4} parent=124 // loop_footer
                  %s401 = sadd.s32 1, %s397
                $region138: #{causal_self_attention.4} parent=124 // loop_footer_branch
                  %396 = sbr.rel target = $region134
                $region139: #{causal_self_attention.4} parent=124 // loop_exit
                  _
              $region125: #{causal_self_attention.4} parent=109 // pred_fallthru
                _
            $region110: #{causal_self_attention.4} parent=105 // pred_fallthru
              _
            // Predicated region
            $region111: #{causal_self_attention.4} parent=105 // pred_check
              _
            $region112: #{causal_self_attention.4} parent=105 // pred_check_branch
              %357 = sbr.rel (0) target = $region114
            $region113: #{causal_self_attention.4} parent=105 // pred_region
              %s359 = ssub.s32 16, 1
              loop: start=0, step=1, limit=1
              $region115: #{causal_self_attention.4} parent=113 // loop_pre_header
                _
              $region116: #{causal_self_attention.4} parent=113 // loop_header
                %s361 = sphi 0, %s365
                %p362 = scmp.ge.s32.totalorder %s361, 1
                %s366 = sphi %s351, %s351
                %s367 = sphi %s345, %s345
              $region117: #{causal_self_attention.4} parent=113 // loop_header_branch
                %364 = sbr.rel (%p362) target = $region121
              $region118: #{causal_self_attention.4} parent=113 // loop_body
                %v368 = vld [vmem:[%s366] sm:%s359]
                %369 = vst [vmem:[%s367] sm:%s359] %v368
                %v370 = vld [vmem:[%s366 + $0x4] sm:%s359]
                %371 = vst [vmem:[%s367 + $0x4] sm:%s359] %v370
                %v372 = vld [vmem:[%s366 + $0x10] sm:%s359]
                %373 = vst [vmem:[%s367 + $0x8] sm:%s359] %v372
                %v374 = vld [vmem:[%s366 + $0x14] sm:%s359]
                %375 = vst [vmem:[%s367 + $0xc] sm:%s359] %v374
                %v376 = vld [vmem:[%s366 + $0x20] sm:%s359]
                %377 = vst [vmem:[%s367 + $0x10] sm:%s359] %v376
                %v378 = vld [vmem:[%s366 + $0x24] sm:%s359]
                %379 = vst [vmem:[%s367 + $0x14] sm:%s359] %v378
                %v380 = vld [vmem:[%s366 + $0x30] sm:%s359]
                %381 = vst [vmem:[%s367 + $0x18] sm:%s359] %v380
                %v382 = vld [vmem:[%s366 + $0x34] sm:%s359]
                %383 = vst [vmem:[%s367 + $0x1c] sm:%s359] %v382
              $region119: #{causal_self_attention.4} parent=113 // loop_footer
                %s365 = sadd.s32 1, %s361
              $region120: #{causal_self_attention.4} parent=113 // loop_footer_branch
                %360 = sbr.rel target = $region116
              $region121: #{causal_self_attention.4} parent=113 // loop_exit
                _
            $region114: #{causal_self_attention.4} parent=105 // pred_fallthru
              _
          $region106: #{causal_self_attention.4} parent=101 // pred_fallthru
            _
          %420 = vnop
        $region102: #{causal_self_attention.4} parent=15 // pred_fallthru
          _
      $region16: #{causal_self_attention.4} parent=5 // pred_fallthru
        _
      %p421 = scmp.le.s32.totalorder 1, %s24
      %p422 = scmp.lt.s32.totalorder %s24, 7
      %p423 = pnand %p421, %p422
      %p424 = pneg %p423
      // Predicated region
      $region140: #{causal_self_attention.4} parent=5 // pred_check
        _
      $region141: #{causal_self_attention.4} parent=5 // pred_check_branch
        %426 = sbr.rel (%p423) target = $region143
      $region142: #{causal_self_attention.4} parent=5 // pred_region
        %s427 = ssub.s32 %s24, 1
        %s428 = sand.u32 %s53, 1
        %s429 = sand.u32 %s53, 1
        %s430 = smul.addr %s429, 32
        %s431 = scalar_lea.vmem [#allocation8], %s430
        // Predicated region
        $region144: #{causal_self_attention.4} parent=142 // pred_check
          %p432 = pneg %p66
        $region145: #{causal_self_attention.4} parent=142 // pred_check_branch
          %434 = sbr.rel (%p432) target = $region147
        $region146: #{causal_self_attention.4} parent=142 // pred_region
          _
        $region147: #{causal_self_attention.4} parent=142 // pred_fallthru
          _
        %s435 = sand.u32 %s83, 1
        %s436 = sand.u32 %s83, 1
        %s437 = smul.addr %s436, 32
        %s438 = scalar_lea.vmem [#allocation9], %s437
        // Predicated region
        $region148: #{causal_self_attention.4} parent=142 // pred_check
          %p439 = pneg %p96
        $region149: #{causal_self_attention.4} parent=142 // pred_check_branch
          %441 = sbr.rel (%p439) target = $region151
        $region150: #{causal_self_attention.4} parent=142 // pred_region
          _
        $region151: #{causal_self_attention.4} parent=142 // pred_fallthru
          _
        %s442 = sand.u32 %s113, 1
        %s443 = sand.u32 %s113, 1
        %s444 = smul.addr %s443, 32
        %s445 = scalar_lea.vmem [#allocation10], %s444
        // Predicated region
        $region152: #{causal_self_attention.4} parent=142 // pred_check
          %p446 = pneg %p126
        $region153: #{causal_self_attention.4} parent=142 // pred_check_branch
          %448 = sbr.rel (%p446) target = $region155
        $region154: #{causal_self_attention.4} parent=142 // pred_region
          _
        $region155: #{causal_self_attention.4} parent=142 // pred_fallthru
          _
        %s449 = sand.u32 %s53, 1
        %s450 = sand.u32 %s53, 1
        %s451 = smul.addr %s450, 32
        %s452 = scalar_lea.vmem [#allocation8], %s451
        %p453 = pneg %p66
        %p454 = pneg %p63
        %s455 = sand.u32 %s83, 1
        %s456 = sand.u32 %s83, 1
        %s457 = smul.addr %s456, 32
        %s458 = scalar_lea.vmem [#allocation9], %s457
        %p459 = pneg %p96
        %p460 = pneg %p93
        %s461 = sand.u32 %s113, 1
        %s462 = sand.u32 %s113, 1
        %s463 = smul.addr %s462, 32
        %s464 = scalar_lea.vmem [#allocation10], %s463
        %p465 = pneg %p126
        %p466 = pneg %p123
        %p467 = pneg %p156
        %p468 = pneg %p153
        %s469 = sld [smem:[#allocation6 + %s34]]
        %s470 = smul.u32 2, %s469
        %p471 = scmp.lt.s32.totalorder %s33, 1
        %s472 = scalar_select %p471, %s33, 1
        %p473 = scmp.lt.s32.totalorder %s470, 3
        %s474 = scalar_select %p473, %s470, 3
        %s475 = smul.addr %s472, 4
        %s476 = sadd.s32 %s474, %s475
        %s477 = smul.addr %s476, 4
        %s478 = scalar_lea.vmem %s5, %s477
        %s479 = sld [smem:[#allocation6 + %s34]]
        %s480 = smul.u32 2, %s479
        %s481 = sld [smem:[#allocation7 + %s34]]
        %s482 = smul.u32 2, %s481
        %s483 = sld [smem:[#allocation7 + %s34]]
        %s484 = smul.u32 2, %s483
        %s485 = sld [smem:[#allocation6 + %s34]]
        %s486 = smul.u32 2, %s485
        %p487 = scmp.lt.s32.totalorder %s33, 1
        %s488 = scalar_select %p487, %s33, 1
        %p489 = scmp.lt.s32.totalorder %s486, 3
        %s490 = scalar_select %p489, %s486, 3
        %s491 = smul.addr %s488, 4
        %s492 = sadd.s32 %s490, %s491
        %s493 = smul.addr %s492, 4
        %s494 = scalar_lea.vmem %s5, %s493
        %s495 = sld [smem:[#allocation6 + %s34]]
        %s496 = smul.u32 2, %s495
        %s498 = sld [smem:[#allocation6 + %s34]]
        %s499 = sld [smem:[#allocation7 + %s34]]
        %p500 = scmp.eq.s32.totalorder %s499, 0
        // Predicated region
        $region156: #{causal_self_attention.4} parent=142 // pred_check
          %p501 = pneg %p500
        $region157: #{causal_self_attention.4} parent=142 // pred_check_branch
          %503 = sbr.rel (%p501) target = $region159
        $region158: #{causal_self_attention.4} parent=142 // pred_region
          %vm504 = vcmask 7168
          %505 = vst.msk [vmem:[#allocation2] sm:$0xff] %vm504, -inf
          %506 = vst.msk [vmem:[#allocation2 + $0x8] sm:$0xff] %vm504, -inf
          %507 = vst.msk [vmem:[#allocation2 + $0x10] sm:$0xff] %vm504, -inf
          %508 = vst.msk [vmem:[#allocation2 + $0x18] sm:$0xff] %vm504, -inf
          %509 = vst.msk [vmem:[#allocation2 + $0x20] sm:$0xff] %vm504, -inf
          %510 = vst.msk [vmem:[#allocation2 + $0x28] sm:$0xff] %vm504, -inf
          %511 = vst.msk [vmem:[#allocation2 + $0x30] sm:$0xff] %vm504, -inf
          %512 = vst.msk [vmem:[#allocation2 + $0x38] sm:$0xff] %vm504, -inf
          %513 = vst.msk [vmem:[#allocation3] sm:$0xff] %vm504, 0.0
          %514 = vst.msk [vmem:[#allocation3 + $0x8] sm:$0xff] %vm504, 0.0
          %515 = vst.msk [vmem:[#allocation3 + $0x10] sm:$0xff] %vm504, 0.0
          %516 = vst.msk [vmem:[#allocation3 + $0x18] sm:$0xff] %vm504, 0.0
          %517 = vst.msk [vmem:[#allocation3 + $0x20] sm:$0xff] %vm504, 0.0
          %518 = vst.msk [vmem:[#allocation3 + $0x28] sm:$0xff] %vm504, 0.0
          %519 = vst.msk [vmem:[#allocation3 + $0x30] sm:$0xff] %vm504, 0.0
          %520 = vst.msk [vmem:[#allocation3 + $0x38] sm:$0xff] %vm504, 0.0
          %vm521 = vcmask 64512
          %522 = vst.msk [vmem:[#allocation4] sm:$0xff] %vm521, 0.0
          %523 = vst.msk [vmem:[#allocation4 + $0x8] sm:$0xff] %vm521, 0.0
          %524 = vst.msk [vmem:[#allocation4 + $0x10] sm:$0xff] %vm521, 0.0
          %525 = vst.msk [vmem:[#allocation4 + $0x18] sm:$0xff] %vm521, 0.0
          %526 = vst.msk [vmem:[#allocation4 + $0x20] sm:$0xff] %vm521, 0.0
          %527 = vst.msk [vmem:[#allocation4 + $0x28] sm:$0xff] %vm521, 0.0
          %528 = vst.msk [vmem:[#allocation4 + $0x30] sm:$0xff] %vm521, 0.0
          %529 = vst.msk [vmem:[#allocation4 + $0x38] sm:$0xff] %vm521, 0.0
        $region159: #{causal_self_attention.4} parent=142 // pred_fallthru
          _
        %p530 = scmp.lt.s32.totalorder %s499, %s498
        // Predicated region
        $region160: #{causal_self_attention.4} parent=142 // pred_check
          %p531 = pneg %p530
        $region161: #{causal_self_attention.4} parent=142 // pred_check_branch
          %533 = sbr.rel (%p531) target = $region163
        $region162: #{causal_self_attention.4} parent=142 // pred_region
          %v534 = vld [vmem:[%s431] sm:$0xf]
          %v535 = vld [vmem:[%s431 + $0x4] sm:$0xf]
          %v536 = vld [vmem:[%s431 + $0x8] sm:$0xf]
          %v537 = vld [vmem:[%s431 + $0xc] sm:$0xf]
          %v538 = vld [vmem:[%s431 + $0x10] sm:$0xf]
          %v539 = vld [vmem:[%s431 + $0x14] sm:$0xf]
          %v540 = vld [vmem:[%s431 + $0x18] sm:$0xf]
          %v541 = vld [vmem:[%s431 + $0x1c] sm:$0xf]
          %v542 = vld [vmem:[%s438] sm:$0xf]
          %v543 = vld [vmem:[%s438 + $0x4] sm:$0xf]
          %v544 = vld [vmem:[%s438 + $0x8] sm:$0xf]
          %v545 = vld [vmem:[%s438 + $0xc] sm:$0xf]
          %v546 = vld [vmem:[%s438 + $0x10] sm:$0xf]
          %v547 = vld [vmem:[%s438 + $0x14] sm:$0xf]
          %v548 = vld [vmem:[%s438 + $0x18] sm:$0xf]
          %v549 = vld [vmem:[%s438 + $0x1c] sm:$0xf]
          %v550 = vld [vmem:[%s445] sm:$0xf]
          %v551 = vld [vmem:[%s445 + $0x4] sm:$0xf]
          %v552 = vld [vmem:[%s445 + $0x8] sm:$0xf]
          %v553 = vld [vmem:[%s445 + $0xc] sm:$0xf]
          %v554 = vld [vmem:[%s445 + $0x10] sm:$0xf]
          %v555 = vld [vmem:[%s445 + $0x14] sm:$0xf]
          %v556 = vld [vmem:[%s445 + $0x18] sm:$0xf]
          %v557 = vld [vmem:[%s445 + $0x1c] sm:$0xf]
          %v560 = vunpack.c.l.b16 %v534
          %v561 = vunpack.c.l.b16 %v535
          %v562 = vpack.c.b16 %v561, %v560
          %v565 = vunpack.c.l.b16 %v542
          %v566 = vunpack.c.l.b16 %v543
          %v567 = vpack.c.b16 %v566, %v565
          %vm568 = vcmask 64512
          %v570 = vsel %vm568, %v562, 0
          %v573 = vsel %vm568, %v567, 0
          %575 = vmatpush.bf16.xpose.msra.mxu0 0
          %576 = vmatpush.bf16.xpose.msra.mxu0 0
          %577 = vmatpush.bf16.xpose.msra.mxu0 0
          %578 = vmatpush.bf16.xpose.msra.mxu0 0
          %579 = vmatpush.bf16.xpose.msra.mxu0 0
          %580 = vmatpush.bf16.xpose.msra.mxu0 0
          %581 = vmatpush.bf16.xpose.msra.mxu0 0
          %582 = vmatpush.bf16.xpose.msra.mxu0 %v573
          %583 = vmatmul.bf16.gmra.mxu0 %v570
          %v584 = vpop.f32.mrf.mxu0
          %v585 = vadd.f32 0.0, %v584
          %v586 = vpop.f32.mrf.mxu0
          %v587 = vadd.f32 0.0, %v586
          %588 = vdwg.mxu0
          %v591 = vunpack.c.l.b16 %v536
          %v592 = vunpack.c.l.b16 %v537
          %v593 = vpack.c.b16 %v592, %v591
          %v596 = vunpack.c.l.b16 %v544
          %v597 = vunpack.c.l.b16 %v545
          %v598 = vpack.c.b16 %v597, %v596
          %v600 = vsel %vm568, %v593, 0
          %v603 = vsel %vm568, %v598, 0
          %605 = vmatpush.bf16.xpose.msra.mxu0 0
          %606 = vmatpush.bf16.xpose.msra.mxu0 0
          %607 = vmatpush.bf16.xpose.msra.mxu0 0
          %608 = vmatpush.bf16.xpose.msra.mxu0 0
          %609 = vmatpush.bf16.xpose.msra.mxu0 0
          %610 = vmatpush.bf16.xpose.msra.mxu0 0
          %611 = vmatpush.bf16.xpose.msra.mxu0 0
          %612 = vmatpush.bf16.xpose.msra.mxu0 %v603
          %613 = vmatmul.bf16.gmra.mxu0 %v600
          %v614 = vpop.f32.mrf.mxu0
          %v615 = vadd.f32 0.0, %v614
          %v616 = vpop.f32.mrf.mxu0
          %v617 = vadd.f32 0.0, %v616
          %618 = vdwg.mxu0
          %v621 = vunpack.c.l.b16 %v538
          %v622 = vunpack.c.l.b16 %v539
          %v623 = vpack.c.b16 %v622, %v621
          %v626 = vunpack.c.l.b16 %v546
          %v627 = vunpack.c.l.b16 %v547
          %v628 = vpack.c.b16 %v627, %v626
          %v630 = vsel %vm568, %v623, 0
          %v633 = vsel %vm568, %v628, 0
          %635 = vmatpush.bf16.xpose.msra.mxu0 0
          %636 = vmatpush.bf16.xpose.msra.mxu0 0
          %637 = vmatpush.bf16.xpose.msra.mxu0 0
          %638 = vmatpush.bf16.xpose.msra.mxu0 0
          %639 = vmatpush.bf16.xpose.msra.mxu0 0
          %640 = vmatpush.bf16.xpose.msra.mxu0 0
          %641 = vmatpush.bf16.xpose.msra.mxu0 0
          %642 = vmatpush.bf16.xpose.msra.mxu0 %v633
          %643 = vmatmul.bf16.gmra.mxu0 %v630
          %v644 = vpop.f32.mrf.mxu0
          %v645 = vadd.f32 0.0, %v644
          %v646 = vpop.f32.mrf.mxu0
          %v647 = vadd.f32 0.0, %v646
          %648 = vdwg.mxu0
          %v651 = vunpack.c.l.b16 %v540
          %v652 = vunpack.c.l.b16 %v541
          %v653 = vpack.c.b16 %v652, %v651
          %v656 = vunpack.c.l.b16 %v548
          %v657 = vunpack.c.l.b16 %v549
          %v658 = vpack.c.b16 %v657, %v656
          %v660 = vsel %vm568, %v653, 0
          %v663 = vsel %vm568, %v658, 0
          %665 = vmatpush.bf16.xpose.msra.mxu0 0
          %666 = vmatpush.bf16.xpose.msra.mxu0 0
          %667 = vmatpush.bf16.xpose.msra.mxu0 0
          %668 = vmatpush.bf16.xpose.msra.mxu0 0
          %669 = vmatpush.bf16.xpose.msra.mxu0 0
          %670 = vmatpush.bf16.xpose.msra.mxu0 0
          %671 = vmatpush.bf16.xpose.msra.mxu0 0
          %672 = vmatpush.bf16.xpose.msra.mxu0 %v663
          %673 = vmatmul.bf16.gmra.mxu0 %v660
          %v674 = vpop.f32.mrf.mxu0
          %v675 = vadd.f32 0.0, %v674
          %v676 = vpop.f32.mrf.mxu0
          %v677 = vadd.f32 0.0, %v676
          %678 = vdwg.mxu0
          %v679 = vld [vmem:[#allocation2] sm:$0xff]
          %v680 = vld [vmem:[#allocation2 + $0x8] sm:$0xff]
          %v681 = vld [vmem:[#allocation2 + $0x10] sm:$0xff]
          %v682 = vld [vmem:[#allocation2 + $0x18] sm:$0xff]
          %v683 = vld [vmem:[#allocation2 + $0x20] sm:$0xff]
          %v684 = vld [vmem:[#allocation2 + $0x28] sm:$0xff]
          %v685 = vld [vmem:[#allocation2 + $0x30] sm:$0xff]
          %v686 = vld [vmem:[#allocation2 + $0x38] sm:$0xff]
          %vm687 = vcmask 130048
          %v688 = vsel %vm687, %v585, -inf
          %689 = vmax.xlane.f32.xlu0 %v688
          %v690 = vpop.xlane.xlu0 %689
          %v691 = vsel %vm687, %v587, -inf
          %692 = vmax.xlane.f32.xlu0 %v691
          %v693 = vpop.xlane.xlu0 %692
          %v694 = vsel %vm687, %v615, -inf
          %695 = vmax.xlane.f32.xlu0 %v694
          %v696 = vpop.xlane.xlu0 %695
          %v697 = vsel %vm687, %v617, -inf
          %698 = vmax.xlane.f32.xlu0 %v697
          %v699 = vpop.xlane.xlu0 %698
          %v700 = vsel %vm687, %v645, -inf
          %701 = vmax.xlane.f32.xlu0 %v700
          %v702 = vpop.xlane.xlu0 %701
          %v703 = vsel %vm687, %v647, -inf
          %704 = vmax.xlane.f32.xlu0 %v703
          %v705 = vpop.xlane.xlu0 %704
          %v706 = vsel %vm687, %v675, -inf
          %707 = vmax.xlane.f32.xlu0 %v706
          %v708 = vpop.xlane.xlu0 %707
          %v709 = vsel %vm687, %v677, -inf
          %710 = vmax.xlane.f32.xlu0 %v709
          %v711 = vpop.xlane.xlu0 %710
          %v712 = vmax.f32 %v679, %v690
          %v713 = vmax.f32 %v680, %v693
          %v714 = vmax.f32 %v681, %v696
          %v715 = vmax.f32 %v682, %v699
          %v716 = vmax.f32 %v683, %v702
          %v717 = vmax.f32 %v684, %v705
          %v718 = vmax.f32 %v685, %v708
          %v719 = vmax.f32 %v686, %v711
          %v720 = vsub.f32 %v679, %v712
          %v721 = vsub.f32 %v680, %v713
          %v722 = vsub.f32 %v681, %v714
          %v723 = vsub.f32 %v682, %v715
          %v724 = vsub.f32 %v683, %v716
          %v725 = vsub.f32 %v684, %v717
          %v726 = vsub.f32 %v685, %v718
          %v727 = vsub.f32 %v686, %v719
          %v728 = vmul.f32 %v720, 1.442695
          %v729 = vpow.pop %v728
          %v730 = vmul.f32 %v721, 1.442695
          %v731 = vpow.pop %v730
          %v732 = vmul.f32 %v722, 1.442695
          %v733 = vpow.pop %v732
          %v734 = vmul.f32 %v723, 1.442695
          %v735 = vpow.pop %v734
          %v736 = vmul.f32 %v724, 1.442695
          %v737 = vpow.pop %v736
          %v738 = vmul.f32 %v725, 1.442695
          %v739 = vpow.pop %v738
          %v740 = vmul.f32 %v726, 1.442695
          %v741 = vpow.pop %v740
          %v742 = vmul.f32 %v727, 1.442695
          %v743 = vpow.pop %v742
          %745 = vset.pattern.permute.xlu0 0
          %746 = vperm.xlu0 %745, %v712
          %v747 = vpop.permute.xlu0 %746
          %750 = vset.pattern.permute.xlu0 0
          %751 = vperm.xlu0 %750, %v713
          %v752 = vpop.permute.xlu0 %751
          %755 = vset.pattern.permute.xlu0 0
          %756 = vperm.xlu0 %755, %v714
          %v757 = vpop.permute.xlu0 %756
          %760 = vset.pattern.permute.xlu0 0
          %761 = vperm.xlu0 %760, %v715
          %v762 = vpop.permute.xlu0 %761
          %765 = vset.pattern.permute.xlu0 0
          %766 = vperm.xlu0 %765, %v716
          %v767 = vpop.permute.xlu0 %766
          %770 = vset.pattern.permute.xlu0 0
          %771 = vperm.xlu0 %770, %v717
          %v772 = vpop.permute.xlu0 %771
          %775 = vset.pattern.permute.xlu0 0
          %776 = vperm.xlu0 %775, %v718
          %v777 = vpop.permute.xlu0 %776
          %780 = vset.pattern.permute.xlu0 0
          %781 = vperm.xlu0 %780, %v719
          %v782 = vpop.permute.xlu0 %781
          %v784 = vsub.f32 %v585, %v747
          %v785 = vsub.f32 %v587, %v752
          %v786 = vsub.f32 %v615, %v757
          %v787 = vsub.f32 %v617, %v762
          %v788 = vsub.f32 %v645, %v767
          %v789 = vsub.f32 %v647, %v772
          %v790 = vsub.f32 %v675, %v777
          %v791 = vsub.f32 %v677, %v782
          %v792 = vmul.f32 %v784, 1.442695
          %v793 = vpow.pop %v792
          %v794 = vmul.f32 %v785, 1.442695
          %v795 = vpow.pop %v794
          %v796 = vmul.f32 %v786, 1.442695
          %v797 = vpow.pop %v796
          %v798 = vmul.f32 %v787, 1.442695
          %v799 = vpow.pop %v798
          %v800 = vmul.f32 %v788, 1.442695
          %v801 = vpow.pop %v800
          %v802 = vmul.f32 %v789, 1.442695
          %v803 = vpow.pop %v802
          %v804 = vmul.f32 %v790, 1.442695
          %v805 = vpow.pop %v804
          %v806 = vmul.f32 %v791, 1.442695
          %v807 = vpow.pop %v806
          %v808 = vld [vmem:[#allocation3] sm:$0xff]
          %v809 = vld [vmem:[#allocation3 + $0x8] sm:$0xff]
          %v810 = vld [vmem:[#allocation3 + $0x10] sm:$0xff]
          %v811 = vld [vmem:[#allocation3 + $0x18] sm:$0xff]
          %v812 = vld [vmem:[#allocation3 + $0x20] sm:$0xff]
          %v813 = vld [vmem:[#allocation3 + $0x28] sm:$0xff]
          %v814 = vld [vmem:[#allocation3 + $0x30] sm:$0xff]
          %v815 = vld [vmem:[#allocation3 + $0x38] sm:$0xff]
          %v816 = vmul.f32 %v729, %v808
          %v817 = vmul.f32 %v731, %v809
          %v818 = vmul.f32 %v733, %v810
          %v819 = vmul.f32 %v735, %v811
          %v820 = vmul.f32 %v737, %v812
          %v821 = vmul.f32 %v739, %v813
          %v822 = vmul.f32 %v741, %v814
          %v823 = vmul.f32 %v743, %v815
          %v824 = vsel %vm687, %v793, 0.0
          %825 = vadd.xlane.f32.xlu0 %v824
          %v826 = vpop.xlane.xlu0 %825
          %v827 = vsel %vm687, %v795, 0.0
          %828 = vadd.xlane.f32.xlu0 %v827
          %v829 = vpop.xlane.xlu0 %828
          %v830 = vsel %vm687, %v797, 0.0
          %831 = vadd.xlane.f32.xlu0 %v830
          %v832 = vpop.xlane.xlu0 %831
          %v833 = vsel %vm687, %v799, 0.0
          %834 = vadd.xlane.f32.xlu0 %v833
          %v835 = vpop.xlane.xlu0 %834
          %v836 = vsel %vm687, %v801, 0.0
          %837 = vadd.xlane.f32.xlu0 %v836
          %v838 = vpop.xlane.xlu0 %837
          %v839 = vsel %vm687, %v803, 0.0
          %840 = vadd.xlane.f32.xlu0 %v839
          %v841 = vpop.xlane.xlu0 %840
          %v842 = vsel %vm687, %v805, 0.0
          %843 = vadd.xlane.f32.xlu0 %v842
          %v844 = vpop.xlane.xlu0 %843
          %v845 = vsel %vm687, %v807, 0.0
          %846 = vadd.xlane.f32.xlu0 %v845
          %v847 = vpop.xlane.xlu0 %846
          %v848 = vadd.f32 %v816, %v826
          %v849 = vadd.f32 %v817, %v829
          %v850 = vadd.f32 %v818, %v832
          %v851 = vadd.f32 %v819, %v835
          %v852 = vadd.f32 %v820, %v838
          %v853 = vadd.f32 %v821, %v841
          %v854 = vadd.f32 %v822, %v844
          %v855 = vadd.f32 %v823, %v847
          %vm856 = vcmask 7168
          %857 = vst.msk [vmem:[#allocation3] sm:$0xff] %vm856, %v848
          %858 = vst.msk [vmem:[#allocation3 + $0x8] sm:$0xff] %vm856, %v849
          %859 = vst.msk [vmem:[#allocation3 + $0x10] sm:$0xff] %vm856, %v850
          %860 = vst.msk [vmem:[#allocation3 + $0x18] sm:$0xff] %vm856, %v851
          %861 = vst.msk [vmem:[#allocation3 + $0x20] sm:$0xff] %vm856, %v852
          %862 = vst.msk [vmem:[#allocation3 + $0x28] sm:$0xff] %vm856, %v853
          %863 = vst.msk [vmem:[#allocation3 + $0x30] sm:$0xff] %vm856, %v854
          %864 = vst.msk [vmem:[#allocation3 + $0x38] sm:$0xff] %vm856, %v855
          %v865 = vld [vmem:[#allocation4] sm:$0xff]
          %v866 = vld [vmem:[#allocation4 + $0x8] sm:$0xff]
          %v867 = vld [vmem:[#allocation4 + $0x10] sm:$0xff]
          %v868 = vld [vmem:[#allocation4 + $0x18] sm:$0xff]
          %v869 = vld [vmem:[#allocation4 + $0x20] sm:$0xff]
          %v870 = vld [vmem:[#allocation4 + $0x28] sm:$0xff]
          %v871 = vld [vmem:[#allocation4 + $0x30] sm:$0xff]
          %v872 = vld [vmem:[#allocation4 + $0x38] sm:$0xff]
          %874 = vset.pattern.permute.xlu0 0
          %875 = vperm.xlu0 %874, %v729
          %v876 = vpop.permute.xlu0 %875
          %879 = vset.pattern.permute.xlu0 0
          %880 = vperm.xlu0 %879, %v731
          %v881 = vpop.permute.xlu0 %880
          %884 = vset.pattern.permute.xlu0 0
          %885 = vperm.xlu0 %884, %v733
          %v886 = vpop.permute.xlu0 %885
          %889 = vset.pattern.permute.xlu0 0
          %890 = vperm.xlu0 %889, %v735
          %v891 = vpop.permute.xlu0 %890
          %894 = vset.pattern.permute.xlu0 0
          %895 = vperm.xlu0 %894, %v737
          %v896 = vpop.permute.xlu0 %895
          %899 = vset.pattern.permute.xlu0 0
          %900 = vperm.xlu0 %899, %v739
          %v901 = vpop.permute.xlu0 %900
          %904 = vset.pattern.permute.xlu0 0
          %905 = vperm.xlu0 %904, %v741
          %v906 = vpop.permute.xlu0 %905
          %909 = vset.pattern.permute.xlu0 0
          %910 = vperm.xlu0 %909, %v743
          %v911 = vpop.permute.xlu0 %910
          %v913 = vmul.f32 %v876, %v865
          %v914 = vmul.f32 %v881, %v866
          %v915 = vmul.f32 %v886, %v867
          %v916 = vmul.f32 %v891, %v868
          %v917 = vmul.f32 %v896, %v869
          %v918 = vmul.f32 %v901, %v870
          %v919 = vmul.f32 %v906, %v871
          %v920 = vmul.f32 %v911, %v872
          %v921 = vpack.c.bf16 %v793, %v793
          %v922 = vpack.c.bf16 %v795, %v795
          %v923 = vpack.c.bf16 %v797, %v797
          %v924 = vpack.c.bf16 %v799, %v799
          %v925 = vpack.c.bf16 %v801, %v801
          %v926 = vpack.c.bf16 %v803, %v803
          %v927 = vpack.c.bf16 %v805, %v805
          %v928 = vpack.c.bf16 %v807, %v807
          %v931 = vunpack.c.l.b16 %v921
          %v932 = vunpack.c.l.b16 %v922
          %v933 = vpack.c.b16 %v932, %v931
          %v936 = vunpack.c.l.b16 %v550
          %v937 = vunpack.c.l.b16 %v551
          %v938 = vpack.c.b16 %v937, %v936
          %v941 = vsel %vm687, %v933, 0
          %943 = vmatpush.bf16.msra.mxu0 0
          %944 = vmatpush.bf16.msra.mxu0 0
          %945 = vmatpush.bf16.msra.mxu0 0
          %946 = vmatpush.bf16.msra.mxu0 0
          %947 = vmatpush.bf16.msra.mxu0 0
          %948 = vmatpush.bf16.msra.mxu0 0
          %949 = vmatpush.bf16.msra.mxu0 0
          %950 = vmatpush.bf16.msra.mxu0 %v938
          %951 = vmatmul.bf16.gmra.mxu0 %v941
          %v952 = vpop.f32.mrf.mxu0
          %v953 = vadd.f32 0.0, %v952
          %v954 = vpop.f32.mrf.mxu0
          %v955 = vadd.f32 0.0, %v954
          %956 = vdwg.mxu0
          %v959 = vunpack.c.l.b16 %v923
          %v960 = vunpack.c.l.b16 %v924
          %v961 = vpack.c.b16 %v960, %v959
          %v964 = vunpack.c.l.b16 %v552
          %v965 = vunpack.c.l.b16 %v553
          %v966 = vpack.c.b16 %v965, %v964
          %v969 = vsel %vm687, %v961, 0
          %971 = vmatpush.bf16.msra.mxu0 0
          %972 = vmatpush.bf16.msra.mxu0 0
          %973 = vmatpush.bf16.msra.mxu0 0
          %974 = vmatpush.bf16.msra.mxu0 0
          %975 = vmatpush.bf16.msra.mxu0 0
          %976 = vmatpush.bf16.msra.mxu0 0
          %977 = vmatpush.bf16.msra.mxu0 0
          %978 = vmatpush.bf16.msra.mxu0 %v966
          %979 = vmatmul.bf16.gmra.mxu0 %v969
          %v980 = vpop.f32.mrf.mxu0
          %v981 = vadd.f32 0.0, %v980
          %v982 = vpop.f32.mrf.mxu0
          %v983 = vadd.f32 0.0, %v982
          %984 = vdwg.mxu0
          %v987 = vunpack.c.l.b16 %v925
          %v988 = vunpack.c.l.b16 %v926
          %v989 = vpack.c.b16 %v988, %v987
          %v992 = vunpack.c.l.b16 %v554
          %v993 = vunpack.c.l.b16 %v555
          %v994 = vpack.c.b16 %v993, %v992
          %v997 = vsel %vm687, %v989, 0
          %999 = vmatpush.bf16.msra.mxu0 0
          %1000 = vmatpush.bf16.msra.mxu0 0
          %1001 = vmatpush.bf16.msra.mxu0 0
          %1002 = vmatpush.bf16.msra.mxu0 0
          %1003 = vmatpush.bf16.msra.mxu0 0
          %1004 = vmatpush.bf16.msra.mxu0 0
          %1005 = vmatpush.bf16.msra.mxu0 0
          %1006 = vmatpush.bf16.msra.mxu0 %v994
          %1007 = vmatmul.bf16.gmra.mxu0 %v997
          %v1008 = vpop.f32.mrf.mxu0
          %v1009 = vadd.f32 0.0, %v1008
          %v1010 = vpop.f32.mrf.mxu0
          %v1011 = vadd.f32 0.0, %v1010
          %1012 = vdwg.mxu0
          %v1015 = vunpack.c.l.b16 %v927
          %v1016 = vunpack.c.l.b16 %v928
          %v1017 = vpack.c.b16 %v1016, %v1015
          %v1020 = vunpack.c.l.b16 %v556
          %v1021 = vunpack.c.l.b16 %v557
          %v1022 = vpack.c.b16 %v1021, %v1020
          %v1025 = vsel %vm687, %v1017, 0
          %1027 = vmatpush.bf16.msra.mxu0 0
          %1028 = vmatpush.bf16.msra.mxu0 0
          %1029 = vmatpush.bf16.msra.mxu0 0
          %1030 = vmatpush.bf16.msra.mxu0 0
          %1031 = vmatpush.bf16.msra.mxu0 0
          %1032 = vmatpush.bf16.msra.mxu0 0
          %1033 = vmatpush.bf16.msra.mxu0 0
          %1034 = vmatpush.bf16.msra.mxu0 %v1022
          %1035 = vmatmul.bf16.gmra.mxu0 %v1025
          %v1036 = vpop.f32.mrf.mxu0
          %v1037 = vadd.f32 0.0, %v1036
          %v1038 = vpop.f32.mrf.mxu0
          %v1039 = vadd.f32 0.0, %v1038
          %1040 = vdwg.mxu0
          %v1041 = vadd.f32 %v913, %v953
          %v1042 = vadd.f32 %v914, %v955
          %v1043 = vadd.f32 %v915, %v981
          %v1044 = vadd.f32 %v916, %v983
          %v1045 = vadd.f32 %v917, %v1009
          %v1046 = vadd.f32 %v918, %v1011
          %v1047 = vadd.f32 %v919, %v1037
          %v1048 = vadd.f32 %v920, %v1039
          %1049 = vst.msk [vmem:[#allocation4] sm:$0xff] %vm568, %v1041
          %1050 = vst.msk [vmem:[#allocation4 + $0x8] sm:$0xff] %vm568, %v1042
          %1051 = vst.msk [vmem:[#allocation4 + $0x10] sm:$0xff] %vm568, %v1043
          %1052 = vst.msk [vmem:[#allocation4 + $0x18] sm:$0xff] %vm568, %v1044
          %1053 = vst.msk [vmem:[#allocation4 + $0x20] sm:$0xff] %vm568, %v1045
          %1054 = vst.msk [vmem:[#allocation4 + $0x28] sm:$0xff] %vm568, %v1046
          %1055 = vst.msk [vmem:[#allocation4 + $0x30] sm:$0xff] %vm568, %v1047
          %1056 = vst.msk [vmem:[#allocation4 + $0x38] sm:$0xff] %vm568, %v1048
          %1057 = vst.msk [vmem:[#allocation2] sm:$0xff] %vm856, %v712
          %1058 = vst.msk [vmem:[#allocation2 + $0x8] sm:$0xff] %vm856, %v713
          %1059 = vst.msk [vmem:[#allocation2 + $0x10] sm:$0xff] %vm856, %v714
          %1060 = vst.msk [vmem:[#allocation2 + $0x18] sm:$0xff] %vm856, %v715
          %1061 = vst.msk [vmem:[#allocation2 + $0x20] sm:$0xff] %vm856, %v716
          %1062 = vst.msk [vmem:[#allocation2 + $0x28] sm:$0xff] %vm856, %v717
          %1063 = vst.msk [vmem:[#allocation2 + $0x30] sm:$0xff] %vm856, %v718
          %1064 = vst.msk [vmem:[#allocation2 + $0x38] sm:$0xff] %vm856, %v719
        $region163: #{causal_self_attention.4} parent=142 // pred_fallthru
          _
        %p1065 = scmp.eq.s32.totalorder %s499, %s498
        // Predicated region
        $region164: #{causal_self_attention.4} parent=142 // pred_check
          %p1066 = pneg %p1065
        $region165: #{causal_self_attention.4} parent=142 // pred_check_branch
          %1068 = sbr.rel (%p1066) target = $region167
        $region166: #{causal_self_attention.4} parent=142 // pred_region
          %v1069 = vld [vmem:[%s431] sm:$0xf]
          %v1070 = vld [vmem:[%s431 + $0x4] sm:$0xf]
          %v1071 = vld [vmem:[%s431 + $0x8] sm:$0xf]
          %v1072 = vld [vmem:[%s431 + $0xc] sm:$0xf]
          %v1073 = vld [vmem:[%s431 + $0x10] sm:$0xf]
          %v1074 = vld [vmem:[%s431 + $0x14] sm:$0xf]
          %v1075 = vld [vmem:[%s431 + $0x18] sm:$0xf]
          %v1076 = vld [vmem:[%s431 + $0x1c] sm:$0xf]
          %v1077 = vld [vmem:[%s438] sm:$0xf]
          %v1078 = vld [vmem:[%s438 + $0x4] sm:$0xf]
          %v1079 = vld [vmem:[%s438 + $0x8] sm:$0xf]
          %v1080 = vld [vmem:[%s438 + $0xc] sm:$0xf]
          %v1081 = vld [vmem:[%s438 + $0x10] sm:$0xf]
          %v1082 = vld [vmem:[%s438 + $0x14] sm:$0xf]
          %v1083 = vld [vmem:[%s438 + $0x18] sm:$0xf]
          %v1084 = vld [vmem:[%s438 + $0x1c] sm:$0xf]
          %v1085 = vld [vmem:[%s445] sm:$0xf]
          %v1086 = vld [vmem:[%s445 + $0x4] sm:$0xf]
          %v1087 = vld [vmem:[%s445 + $0x8] sm:$0xf]
          %v1088 = vld [vmem:[%s445 + $0xc] sm:$0xf]
          %v1089 = vld [vmem:[%s445 + $0x10] sm:$0xf]
          %v1090 = vld [vmem:[%s445 + $0x14] sm:$0xf]
          %v1091 = vld [vmem:[%s445 + $0x18] sm:$0xf]
          %v1092 = vld [vmem:[%s445 + $0x1c] sm:$0xf]
          %v1095 = vunpack.c.l.b16 %v1069
          %v1096 = vunpack.c.l.b16 %v1070
          %v1097 = vpack.c.b16 %v1096, %v1095
          %v1100 = vunpack.c.l.b16 %v1077
          %v1101 = vunpack.c.l.b16 %v1078
          %v1102 = vpack.c.b16 %v1101, %v1100
          %vm1103 = vcmask 64512
          %v1105 = vsel %vm1103, %v1097, 0
          %v1108 = vsel %vm1103, %v1102, 0
          %1110 = vmatpush.bf16.xpose.msra.mxu0 0
          %1111 = vmatpush.bf16.xpose.msra.mxu0 0
          %1112 = vmatpush.bf16.xpose.msra.mxu0 0
          %1113 = vmatpush.bf16.xpose.msra.mxu0 0
          %1114 = vmatpush.bf16.xpose.msra.mxu0 0
          %1115 = vmatpush.bf16.xpose.msra.mxu0 0
          %1116 = vmatpush.bf16.xpose.msra.mxu0 0
          %1117 = vmatpush.bf16.xpose.msra.mxu0 %v1108
          %1118 = vmatmul.bf16.gmra.mxu0 %v1105
          %v1119 = vpop.f32.mrf.mxu0
          %v1120 = vadd.f32 0.0, %v1119
          %v1121 = vpop.f32.mrf.mxu0
          %v1122 = vadd.f32 0.0, %v1121
          %1123 = vdwg.mxu0
          %v1126 = vunpack.c.l.b16 %v1071
          %v1127 = vunpack.c.l.b16 %v1072
          %v1128 = vpack.c.b16 %v1127, %v1126
          %v1131 = vunpack.c.l.b16 %v1079
          %v1132 = vunpack.c.l.b16 %v1080
          %v1133 = vpack.c.b16 %v1132, %v1131
          %v1135 = vsel %vm1103, %v1128, 0
          %v1138 = vsel %vm1103, %v1133, 0
          %1140 = vmatpush.bf16.xpose.msra.mxu0 0
          %1141 = vmatpush.bf16.xpose.msra.mxu0 0
          %1142 = vmatpush.bf16.xpose.msra.mxu0 0
          %1143 = vmatpush.bf16.xpose.msra.mxu0 0
          %1144 = vmatpush.bf16.xpose.msra.mxu0 0
          %1145 = vmatpush.bf16.xpose.msra.mxu0 0
          %1146 = vmatpush.bf16.xpose.msra.mxu0 0
          %1147 = vmatpush.bf16.xpose.msra.mxu0 %v1138
          %1148 = vmatmul.bf16.gmra.mxu0 %v1135
          %v1149 = vpop.f32.mrf.mxu0
          %v1150 = vadd.f32 0.0, %v1149
          %v1151 = vpop.f32.mrf.mxu0
          %v1152 = vadd.f32 0.0, %v1151
          %1153 = vdwg.mxu0
          %v1156 = vunpack.c.l.b16 %v1073
          %v1157 = vunpack.c.l.b16 %v1074
          %v1158 = vpack.c.b16 %v1157, %v1156
          %v1161 = vunpack.c.l.b16 %v1081
          %v1162 = vunpack.c.l.b16 %v1082
          %v1163 = vpack.c.b16 %v1162, %v1161
          %v1165 = vsel %vm1103, %v1158, 0
          %v1168 = vsel %vm1103, %v1163, 0
          %1170 = vmatpush.bf16.xpose.msra.mxu0 0
          %1171 = vmatpush.bf16.xpose.msra.mxu0 0
          %1172 = vmatpush.bf16.xpose.msra.mxu0 0
          %1173 = vmatpush.bf16.xpose.msra.mxu0 0
          %1174 = vmatpush.bf16.xpose.msra.mxu0 0
          %1175 = vmatpush.bf16.xpose.msra.mxu0 0
          %1176 = vmatpush.bf16.xpose.msra.mxu0 0
          %1177 = vmatpush.bf16.xpose.msra.mxu0 %v1168
          %1178 = vmatmul.bf16.gmra.mxu0 %v1165
          %v1179 = vpop.f32.mrf.mxu0
          %v1180 = vadd.f32 0.0, %v1179
          %v1181 = vpop.f32.mrf.mxu0
          %v1182 = vadd.f32 0.0, %v1181
          %1183 = vdwg.mxu0
          %v1186 = vunpack.c.l.b16 %v1075
          %v1187 = vunpack.c.l.b16 %v1076
          %v1188 = vpack.c.b16 %v1187, %v1186
          %v1191 = vunpack.c.l.b16 %v1083
          %v1192 = vunpack.c.l.b16 %v1084
          %v1193 = vpack.c.b16 %v1192, %v1191
          %v1195 = vsel %vm1103, %v1188, 0
          %v1198 = vsel %vm1103, %v1193, 0
          %1200 = vmatpush.bf16.xpose.msra.mxu0 0
          %1201 = vmatpush.bf16.xpose.msra.mxu0 0
          %1202 = vmatpush.bf16.xpose.msra.mxu0 0
          %1203 = vmatpush.bf16.xpose.msra.mxu0 0
          %1204 = vmatpush.bf16.xpose.msra.mxu0 0
          %1205 = vmatpush.bf16.xpose.msra.mxu0 0
          %1206 = vmatpush.bf16.xpose.msra.mxu0 0
          %1207 = vmatpush.bf16.xpose.msra.mxu0 %v1198
          %1208 = vmatmul.bf16.gmra.mxu0 %v1195
          %v1209 = vpop.f32.mrf.mxu0
          %v1210 = vadd.f32 0.0, %v1209
          %v1211 = vpop.f32.mrf.mxu0
          %v1212 = vadd.f32 0.0, %v1211
          %1213 = vdwg.mxu0
          %v1214 = vlaneseq
          %v1215 = vshrl.u32 %v1214, 7
          %v1216 = vadd.s32 %v1215, 8
          %v1217 = vlaneseq
          %v1218 = vand.u32 %v1217, 127
          %vm1219 = vcmp.le.s32.totalorder %v1218, %v1215
          %vm1220 = vcmp.le.s32.totalorder %v1218, %v1216
          %v1221 = vsel %vm1219, 1, 0
          %v1222 = vsel %vm1220, 1, 0
          %vm1223 = vcmp.eq.s32.totalorder %v1221, 1
          %vm1224 = vcmp.eq.s32.totalorder %v1222, 1
          %v1225 = vsel %vm1223, %v1120, -inf
          %v1226 = vsel %vm1224, %v1122, -inf
          %v1227 = vsel %vm1223, %v1150, -inf
          %v1228 = vsel %vm1224, %v1152, -inf
          %v1229 = vsel %vm1223, %v1180, -inf
          %v1230 = vsel %vm1224, %v1182, -inf
          %v1231 = vsel %vm1223, %v1210, -inf
          %v1232 = vsel %vm1224, %v1212, -inf
          %v1233 = vld [vmem:[#allocation2] sm:$0xff]
          %v1234 = vld [vmem:[#allocation2 + $0x8] sm:$0xff]
          %v1235 = vld [vmem:[#allocation2 + $0x10] sm:$0xff]
          %v1236 = vld [vmem:[#allocation2 + $0x18] sm:$0xff]
          %v1237 = vld [vmem:[#allocation2 + $0x20] sm:$0xff]
          %v1238 = vld [vmem:[#allocation2 + $0x28] sm:$0xff]
          %v1239 = vld [vmem:[#allocation2 + $0x30] sm:$0xff]
          %v1240 = vld [vmem:[#allocation2 + $0x38] sm:$0xff]
          %vm1241 = vcmask 130048
          %v1242 = vsel %vm1241, %v1225, -inf
          %1243 = vmax.xlane.f32.xlu0 %v1242
          %v1244 = vpop.xlane.xlu0 %1243
          %v1245 = vsel %vm1241, %v1226, -inf
          %1246 = vmax.xlane.f32.xlu0 %v1245
          %v1247 = vpop.xlane.xlu0 %1246
          %v1248 = vsel %vm1241, %v1227, -inf
          %1249 = vmax.xlane.f32.xlu0 %v1248
          %v1250 = vpop.xlane.xlu0 %1249
          %v1251 = vsel %vm1241, %v1228, -inf
          %1252 = vmax.xlane.f32.xlu0 %v1251
          %v1253 = vpop.xlane.xlu0 %1252
          %v1254 = vsel %vm1241, %v1229, -inf
          %1255 = vmax.xlane.f32.xlu0 %v1254
          %v1256 = vpop.xlane.xlu0 %1255
          %v1257 = vsel %vm1241, %v1230, -inf
          %1258 = vmax.xlane.f32.xlu0 %v1257
          %v1259 = vpop.xlane.xlu0 %1258
          %v1260 = vsel %vm1241, %v1231, -inf
          %1261 = vmax.xlane.f32.xlu0 %v1260
          %v1262 = vpop.xlane.xlu0 %1261
          %v1263 = vsel %vm1241, %v1232, -inf
          %1264 = vmax.xlane.f32.xlu0 %v1263
          %v1265 = vpop.xlane.xlu0 %1264
          %v1266 = vmax.f32 %v1233, %v1244
          %v1267 = vmax.f32 %v1234, %v1247
          %v1268 = vmax.f32 %v1235, %v1250
          %v1269 = vmax.f32 %v1236, %v1253
          %v1270 = vmax.f32 %v1237, %v1256
          %v1271 = vmax.f32 %v1238, %v1259
          %v1272 = vmax.f32 %v1239, %v1262
          %v1273 = vmax.f32 %v1240, %v1265
          %v1274 = vsub.f32 %v1233, %v1266
          %v1275 = vsub.f32 %v1234, %v1267
          %v1276 = vsub.f32 %v1235, %v1268
          %v1277 = vsub.f32 %v1236, %v1269
          %v1278 = vsub.f32 %v1237, %v1270
          %v1279 = vsub.f32 %v1238, %v1271
          %v1280 = vsub.f32 %v1239, %v1272
          %v1281 = vsub.f32 %v1240, %v1273
          %v1282 = vmul.f32 %v1274, 1.442695
          %v1283 = vpow.pop %v1282
          %v1284 = vmul.f32 %v1275, 1.442695
          %v1285 = vpow.pop %v1284
          %v1286 = vmul.f32 %v1276, 1.442695
          %v1287 = vpow.pop %v1286
          %v1288 = vmul.f32 %v1277, 1.442695
          %v1289 = vpow.pop %v1288
          %v1290 = vmul.f32 %v1278, 1.442695
          %v1291 = vpow.pop %v1290
          %v1292 = vmul.f32 %v1279, 1.442695
          %v1293 = vpow.pop %v1292
          %v1294 = vmul.f32 %v1280, 1.442695
          %v1295 = vpow.pop %v1294
          %v1296 = vmul.f32 %v1281, 1.442695
          %v1297 = vpow.pop %v1296
          %1299 = vset.pattern.permute.xlu0 0
          %1300 = vperm.xlu0 %1299, %v1266
          %v1301 = vpop.permute.xlu0 %1300
          %1304 = vset.pattern.permute.xlu0 0
          %1305 = vperm.xlu0 %1304, %v1267
          %v1306 = vpop.permute.xlu0 %1305
          %1309 = vset.pattern.permute.xlu0 0
          %1310 = vperm.xlu0 %1309, %v1268
          %v1311 = vpop.permute.xlu0 %1310
          %1314 = vset.pattern.permute.xlu0 0
          %1315 = vperm.xlu0 %1314, %v1269
          %v1316 = vpop.permute.xlu0 %1315
          %1319 = vset.pattern.permute.xlu0 0
          %1320 = vperm.xlu0 %1319, %v1270
          %v1321 = vpop.permute.xlu0 %1320
          %1324 = vset.pattern.permute.xlu0 0
          %1325 = vperm.xlu0 %1324, %v1271
          %v1326 = vpop.permute.xlu0 %1325
          %1329 = vset.pattern.permute.xlu0 0
          %1330 = vperm.xlu0 %1329, %v1272
          %v1331 = vpop.permute.xlu0 %1330
          %1334 = vset.pattern.permute.xlu0 0
          %1335 = vperm.xlu0 %1334, %v1273
          %v1336 = vpop.permute.xlu0 %1335
          %v1338 = vsub.f32 %v1225, %v1301
          %v1339 = vsub.f32 %v1226, %v1306
          %v1340 = vsub.f32 %v1227, %v1311
          %v1341 = vsub.f32 %v1228, %v1316
          %v1342 = vsub.f32 %v1229, %v1321
          %v1343 = vsub.f32 %v1230, %v1326
          %v1344 = vsub.f32 %v1231, %v1331
          %v1345 = vsub.f32 %v1232, %v1336
          %v1346 = vmul.f32 %v1338, 1.442695
          %v1347 = vpow.pop %v1346
          %v1348 = vmul.f32 %v1339, 1.442695
          %v1349 = vpow.pop %v1348
          %v1350 = vmul.f32 %v1340, 1.442695
          %v1351 = vpow.pop %v1350
          %v1352 = vmul.f32 %v1341, 1.442695
          %v1353 = vpow.pop %v1352
          %v1354 = vmul.f32 %v1342, 1.442695
          %v1355 = vpow.pop %v1354
          %v1356 = vmul.f32 %v1343, 1.442695
          %v1357 = vpow.pop %v1356
          %v1358 = vmul.f32 %v1344, 1.442695
          %v1359 = vpow.pop %v1358
          %v1360 = vmul.f32 %v1345, 1.442695
          %v1361 = vpow.pop %v1360
          %v1362 = vld [vmem:[#allocation3] sm:$0xff]
          %v1363 = vld [vmem:[#allocation3 + $0x8] sm:$0xff]
          %v1364 = vld [vmem:[#allocation3 + $0x10] sm:$0xff]
          %v1365 = vld [vmem:[#allocation3 + $0x18] sm:$0xff]
          %v1366 = vld [vmem:[#allocation3 + $0x20] sm:$0xff]
          %v1367 = vld [vmem:[#allocation3 + $0x28] sm:$0xff]
          %v1368 = vld [vmem:[#allocation3 + $0x30] sm:$0xff]
          %v1369 = vld [vmem:[#allocation3 + $0x38] sm:$0xff]
          %v1370 = vmul.f32 %v1283, %v1362
          %v1371 = vmul.f32 %v1285, %v1363
          %v1372 = vmul.f32 %v1287, %v1364
          %v1373 = vmul.f32 %v1289, %v1365
          %v1374 = vmul.f32 %v1291, %v1366
          %v1375 = vmul.f32 %v1293, %v1367
          %v1376 = vmul.f32 %v1295, %v1368
          %v1377 = vmul.f32 %v1297, %v1369
          %v1378 = vsel %vm1241, %v1347, 0.0
          %1379 = vadd.xlane.f32.xlu0 %v1378
          %v1380 = vpop.xlane.xlu0 %1379
          %v1381 = vsel %vm1241, %v1349, 0.0
          %1382 = vadd.xlane.f32.xlu0 %v1381
          %v1383 = vpop.xlane.xlu0 %1382
          %v1384 = vsel %vm1241, %v1351, 0.0
          %1385 = vadd.xlane.f32.xlu0 %v1384
          %v1386 = vpop.xlane.xlu0 %1385
          %v1387 = vsel %vm1241, %v1353, 0.0
          %1388 = vadd.xlane.f32.xlu0 %v1387
          %v1389 = vpop.xlane.xlu0 %1388
          %v1390 = vsel %vm1241, %v1355, 0.0
          %1391 = vadd.xlane.f32.xlu0 %v1390
          %v1392 = vpop.xlane.xlu0 %1391
          %v1393 = vsel %vm1241, %v1357, 0.0
          %1394 = vadd.xlane.f32.xlu0 %v1393
          %v1395 = vpop.xlane.xlu0 %1394
          %v1396 = vsel %vm1241, %v1359, 0.0
          %1397 = vadd.xlane.f32.xlu0 %v1396
          %v1398 = vpop.xlane.xlu0 %1397
          %v1399 = vsel %vm1241, %v1361, 0.0
          %1400 = vadd.xlane.f32.xlu0 %v1399
          %v1401 = vpop.xlane.xlu0 %1400
          %v1402 = vadd.f32 %v1370, %v1380
          %v1403 = vadd.f32 %v1371, %v1383
          %v1404 = vadd.f32 %v1372, %v1386
          %v1405 = vadd.f32 %v1373, %v1389
          %v1406 = vadd.f32 %v1374, %v1392
          %v1407 = vadd.f32 %v1375, %v1395
          %v1408 = vadd.f32 %v1376, %v1398
          %v1409 = vadd.f32 %v1377, %v1401
          %vm1410 = vcmask 7168
          %1411 = vst.msk [vmem:[#allocation3] sm:$0xff] %vm1410, %v1402
          %1412 = vst.msk [vmem:[#allocation3 + $0x8] sm:$0xff] %vm1410, %v1403
          %1413 = vst.msk [vmem:[#allocation3 + $0x10] sm:$0xff] %vm1410, %v1404
          %1414 = vst.msk [vmem:[#allocation3 + $0x18] sm:$0xff] %vm1410, %v1405
          %1415 = vst.msk [vmem:[#allocation3 + $0x20] sm:$0xff] %vm1410, %v1406
          %1416 = vst.msk [vmem:[#allocation3 + $0x28] sm:$0xff] %vm1410, %v1407
          %1417 = vst.msk [vmem:[#allocation3 + $0x30] sm:$0xff] %vm1410, %v1408
          %1418 = vst.msk [vmem:[#allocation3 + $0x38] sm:$0xff] %vm1410, %v1409
          %v1419 = vld [vmem:[#allocation4] sm:$0xff]
          %v1420 = vld [vmem:[#allocation4 + $0x8] sm:$0xff]
          %v1421 = vld [vmem:[#allocation4 + $0x10] sm:$0xff]
          %v1422 = vld [vmem:[#allocation4 + $0x18] sm:$0xff]
          %v1423 = vld [vmem:[#allocation4 + $0x20] sm:$0xff]
          %v1424 = vld [vmem:[#allocation4 + $0x28] sm:$0xff]
          %v1425 = vld [vmem:[#allocation4 + $0x30] sm:$0xff]
          %v1426 = vld [vmem:[#allocation4 + $0x38] sm:$0xff]
          %1428 = vset.pattern.permute.xlu0 0
          %1429 = vperm.xlu0 %1428, %v1283
          %v1430 = vpop.permute.xlu0 %1429
          %1433 = vset.pattern.permute.xlu0 0
          %1434 = vperm.xlu0 %1433, %v1285
          %v1435 = vpop.permute.xlu0 %1434
          %1438 = vset.pattern.permute.xlu0 0
          %1439 = vperm.xlu0 %1438, %v1287
          %v1440 = vpop.permute.xlu0 %1439
          %1443 = vset.pattern.permute.xlu0 0
          %1444 = vperm.xlu0 %1443, %v1289
          %v1445 = vpop.permute.xlu0 %1444
          %1448 = vset.pattern.permute.xlu0 0
          %1449 = vperm.xlu0 %1448, %v1291
          %v1450 = vpop.permute.xlu0 %1449
          %1453 = vset.pattern.permute.xlu0 0
          %1454 = vperm.xlu0 %1453, %v1293
          %v1455 = vpop.permute.xlu0 %1454
          %1458 = vset.pattern.permute.xlu0 0
          %1459 = vperm.xlu0 %1458, %v1295
          %v1460 = vpop.permute.xlu0 %1459
          %1463 = vset.pattern.permute.xlu0 0
          %1464 = vperm.xlu0 %1463, %v1297
          %v1465 = vpop.permute.xlu0 %1464
          %v1467 = vmul.f32 %v1430, %v1419
          %v1468 = vmul.f32 %v1435, %v1420
          %v1469 = vmul.f32 %v1440, %v1421
          %v1470 = vmul.f32 %v1445, %v1422
          %v1471 = vmul.f32 %v1450, %v1423
          %v1472 = vmul.f32 %v1455, %v1424
          %v1473 = vmul.f32 %v1460, %v1425
          %v1474 = vmul.f32 %v1465, %v1426
          %v1475 = vpack.c.bf16 %v1347, %v1347
          %v1476 = vpack.c.bf16 %v1349, %v1349
          %v1477 = vpack.c.bf16 %v1351, %v1351
          %v1478 = vpack.c.bf16 %v1353, %v1353
          %v1479 = vpack.c.bf16 %v1355, %v1355
          %v1480 = vpack.c.bf16 %v1357, %v1357
          %v1481 = vpack.c.bf16 %v1359, %v1359
          %v1482 = vpack.c.bf16 %v1361, %v1361
          %v1485 = vunpack.c.l.b16 %v1475
          %v1486 = vunpack.c.l.b16 %v1476
          %v1487 = vpack.c.b16 %v1486, %v1485
          %v1490 = vunpack.c.l.b16 %v1085
          %v1491 = vunpack.c.l.b16 %v1086
          %v1492 = vpack.c.b16 %v1491, %v1490
          %v1495 = vsel %vm1241, %v1487, 0
          %1497 = vmatpush.bf16.msra.mxu0 0
          %1498 = vmatpush.bf16.msra.mxu0 0
          %1499 = vmatpush.bf16.msra.mxu0 0
          %1500 = vmatpush.bf16.msra.mxu0 0
          %1501 = vmatpush.bf16.msra.mxu0 0
          %1502 = vmatpush.bf16.msra.mxu0 0
          %1503 = vmatpush.bf16.msra.mxu0 0
          %1504 = vmatpush.bf16.msra.mxu0 %v1492
          %1505 = vmatmul.bf16.gmra.mxu0 %v1495
          %v1506 = vpop.f32.mrf.mxu0
          %v1507 = vadd.f32 0.0, %v1506
          %v1508 = vpop.f32.mrf.mxu0
          %v1509 = vadd.f32 0.0, %v1508
          %1510 = vdwg.mxu0
          %v1513 = vunpack.c.l.b16 %v1477
          %v1514 = vunpack.c.l.b16 %v1478
          %v1515 = vpack.c.b16 %v1514, %v1513
          %v1518 = vunpack.c.l.b16 %v1087
          %v1519 = vunpack.c.l.b16 %v1088
          %v1520 = vpack.c.b16 %v1519, %v1518
          %v1523 = vsel %vm1241, %v1515, 0
          %1525 = vmatpush.bf16.msra.mxu0 0
          %1526 = vmatpush.bf16.msra.mxu0 0
          %1527 = vmatpush.bf16.msra.mxu0 0
          %1528 = vmatpush.bf16.msra.mxu0 0
          %1529 = vmatpush.bf16.msra.mxu0 0
          %1530 = vmatpush.bf16.msra.mxu0 0
          %1531 = vmatpush.bf16.msra.mxu0 0
          %1532 = vmatpush.bf16.msra.mxu0 %v1520
          %1533 = vmatmul.bf16.gmra.mxu0 %v1523
          %v1534 = vpop.f32.mrf.mxu0
          %v1535 = vadd.f32 0.0, %v1534
          %v1536 = vpop.f32.mrf.mxu0
          %v1537 = vadd.f32 0.0, %v1536
          %1538 = vdwg.mxu0
          %v1541 = vunpack.c.l.b16 %v1479
          %v1542 = vunpack.c.l.b16 %v1480
          %v1543 = vpack.c.b16 %v1542, %v1541
          %v1546 = vunpack.c.l.b16 %v1089
          %v1547 = vunpack.c.l.b16 %v1090
          %v1548 = vpack.c.b16 %v1547, %v1546
          %v1551 = vsel %vm1241, %v1543, 0
          %1553 = vmatpush.bf16.msra.mxu0 0
          %1554 = vmatpush.bf16.msra.mxu0 0
          %1555 = vmatpush.bf16.msra.mxu0 0
          %1556 = vmatpush.bf16.msra.mxu0 0
          %1557 = vmatpush.bf16.msra.mxu0 0
          %1558 = vmatpush.bf16.msra.mxu0 0
          %1559 = vmatpush.bf16.msra.mxu0 0
          %1560 = vmatpush.bf16.msra.mxu0 %v1548
          %1561 = vmatmul.bf16.gmra.mxu0 %v1551
          %v1562 = vpop.f32.mrf.mxu0
          %v1563 = vadd.f32 0.0, %v1562
          %v1564 = vpop.f32.mrf.mxu0
          %v1565 = vadd.f32 0.0, %v1564
          %1566 = vdwg.mxu0
          %v1569 = vunpack.c.l.b16 %v1481
          %v1570 = vunpack.c.l.b16 %v1482
          %v1571 = vpack.c.b16 %v1570, %v1569
          %v1574 = vunpack.c.l.b16 %v1091
          %v1575 = vunpack.c.l.b16 %v1092
          %v1576 = vpack.c.b16 %v1575, %v1574
          %v1579 = vsel %vm1241, %v1571, 0
          %1581 = vmatpush.bf16.msra.mxu0 0
          %1582 = vmatpush.bf16.msra.mxu0 0
          %1583 = vmatpush.bf16.msra.mxu0 0
          %1584 = vmatpush.bf16.msra.mxu0 0
          %1585 = vmatpush.bf16.msra.mxu0 0
          %1586 = vmatpush.bf16.msra.mxu0 0
          %1587 = vmatpush.bf16.msra.mxu0 0
          %1588 = vmatpush.bf16.msra.mxu0 %v1576
          %1589 = vmatmul.bf16.gmra.mxu0 %v1579
          %v1590 = vpop.f32.mrf.mxu0
          %v1591 = vadd.f32 0.0, %v1590
          %v1592 = vpop.f32.mrf.mxu0
          %v1593 = vadd.f32 0.0, %v1592
          %1594 = vdwg.mxu0
          %v1595 = vadd.f32 %v1467, %v1507
          %v1596 = vadd.f32 %v1468, %v1509
          %v1597 = vadd.f32 %v1469, %v1535
          %v1598 = vadd.f32 %v1470, %v1537
          %v1599 = vadd.f32 %v1471, %v1563
          %v1600 = vadd.f32 %v1472, %v1565
          %v1601 = vadd.f32 %v1473, %v1591
          %v1602 = vadd.f32 %v1474, %v1593
          %1603 = vst.msk [vmem:[#allocation4] sm:$0xff] %vm1103, %v1595
          %1604 = vst.msk [vmem:[#allocation4 + $0x8] sm:$0xff] %vm1103, %v1596
          %1605 = vst.msk [vmem:[#allocation4 + $0x10] sm:$0xff] %vm1103, %v1597
          %1606 = vst.msk [vmem:[#allocation4 + $0x18] sm:$0xff] %vm1103, %v1598
          %1607 = vst.msk [vmem:[#allocation4 + $0x20] sm:$0xff] %vm1103, %v1599
          %1608 = vst.msk [vmem:[#allocation4 + $0x28] sm:$0xff] %vm1103, %v1600
          %1609 = vst.msk [vmem:[#allocation4 + $0x30] sm:$0xff] %vm1103, %v1601
          %1610 = vst.msk [vmem:[#allocation4 + $0x38] sm:$0xff] %vm1103, %v1602
          %1611 = vst.msk [vmem:[#allocation2] sm:$0xff] %vm1410, %v1266
          %1612 = vst.msk [vmem:[#allocation2 + $0x8] sm:$0xff] %vm1410, %v1267
          %1613 = vst.msk [vmem:[#allocation2 + $0x10] sm:$0xff] %vm1410, %v1268
          %1614 = vst.msk [vmem:[#allocation2 + $0x18] sm:$0xff] %vm1410, %v1269
          %1615 = vst.msk [vmem:[#allocation2 + $0x20] sm:$0xff] %vm1410, %v1270
          %1616 = vst.msk [vmem:[#allocation2 + $0x28] sm:$0xff] %vm1410, %v1271
          %1617 = vst.msk [vmem:[#allocation2 + $0x30] sm:$0xff] %vm1410, %v1272
          %1618 = vst.msk [vmem:[#allocation2 + $0x38] sm:$0xff] %vm1410, %v1273
          %v1619 = vld [vmem:[#allocation3] sm:$0xff]
          %v1620 = vld [vmem:[#allocation3 + $0x8] sm:$0xff]
          %v1621 = vld [vmem:[#allocation3 + $0x10] sm:$0xff]
          %v1622 = vld [vmem:[#allocation3 + $0x18] sm:$0xff]
          %v1623 = vld [vmem:[#allocation3 + $0x20] sm:$0xff]
          %v1624 = vld [vmem:[#allocation3 + $0x28] sm:$0xff]
          %v1625 = vld [vmem:[#allocation3 + $0x30] sm:$0xff]
          %v1626 = vld [vmem:[#allocation3 + $0x38] sm:$0xff]
          %v1627 = vrcp.pop %v1619
          %v1628 = vrcp.pop %v1620
          %v1629 = vrcp.pop %v1621
          %v1630 = vrcp.pop %v1622
          %v1631 = vrcp.pop %v1623
          %v1632 = vrcp.pop %v1624
          %v1633 = vrcp.pop %v1625
          %v1634 = vrcp.pop %v1626
          %v1635 = vld [vmem:[#allocation4] sm:$0xff]
          %v1636 = vld [vmem:[#allocation4 + $0x8] sm:$0xff]
          %v1637 = vld [vmem:[#allocation4 + $0x10] sm:$0xff]
          %v1638 = vld [vmem:[#allocation4 + $0x18] sm:$0xff]
          %v1639 = vld [vmem:[#allocation4 + $0x20] sm:$0xff]
          %v1640 = vld [vmem:[#allocation4 + $0x28] sm:$0xff]
          %v1641 = vld [vmem:[#allocation4 + $0x30] sm:$0xff]
          %v1642 = vld [vmem:[#allocation4 + $0x38] sm:$0xff]
          %1644 = vset.pattern.permute.xlu0 0
          %1645 = vperm.xlu0 %1644, %v1627
          %v1646 = vpop.permute.xlu0 %1645
          %1649 = vset.pattern.permute.xlu0 0
          %1650 = vperm.xlu0 %1649, %v1628
          %v1651 = vpop.permute.xlu0 %1650
          %1654 = vset.pattern.permute.xlu0 0
          %1655 = vperm.xlu0 %1654, %v1629
          %v1656 = vpop.permute.xlu0 %1655
          %1659 = vset.pattern.permute.xlu0 0
          %1660 = vperm.xlu0 %1659, %v1630
          %v1661 = vpop.permute.xlu0 %1660
          %1664 = vset.pattern.permute.xlu0 0
          %1665 = vperm.xlu0 %1664, %v1631
          %v1666 = vpop.permute.xlu0 %1665
          %1669 = vset.pattern.permute.xlu0 0
          %1670 = vperm.xlu0 %1669, %v1632
          %v1671 = vpop.permute.xlu0 %1670
          %1674 = vset.pattern.permute.xlu0 0
          %1675 = vperm.xlu0 %1674, %v1633
          %v1676 = vpop.permute.xlu0 %1675
          %1679 = vset.pattern.permute.xlu0 0
          %1680 = vperm.xlu0 %1679, %v1634
          %v1681 = vpop.permute.xlu0 %1680
          %v1683 = vmul.f32 %v1635, %v1646
          %v1684 = vmul.f32 %v1636, %v1651
          %v1685 = vmul.f32 %v1637, %v1656
          %v1686 = vmul.f32 %v1638, %v1661
          %v1687 = vmul.f32 %v1639, %v1666
          %v1688 = vmul.f32 %v1640, %v1671
          %v1689 = vmul.f32 %v1641, %v1676
          %v1690 = vmul.f32 %v1642, %v1681
          %v1691 = vrot.slane %v1687, 4
          %vm1692 = vcmask 1047556
          %v1693 = vsel %vm1692, %v1691, %v1683
          %v1694 = vrot.slane %v1683, 4
          %v1695 = vsel %vm1692, %v1687, %v1694
          %v1697 = vunpack.c.l.s4 1983009808
          %v1698 = vunpack.c.0.s8 %v1697
          %v1699 = vperm.slane %v1693, %v1698
          %v1701 = vunpack.c.l.s4 1983009808
          %v1702 = vunpack.c.0.s8 %v1701
          %v1703 = vperm.slane %v1695, %v1702
          %v1704 = vrot.slane %v1689, 4
          %v1705 = vsel %vm1692, %v1704, %v1685
          %v1706 = vrot.slane %v1685, 4
          %v1707 = vsel %vm1692, %v1689, %v1706
          %v1709 = vunpack.c.l.s4 1983009808
          %v1710 = vunpack.c.0.s8 %v1709
          %v1711 = vperm.slane %v1705, %v1710
          %v1713 = vunpack.c.l.s4 1983009808
          %v1714 = vunpack.c.0.s8 %v1713
          %v1715 = vperm.slane %v1707, %v1714
          %v1716 = vrot.slane %v1711, 4
          %v1717 = vsel %vm1692, %v1716, %v1699
          %v1718 = vrot.slane %v1699, 4
          %v1719 = vsel %vm1692, %v1711, %v1718
          %v1721 = vunpack.c.l.s4 1934713408
          %v1722 = vunpack.c.0.s8 %v1721
          %v1723 = vperm.slane %v1717, %v1722
          %v1725 = vunpack.c.l.s4 1934713408
          %v1726 = vunpack.c.0.s8 %v1725
          %v1727 = vperm.slane %v1719, %v1726
          %v1728 = vrot.slane %v1715, 4
          %v1729 = vsel %vm1692, %v1728, %v1703
          %v1730 = vrot.slane %v1703, 4
          %v1731 = vsel %vm1692, %v1715, %v1730
          %v1733 = vunpack.c.l.s4 1934713408
          %v1734 = vunpack.c.0.s8 %v1733
          %v1735 = vperm.slane %v1729, %v1734
          %v1737 = vunpack.c.l.s4 1934713408
          %v1738 = vunpack.c.0.s8 %v1737
          %v1739 = vperm.slane %v1731, %v1738
          %v1740 = vrot.slane %v1723, 4
          %v1741 = vsel %vm1692, 0.0, %v1740
          %v1742 = vrot.slane %v1727, 4
          %v1743 = vsel %vm1692, 0.0, %v1742
          %v1744 = vrot.slane %v1735, 4
          %v1745 = vsel %vm1692, 0.0, %v1744
          %v1746 = vrot.slane %v1739, 4
          %v1747 = vsel %vm1692, 0.0, %v1746
          %v1748 = vrot.slane %v1688, 4
          %v1749 = vsel %vm1692, %v1748, %v1684
          %v1750 = vrot.slane %v1684, 4
          %v1751 = vsel %vm1692, %v1688, %v1750
          %v1753 = vunpack.c.l.s4 1983009808
          %v1754 = vunpack.c.0.s8 %v1753
          %v1755 = vperm.slane %v1749, %v1754
          %v1757 = vunpack.c.l.s4 1983009808
          %v1758 = vunpack.c.0.s8 %v1757
          %v1759 = vperm.slane %v1751, %v1758
          %v1760 = vrot.slane %v1690, 4
          %v1761 = vsel %vm1692, %v1760, %v1686
          %v1762 = vrot.slane %v1686, 4
          %v1763 = vsel %vm1692, %v1690, %v1762
          %v1765 = vunpack.c.l.s4 1983009808
          %v1766 = vunpack.c.0.s8 %v1765
          %v1767 = vperm.slane %v1761, %v1766
          %v1769 = vunpack.c.l.s4 1983009808
          %v1770 = vunpack.c.0.s8 %v1769
          %v1771 = vperm.slane %v1763, %v1770
          %v1772 = vrot.slane %v1767, 4
          %v1773 = vsel %vm1692, %v1772, %v1755
          %v1774 = vrot.slane %v1755, 4
          %v1775 = vsel %vm1692, %v1767, %v1774
          %v1777 = vunpack.c.l.s4 1934713408
          %v1778 = vunpack.c.0.s8 %v1777
          %v1779 = vperm.slane %v1773, %v1778
          %v1781 = vunpack.c.l.s4 1934713408
          %v1782 = vunpack.c.0.s8 %v1781
          %v1783 = vperm.slane %v1775, %v1782
          %v1784 = vrot.slane %v1771, 4
          %v1785 = vsel %vm1692, %v1784, %v1759
          %v1786 = vrot.slane %v1759, 4
          %v1787 = vsel %vm1692, %v1771, %v1786
          %v1789 = vunpack.c.l.s4 1934713408
          %v1790 = vunpack.c.0.s8 %v1789
          %v1791 = vperm.slane %v1785, %v1790
          %v1793 = vunpack.c.l.s4 1934713408
          %v1794 = vunpack.c.0.s8 %v1793
          %v1795 = vperm.slane %v1787, %v1794
          %v1796 = vrot.slane %v1779, 4
          %v1797 = vsel %vm1692, 0.0, %v1796
          %v1798 = vrot.slane %v1783, 4
          %v1799 = vsel %vm1692, 0.0, %v1798
          %v1800 = vrot.slane %v1791, 4
          %v1801 = vsel %vm1692, 0.0, %v1800
          %v1802 = vrot.slane %v1795, 4
          %v1803 = vsel %vm1692, 0.0, %v1802
          %v1804 = vsel %vm1692, %v1742, %v1723
          %v1806 = vunpack.c.l.s4 1983009808
          %v1807 = vunpack.c.0.s8 %v1806
          %v1808 = vperm.slane %v1804, %v1807
          %v1809 = vrot.slane %v1743, 4
          %v1810 = vsel %vm1692, %v1809, %v1741
          %v1812 = vunpack.c.l.s4 1983009808
          %v1813 = vunpack.c.0.s8 %v1812
          %v1814 = vperm.slane %v1810, %v1813
          %v1815 = vsel %vm1692, %v1746, %v1735
          %v1817 = vunpack.c.l.s4 1983009808
          %v1818 = vunpack.c.0.s8 %v1817
          %v1819 = vperm.slane %v1815, %v1818
          %v1820 = vrot.slane %v1747, 4
          %v1821 = vsel %vm1692, %v1820, %v1745
          %v1823 = vunpack.c.l.s4 1983009808
          %v1824 = vunpack.c.0.s8 %v1823
          %v1825 = vperm.slane %v1821, %v1824
          %v1826 = vrot.slane %v1814, 4
          %v1827 = vsel %vm1692, %v1826, %v1808
          %v1828 = vrot.slane %v1808, 4
          %v1829 = vsel %vm1692, %v1814, %v1828
          %v1831 = vunpack.c.l.s4 1934713408
          %v1832 = vunpack.c.0.s8 %v1831
          %v1833 = vperm.slane %v1827, %v1832
          %v1835 = vunpack.c.l.s4 1934713408
          %v1836 = vunpack.c.0.s8 %v1835
          %v1837 = vperm.slane %v1829, %v1836
          %v1838 = vrot.slane %v1825, 4
          %v1839 = vsel %vm1692, %v1838, %v1819
          %v1840 = vrot.slane %v1819, 4
          %v1841 = vsel %vm1692, %v1825, %v1840
          %v1843 = vunpack.c.l.s4 1934713408
          %v1844 = vunpack.c.0.s8 %v1843
          %v1845 = vperm.slane %v1839, %v1844
          %v1847 = vunpack.c.l.s4 1934713408
          %v1848 = vunpack.c.0.s8 %v1847
          %v1849 = vperm.slane %v1841, %v1848
          %v1850 = vrot.slane %v1845, 4
          %v1851 = vsel %vm1692, %v1850, %v1833
          %v1852 = vrot.slane %v1833, 4
          %v1853 = vsel %vm1692, %v1845, %v1852
          %v1854 = vrot.slane %v1849, 4
          %v1855 = vsel %vm1692, %v1854, %v1837
          %v1856 = vrot.slane %v1837, 4
          %v1857 = vsel %vm1692, %v1849, %v1856
          %v1858 = vsel %vm1692, %v1798, %v1779
          %v1860 = vunpack.c.l.s4 1983009808
          %v1861 = vunpack.c.0.s8 %v1860
          %v1862 = vperm.slane %v1858, %v1861
          %v1863 = vrot.slane %v1799, 4
          %v1864 = vsel %vm1692, %v1863, %v1797
          %v1866 = vunpack.c.l.s4 1983009808
          %v1867 = vunpack.c.0.s8 %v1866
          %v1868 = vperm.slane %v1864, %v1867
          %v1869 = vsel %vm1692, %v1802, %v1791
          %v1871 = vunpack.c.l.s4 1983009808
          %v1872 = vunpack.c.0.s8 %v1871
          %v1873 = vperm.slane %v1869, %v1872
          %v1874 = vrot.slane %v1803, 4
          %v1875 = vsel %vm1692, %v1874, %v1801
          %v1877 = vunpack.c.l.s4 1983009808
          %v1878 = vunpack.c.0.s8 %v1877
          %v1879 = vperm.slane %v1875, %v1878
          %v1880 = vrot.slane %v1868, 4
          %v1881 = vsel %vm1692, %v1880, %v1862
          %v1882 = vrot.slane %v1862, 4
          %v1883 = vsel %vm1692, %v1868, %v1882
          %v1885 = vunpack.c.l.s4 1934713408
          %v1886 = vunpack.c.0.s8 %v1885
          %v1887 = vperm.slane %v1881, %v1886
          %v1889 = vunpack.c.l.s4 1934713408
          %v1890 = vunpack.c.0.s8 %v1889
          %v1891 = vperm.slane %v1883, %v1890
          %v1892 = vrot.slane %v1879, 4
          %v1893 = vsel %vm1692, %v1892, %v1873
          %v1894 = vrot.slane %v1873, 4
          %v1895 = vsel %vm1692, %v1879, %v1894
          %v1897 = vunpack.c.l.s4 1934713408
          %v1898 = vunpack.c.0.s8 %v1897
          %v1899 = vperm.slane %v1893, %v1898
          %v1901 = vunpack.c.l.s4 1934713408
          %v1902 = vunpack.c.0.s8 %v1901
          %v1903 = vperm.slane %v1895, %v1902
          %v1904 = vrot.slane %v1899, 4
          %v1905 = vsel %vm1692, %v1904, %v1887
          %v1906 = vrot.slane %v1887, 4
          %v1907 = vsel %vm1692, %v1899, %v1906
          %v1908 = vrot.slane %v1903, 4
          %v1909 = vsel %vm1692, %v1908, %v1891
          %v1910 = vrot.slane %v1891, 4
          %v1911 = vsel %vm1692, %v1903, %v1910
          %1914 = vrot.lane.b32.xlu0 %v1853, 8
          %v1915 = vpop.permute.xlu0 %1914
          %1916 = vrot.lane.b32.xlu0 %v1907, 8
          %v1917 = vpop.permute.xlu0 %1916
          %1922 = vrot.lane.b32.xlu0 %v1855, 16
          %v1923 = vpop.permute.xlu0 %1922
          %1924 = vrot.lane.b32.xlu0 %v1909, 16
          %v1925 = vpop.permute.xlu0 %1924
          %1930 = vrot.lane.b32.xlu0 %v1857, 24
          %v1931 = vpop.permute.xlu0 %1930
          %1932 = vrot.lane.b32.xlu0 %v1911, 24
          %v1933 = vpop.permute.xlu0 %1932
          %v1936 = vsel %vm1103, %v1851, %v1915
          %v1937 = vsel %vm1103, %v1905, %v1917
          %v1938 = vsel %vm1241, %v1936, %v1923
          %v1939 = vsel %vm1241, %v1937, %v1925
          %vm1940 = vcmask 195584
          %v1941 = vsel %vm1940, %v1938, %v1931
          %v1942 = vsel %vm1940, %v1939, %v1933
          %v1943 = vpack.c.bf16 %v1941, %v1941
          %v1944 = vpack.c.bf16 %v1942, %v1942
          %vm1945 = vcmask 257024
          %1946 = vst.msk [vmem:[%s494] sm:$0xf] %vm1945, %v1943
          %1947 = vst.msk [vmem:[%s494 + $0x4] sm:$0xf] %vm1945, %v1944
        $region167: #{causal_self_attention.4} parent=142 // pred_fallthru
          _
        %s1948 = sld [smem:[#allocation6 + %s34]]
        %s1949 = smul.u32 2, %s1948
        %p1950 = scmp.lt.s32.totalorder %s33, 1
        %s1951 = scalar_select %p1950, %s33, 1
        %p1952 = scmp.lt.s32.totalorder %s1949, 3
        %s1953 = scalar_select %p1952, %s1949, 3
        %s1954 = smul.addr %s1951, 4
        %s1955 = sadd.s32 %s1953, %s1954
        %s1956 = smul.addr %s1955, 4
        %s1957 = scalar_lea.vmem %s5, %s1956
        // Predicated region
        $region168: #{causal_self_attention.4} parent=142 // pred_check
          %p1958 = pneg %p153
        $region169: #{causal_self_attention.4} parent=142 // pred_check_branch
          %1960 = sbr.rel (%p1958) target = $region171
        $region170: #{causal_self_attention.4} parent=142 // pred_region
          %s1961 = sld [smem:[#allocation6 + %s34]]
          %s1962 = smul.u32 2, %s1961
        $region171: #{causal_self_attention.4} parent=142 // pred_fallthru
          _
      $region143: #{causal_self_attention.4} parent=5 // pred_fallthru
        _
      %p1963 = scmp.le.s32.totalorder 2, %s24
      // Predicated region
      $region172: #{causal_self_attention.4} parent=5 // pred_check
        %p1964 = pneg %p1963
      $region173: #{causal_self_attention.4} parent=5 // pred_check_branch
        %1966 = sbr.rel (%p1964) target = $region175
      $region174: #{causal_self_attention.4} parent=5 // pred_region
        %s1967 = ssub.s32 %s24, 2
        // Predicated region
        $region176: #{causal_self_attention.4} parent=174 // pred_check
          %p1968 = pneg %p159
        $region177: #{causal_self_attention.4} parent=174 // pred_check_branch
          %1970 = sbr.rel (%p1968) target = $region179
        $region178: #{causal_self_attention.4} parent=174 // pred_region
          %s1971 = sld [smem:[#allocation6 + %s36]]
          %s1972 = smul.u32 2, %s1971
          %p1973 = scmp.lt.s32.totalorder %s35, 1
          %s1974 = scalar_select %p1973, %s35, 1
          %p1975 = scmp.lt.s32.totalorder %s1972, 3
          %s1976 = scalar_select %p1975, %s1972, 3
          %s1977 = smul.addr %s1974, 4
          %s1978 = sadd.s32 %s1976, %s1977
          %s1979 = smul.addr %s1978, 4
          %s1980 = scalar_lea.vmem %s5, %s1979
        $region179: #{causal_self_attention.4} parent=174 // pred_fallthru
          _
      $region175: #{causal_self_attention.4} parent=5 // pred_fallthru
        _
    $region6: #{causal_self_attention.4} parent=1 // loop_footer
      %s28 = sadd.s32 1, %s24
    $region7: #{causal_self_attention.4} parent=1 // loop_footer_branch
      %23 = sbr.rel target = $region3
    $region8: #{causal_self_attention.4} parent=1 // loop_exit
      _

</llo_original>
